<compile_context>
chip_gen: v5e
topology: v5e:2x2
jax: 0.10.0
libtpu: 0.0.40
codegen_flags: <defaults>
</compile_context>

<pallas_src>
import functools
import math

import jax
import jax.numpy as jnp
from jax.experimental import pallas as pl
from jax.experimental.pallas import tpu as pltpu


def _round_up(x: int, m: int) -> int:
    return ((x + m - 1) // m) * m


# ----------------------------------------------------------------------------
# Fused Pallas kernel:
#   emb  = sum_q one_hot(codes[:, q]) @ codebook_q          (exact lookup on MXU)
#   out  = emb.bf16 @ w_comp + b_comp                       (f32 MXU accumulation)
# ----------------------------------------------------------------------------
def _fused_decoder_kernel(codes_ref, cb_ref, w_ref, b_ref, o_ref):
    # codes_ref: (tm, Q) int32   -- streamed per grid step
    # cb_ref   : (Q, C, D) bf16  -- constant block index -> fetched once
    # w_ref    : (D, N)    bf16  -- constant block index -> fetched once
    # b_ref    : (1, N)    f32   -- constant block index -> fetched once
    # o_ref    : (tm, N)   f32
    codes = codes_ref[...]
    tm, num_q = codes.shape
    cbs = cb_ref.shape[1]

    emb = None
    for q in range(num_q):  # static, unrolled (Q is small)
        onehot = (
            codes[:, q:q + 1]
            == jax.lax.broadcasted_iota(jnp.int32, (tm, cbs), 1)
        ).astype(jnp.bfloat16)
        part = jnp.dot(onehot, cb_ref[q], preferred_element_type=jnp.float32)
        emb = part if emb is None else emb + part

    out = jnp.dot(
        emb.astype(jnp.bfloat16), w_ref[...], preferred_element_type=jnp.float32
    ) + b_ref[...]
    o_ref[...] = out.astype(o_ref.dtype)


def fused_decoder(codes_2d, codebooks_bf16, w_comp, b_comp, *, tm):
    """codes_2d: (M_pad, Q) int32 -> (M_pad, N) f32 frames of waveform samples."""
    M_pad, Q = codes_2d.shape
    Qc, C, D = codebooks_bf16.shape
    D2, N = w_comp.shape
    assert Q == Qc and D == D2 and b_comp.shape == (N,)
    assert M_pad % tm == 0
    grid = (M_pad // tm,)

    flops = 2 * M_pad * Q * C * D + 2 * M_pad * D * N
    bytes_accessed = (
        codes_2d.size * 4            # codes (read once)
        + codebooks_bf16.size * 2    # codebooks (read once)
        + w_comp.size * 2            # composed weight (read once)
        + N * 4                      # bias
        + M_pad * N * 4              # output
    )

    return pl.pallas_call(
        _fused_decoder_kernel,
        out_shape=jax.ShapeDtypeStruct((M_pad, N), jnp.float32),
        grid_spec=pltpu.PrefetchScalarGridSpec(
            num_scalar_prefetch=0,
            grid=grid,
            in_specs=[
                pl.BlockSpec((tm, Q), lambda i: (i, 0)),
                pl.BlockSpec((Q, C, D), lambda i: (0, 0, 0)),
                pl.BlockSpec((D, N), lambda i: (0, 0)),
                pl.BlockSpec((1, N), lambda i: (0, 0)),
            ],
            out_specs=pl.BlockSpec((tm, N), lambda i: (i, 0)),
        ),
        compiler_params=pltpu.CompilerParams(
            dimension_semantics=("parallel",),
            vmem_limit_bytes=32 * 1024 * 1024,
        ),
        cost_estimate=pl.CostEstimate(
            flops=flops, transcendentals=0, bytes_accessed=bytes_accessed
        ),
    )(codes_2d, codebooks_bf16, w_comp, b_comp.reshape(1, N))


# ----------------------------------------------------------------------------
# Parameters (deterministic synthetic — no checkpoint load)
# ----------------------------------------------------------------------------
def make_decoder_params(key, *, num_quantizers, codebook_size, codebook_dim,
                        hidden_dim, hop_length):
    k0, k1, k2, k3, k4 = jax.random.split(key, 5)
    scale = 0.02
    # residual-VQ codebooks: (Q, codebook_size, codebook_dim)
    codebooks = scale * jax.random.normal(
        k0, (num_quantizers, codebook_size, codebook_dim), jnp.float32)
    # fc_post_a: Linear(2048, 1024), stored (in, out) for x @ w
    fc_w = scale * jax.random.normal(k1, (codebook_dim, hidden_dim), jnp.float32)
    fc_b = scale * jax.random.normal(k2, (hidden_dim,), jnp.float32)
    # head stand-in: per-frame linear hidden_dim -> hop_length waveform samples
    head_w = scale * jax.random.normal(k3, (hidden_dim, hop_length), jnp.float32)
    head_b = scale * jax.random.normal(k4, (hop_length,), jnp.float32)

    # Pre-compose fc_post_a -> (identity backbone) -> head into ONE affine map,
    # kept at hop_length columns (full-N block; no output depad pass needed).
    w_comp = fc_w @ head_w                       # (codebook_dim, hop_length)
    b_comp = fc_b @ head_w + head_b              # (hop_length,)

    params = {
        "codebooks_bf16": codebooks.astype(jnp.bfloat16),  # streamed into the kernel
        "codebooks": codebooks,                              # f32 copy for reference
        "w_comp": w_comp.astype(jnp.bfloat16),
        "b_comp": b_comp.astype(jnp.float32),
        # kept for reference / future non-identity backbone
        "fc_w": fc_w, "fc_b": fc_b, "head_w": head_w, "head_b": head_b,
    }
    return params


# ----------------------------------------------------------------------------
# Decoder / TrainableDecoder forward
# ----------------------------------------------------------------------------
def _pick_tm(M: int) -> int:
    # Prefer a tile that divides M exactly (no code padding, no output depad).
    for cand in (512, 256, 128, 64, 32, 16, 8):
        if M % cand == 0:
            return cand
    return min(512, _round_up(M, 8))


@functools.partial(jax.jit, static_argnames=("hop_length",))
def trainable_decoder_forward(params, vq_codes, *, hop_length):
    """vq_codes: (B, Q, T) int32 (or (B, T) -> treated as Q=1).

    Returns recon_audio: (B, 1, T * hop_length) float32.
    """
    if vq_codes.ndim == 2:                           # torch: vq_codes.unsqueeze(1)
        vq_codes = vq_codes[:, None, :]
    codes_btq = jnp.transpose(vq_codes, (0, 2, 1))   # (B, T, Q)
    B, T, Q = codes_btq.shape
    M = B * T
    codes_2d = codes_btq.reshape(M, Q).astype(jnp.int32)

    tm = _pick_tm(M)
    M_pad = _round_up(M, tm)
    if M_pad != M:                                   # pad only the tiny int32 codes
        codes_2d = jnp.pad(codes_2d, ((0, M_pad - M), (0, 0)))

    # VQ lookup + sum over Q + fc_post_a -> backbone(identity) -> head, all fused.
    frames = fused_decoder(
        codes_2d, params["codebooks_bf16"], params["w_comp"], params["b_comp"],
        tm=tm)

    if M_pad != M:
        frames = frames[:M]
    # upsample_factors == [] -> self.upsampler is None -> pass-through branch.
    recon_audio = frames.reshape(B, 1, T * hop_length)
    return recon_audio


if __name__ == "__main__":
    # Config satisfying the Decoder constraint:
    #   sample_rate // hop_length // prod(upsample_factors) == 50
    sample_rate = 24000
    hop_length = 480
    upsample_factors = []
    total_ups = math.prod(upsample_factors) if upsample_factors else 1
    assert sample_rate // hop_length // total_ups == 50

    B, Q, T = 2, 2, 8
    codebook_size = 64
    codebook_dim = 2048
    hidden_dim = 1024

    key = jax.random.PRNGKey(0)
    kp, kc = jax.random.split(key)
    params = make_decoder_params(
        kp,
        num_quantizers=Q,
        codebook_size=codebook_size,
        codebook_dim=codebook_dim,
        hidden_dim=hidden_dim,
        hop_length=hop_length,
    )
    vq_codes = jax.random.randint(kc, (B, Q, T), 0, codebook_size, dtype=jnp.int32)

    recon_audio = trainable_decoder_forward(params, vq_codes, hop_length=hop_length)
    recon_audio = jax.block_until_ready(recon_audio)
    assert recon_audio.shape == (B, 1, T * hop_length), recon_audio.shape
    assert recon_audio.dtype == jnp.float32

    # --- Reference 1: same bf16 quantized path via plain jnp ops --------------
    codes_btq = jnp.transpose(vq_codes, (0, 2, 1))
    emb_bf = jnp.zeros((B, T, codebook_dim), jnp.float32)
    for q in range(Q):
        emb_bf = emb_bf + params["codebooks_bf16"][q][codes_btq[:, :, q]].astype(
            jnp.float32)
    x_bf16 = emb_bf.reshape(B * T, codebook_dim).astype(jnp.bfloat16)
    ref1 = jnp.dot(x_bf16, params["w_comp"],
                   preferred_element_type=jnp.float32) + params["b_comp"]
    ref1 = ref1.reshape(B, 1, T * hop_length)
    assert jnp.allclose(recon_audio, ref1, atol=2e-4, rtol=1e-3), (
        float(jnp.max(jnp.abs(recon_audio - ref1))))

    # --- Reference 2: original f32 two-layer pipeline (fc_post_a -> head) -----
    emb32 = jnp.zeros((B, T, codebook_dim), jnp.float32)
    for q in range(Q):
        emb32 = emb32 + params["codebooks"][q][codes_btq[:, :, q]]
    ref2 = emb32.reshape(B * T, -1) @ params["fc_w"] + params["fc_b"]
    ref2 = ref2 @ params["head_w"] + params["head_b"]
    ref2 = ref2.reshape(B, 1, T * hop_length)
    assert jnp.allclose(recon_audio, ref2, atol=3e-3, rtol=3e-2), (
        float(jnp.max(jnp.abs(recon_audio - ref2))))

    print("KERNEL_OK")
</pallas_src>

<mosaic_0001>
module attributes {stable_mosaic.version = 11 : i64} {
  func.func @_fused_decoder_kernel(%arg0: i32, %arg1: memref<16x2xi32, #tpu.memory_space<vmem>>, %arg2: memref<2x64x2048xbf16, #tpu.memory_space<vmem>>, %arg3: memref<2048x480xbf16, #tpu.memory_space<vmem>>, %arg4: memref<1x480xf32, #tpu.memory_space<vmem>>, %arg5: memref<16x480xf32, #tpu.memory_space<vmem>>) attributes {dimension_semantics = [#tpu.dimension_semantics<parallel>], iteration_bounds = array<i64: 1>, scalar_prefetch = 0 : i64, scratch_operands = 0 : i64, tpu.core_type = #tpu.core_type<tc>, window_params = [{transform_indices = @transform_0, window_bounds = array<i64: 16, 2>}, {pipeline_mode = #tpu.pipeline_mode<synchronous>, transform_indices = @transform_1, window_bounds = array<i64: 2, 64, 2048>}, {pipeline_mode = #tpu.pipeline_mode<synchronous>, transform_indices = @transform_2, window_bounds = array<i64: 2048, 480>}, {pipeline_mode = #tpu.pipeline_mode<synchronous>, transform_indices = @transform_3, window_bounds = array<i64: 1, 480>}, {transform_indices = @transform_4, window_bounds = array<i64: 16, 480>}]} {
    %c0 = arith.constant 0 : index
    %c0_0 = arith.constant 0 : index
    %0 = vector.load %arg1[%c0, %c0_0] : memref<16x2xi32, #tpu.memory_space<vmem>>, vector<16x2xi32>
    %1 = vector.extract_strided_slice %0 {offsets = [0, 0], sizes = [16, 1], strides = [1, 1]} : vector<16x2xi32> to vector<16x1xi32>
    %2 = tpu.iota {dimensions = array<i32: 1>} : vector<16x64xi32>
    %3 = vector.broadcast %1 : vector<16x1xi32> to vector<16x64xi32>
    %4 = arith.cmpi eq, %3, %2 : vector<16x64xi32>
    %5 = arith.extui %4 : vector<16x64xi1> to vector<16x64xi32>
    %6 = arith.sitofp %5 : vector<16x64xi32> to vector<16x64xf32>
    %7 = arith.truncf %6 : vector<16x64xf32> to vector<16x64xbf16>
    %c0_1 = arith.constant 0 : index
    %c0_2 = arith.constant 0 : index
    %c0_3 = arith.constant 0 : index
    %8 = vector.load %arg2[%c0_1, %c0_2, %c0_3] : memref<2x64x2048xbf16, #tpu.memory_space<vmem>>, vector<1x64x2048xbf16>
    %9 = vector.shape_cast %8 : vector<1x64x2048xbf16> to vector<64x2048xbf16>
    %cst = arith.constant dense<0.000000e+00> : vector<16x2048xf32>
    %10 = tpu.matmul %7, %9, %cst {dimension_numbers = #tpu.dot_dimension_numbers<[1], [0], [0], [1], [0, 0, 1, 1], [], []>} : vector<16x64xbf16>, vector<64x2048xbf16>, vector<16x2048xf32> -> vector<16x2048xf32>
    %11 = vector.extract_strided_slice %0 {offsets = [0, 1], sizes = [16, 1], strides = [1, 1]} : vector<16x2xi32> to vector<16x1xi32>
    %12 = tpu.iota {dimensions = array<i32: 1>} : vector<16x64xi32>
    %13 = vector.broadcast %11 : vector<16x1xi32> to vector<16x64xi32>
    %14 = arith.cmpi eq, %13, %12 : vector<16x64xi32>
    %15 = arith.extui %14 : vector<16x64xi1> to vector<16x64xi32>
    %16 = arith.sitofp %15 : vector<16x64xi32> to vector<16x64xf32>
    %17 = arith.truncf %16 : vector<16x64xf32> to vector<16x64xbf16>
    %c1 = arith.constant 1 : index
    %c0_4 = arith.constant 0 : index
    %c0_5 = arith.constant 0 : index
    %18 = vector.load %arg2[%c1, %c0_4, %c0_5] : memref<2x64x2048xbf16, #tpu.memory_space<vmem>>, vector<1x64x2048xbf16>
    %19 = vector.shape_cast %18 : vector<1x64x2048xbf16> to vector<64x2048xbf16>
    %cst_6 = arith.constant dense<0.000000e+00> : vector<16x2048xf32>
    %20 = tpu.matmul %17, %19, %cst_6 {dimension_numbers = #tpu.dot_dimension_numbers<[1], [0], [0], [1], [0, 0, 1, 1], [], []>} : vector<16x64xbf16>, vector<64x2048xbf16>, vector<16x2048xf32> -> vector<16x2048xf32>
    %21 = arith.addf %10, %20 : vector<16x2048xf32>
    %22 = arith.truncf %21 : vector<16x2048xf32> to vector<16x2048xbf16>
    %c0_7 = arith.constant 0 : index
    %c0_8 = arith.constant 0 : index
    %23 = vector.load %arg3[%c0_7, %c0_8] : memref<2048x480xbf16, #tpu.memory_space<vmem>>, vector<2048x480xbf16>
    %cst_9 = arith.constant dense<0.000000e+00> : vector<16x480xf32>
    %24 = tpu.matmul %22, %23, %cst_9 {dimension_numbers = #tpu.dot_dimension_numbers<[1], [0], [0], [1], [0, 0, 1, 1], [], []>} : vector<16x2048xbf16>, vector<2048x480xbf16>, vector<16x480xf32> -> vector<16x480xf32>
    %c0_10 = arith.constant 0 : index
    %c0_11 = arith.constant 0 : index
    %25 = vector.load %arg4[%c0_10, %c0_11] : memref<1x480xf32, #tpu.memory_space<vmem>>, vector<1x480xf32>
    %26 = vector.broadcast %25 : vector<1x480xf32> to vector<16x480xf32>
    %27 = arith.addf %24, %26 : vector<16x480xf32>
    %c0_12 = arith.constant 0 : index
    %c0_13 = arith.constant 0 : index
    %28 = vector.load %arg5[%c0_12, %c0_13] : memref<16x480xf32, #tpu.memory_space<vmem>>, vector<16x480xf32>
    tpu.vector_store %arg5[%c0_12, %c0_13], %27 {strides = array<i32>} : memref<16x480xf32, #tpu.memory_space<vmem>>, vector<16x480xf32>,
    return
  }
  func.func @transform_0(%arg0: i32) -> (i32, i32) {
    %c0_i32 = arith.constant 0 : i32
    %c0_i32_0 = arith.constant 0 : i32
    return %arg0, %c0_i32 : i32, i32
  }
  func.func @transform_1(%arg0: i32) -> (i32, i32, i32) {
    %c0_i32 = arith.constant 0 : i32
    %c0_i32_0 = arith.constant 0 : i32
    %c0_i32_1 = arith.constant 0 : i32
    %c0_i32_2 = arith.constant 0 : i32
    return %c0_i32, %c0_i32_0, %c0_i32_1 : i32, i32, i32
  }
  func.func @transform_2(%arg0: i32) -> (i32, i32) {
    %c0_i32 = arith.constant 0 : i32
    %c0_i32_0 = arith.constant 0 : i32
    %c0_i32_1 = arith.constant 0 : i32
    return %c0_i32, %c0_i32_0 : i32, i32
  }
  func.func @transform_3(%arg0: i32) -> (i32, i32) {
    %c0_i32 = arith.constant 0 : i32
    %c0_i32_0 = arith.constant 0 : i32
    %c0_i32_1 = arith.constant 0 : i32
    return %c0_i32, %c0_i32_0 : i32, i32
  }
  func.func @transform_4(%arg0: i32) -> (i32, i32) {
    %c0_i32 = arith.constant 0 : i32
    %c0_i32_0 = arith.constant 0 : i32
    return %arg0, %c0_i32 : i32, i32
  }
}

</mosaic_0001>

<llo_original>
// kernel: trainable_decoder_forward.1
$region0: #{trainable_decoder_forward.1}
  #allocation0 [shape = 'u32[]', space=smem, size = 0x4, offset = 0x4, fixed_abs, tag = 'smem constant byte address 0x4 - core index']
  #allocation1 [shape = 'u32[72,128]{1,0:T(1,128)}', space=vmem, size = 0x9000, scoped, tag = 'internal scratch']
  %s0 = inlined_call_operand.vmem [shape: s32[16,2], index: 0, kind: input, shape index: {}]
  %s1 = inlined_call_operand.vmem [shape: bf16[2,64,2048], index: 1, kind: input, shape index: {}]
  %s2 = inlined_call_operand.vmem [shape: bf16[2048,480], index: 2, kind: input, shape index: {}]
  %s3 = inlined_call_operand.vmem [shape: f32[1,480], index: 3, kind: input, shape index: {}]
  %s4 = inlined_call_operand.vmem [shape: f32[16,480], index: 4, kind: output, shape index: {}]
  %s5 = sld [smem:[#allocation0]]
  $region26: #{trainable_decoder_forward.1} parent=0
    _
  %s7 = ssub.s32 1, %s5
  %s8 = scalar_select 0, %s7, %s5
  // Predicated region
  $region2: #{trainable_decoder_forward.1} parent=0 // pred_check
    _
  $region3: #{trainable_decoder_forward.1} parent=0 // pred_check_branch
    %10 = sbr.rel (0) target = $region5
  $region4: #{trainable_decoder_forward.1} parent=0 // pred_region
    _
  $region5: #{trainable_decoder_forward.1} parent=0 // pred_fallthru
    _
  // Predicated region
  $region6: #{trainable_decoder_forward.1} parent=0 // pred_check
    _
  $region7: #{trainable_decoder_forward.1} parent=0 // pred_check_branch
    %12 = sbr.rel (0) target = $region9
  $region8: #{trainable_decoder_forward.1} parent=0 // pred_region
    _
  $region9: #{trainable_decoder_forward.1} parent=0 // pred_fallthru
    _
  // Predicated region
  $region10: #{trainable_decoder_forward.1} parent=0 // pred_check
    _
  $region11: #{trainable_decoder_forward.1} parent=0 // pred_check_branch
    %14 = sbr.rel (0) target = $region13
  $region12: #{trainable_decoder_forward.1} parent=0 // pred_region
    _
  $region13: #{trainable_decoder_forward.1} parent=0 // pred_fallthru
    _
  // Predicated region
  $region14: #{trainable_decoder_forward.1} parent=0 // pred_check
    _
  $region15: #{trainable_decoder_forward.1} parent=0 // pred_check_branch
    %16 = sbr.rel (0) target = $region17
  $region16: #{trainable_decoder_forward.1} parent=0 // pred_region
    _
  $region17: #{trainable_decoder_forward.1} parent=0 // pred_fallthru
    _
  %v18 = vld [vmem:[%s0] sm:$0xff]
  %v19 = vld [vmem:[%s0 + $0x8] sm:$0xff]
  %v20 = vlaneseq
  %v21 = vand.u32 %v20, 127
  %22 = vset.pattern.permute.xlu0 0
  %23 = vperm.xlu0 %22, %v18
  %v24 = vpop.permute.xlu0 %23
  %25 = vset.pattern.permute.xlu0 0
  %26 = vperm.xlu0 %25, %v19
  %v27 = vpop.permute.xlu0 %26
  %vm28 = vcmp.eq.s32.totalorder %v24, %v21
  %vm29 = vcmp.eq.s32.totalorder %v27, %v21
  %v30 = vsel %vm28, 1, 0
  %v31 = vsel %vm29, 1, 0
  %v32 = vcvt.s32.f32 %v30
  %v33 = vcvt.s32.f32 %v31
  %v34 = vpack.c.bf16 %v33, %v32
  %v35 = vld [vmem:[%s1] sm:$0xff]
  %v36 = vld [vmem:[%s1 + $0x8] sm:$0xff]
  %v37 = vld [vmem:[%s1 + $0x10] sm:$0xff]
  %v38 = vld [vmem:[%s1 + $0x18] sm:$0xff]
  %v39 = vld [vmem:[%s1 + $0x20] sm:$0xff]
  %v40 = vld [vmem:[%s1 + $0x28] sm:$0xff]
  %v41 = vld [vmem:[%s1 + $0x30] sm:$0xff]
  %v42 = vld [vmem:[%s1 + $0x38] sm:$0xff]
  %v43 = vld [vmem:[%s1 + $0x40] sm:$0xff]
  %v44 = vld [vmem:[%s1 + $0x48] sm:$0xff]
  %v45 = vld [vmem:[%s1 + $0x50] sm:$0xff]
  %v46 = vld [vmem:[%s1 + $0x58] sm:$0xff]
  %v47 = vld [vmem:[%s1 + $0x60] sm:$0xff]
  %v48 = vld [vmem:[%s1 + $0x68] sm:$0xff]
  %v49 = vld [vmem:[%s1 + $0x70] sm:$0xff]
  %v50 = vld [vmem:[%s1 + $0x78] sm:$0xff]
  %v51 = vld [vmem:[%s1 + $0x80] sm:$0xff]
  %v52 = vld [vmem:[%s1 + $0x88] sm:$0xff]
  %v53 = vld [vmem:[%s1 + $0x90] sm:$0xff]
  %v54 = vld [vmem:[%s1 + $0x98] sm:$0xff]
  %v55 = vld [vmem:[%s1 + $0xa0] sm:$0xff]
  %v56 = vld [vmem:[%s1 + $0xa8] sm:$0xff]
  %v57 = vld [vmem:[%s1 + $0xb0] sm:$0xff]
  %v58 = vld [vmem:[%s1 + $0xb8] sm:$0xff]
  %v59 = vld [vmem:[%s1 + $0xc0] sm:$0xff]
  %v60 = vld [vmem:[%s1 + $0xc8] sm:$0xff]
  %v61 = vld [vmem:[%s1 + $0xd0] sm:$0xff]
  %v62 = vld [vmem:[%s1 + $0xd8] sm:$0xff]
  %v63 = vld [vmem:[%s1 + $0xe0] sm:$0xff]
  %v64 = vld [vmem:[%s1 + $0xe8] sm:$0xff]
  %v65 = vld [vmem:[%s1 + $0xf0] sm:$0xff]
  %v66 = vld [vmem:[%s1 + $0xf8] sm:$0xff]
  %v67 = vld [vmem:[%s1 + $0x100] sm:$0xff]
  %v68 = vld [vmem:[%s1 + $0x108] sm:$0xff]
  %v69 = vld [vmem:[%s1 + $0x110] sm:$0xff]
  %v70 = vld [vmem:[%s1 + $0x118] sm:$0xff]
  %v71 = vld [vmem:[%s1 + $0x120] sm:$0xff]
  %v72 = vld [vmem:[%s1 + $0x128] sm:$0xff]
  %v73 = vld [vmem:[%s1 + $0x130] sm:$0xff]
  %v74 = vld [vmem:[%s1 + $0x138] sm:$0xff]
  %v75 = vld [vmem:[%s1 + $0x140] sm:$0xff]
  %v76 = vld [vmem:[%s1 + $0x148] sm:$0xff]
  %v77 = vld [vmem:[%s1 + $0x150] sm:$0xff]
  %v78 = vld [vmem:[%s1 + $0x158] sm:$0xff]
  %v79 = vld [vmem:[%s1 + $0x160] sm:$0xff]
  %v80 = vld [vmem:[%s1 + $0x168] sm:$0xff]
  %v81 = vld [vmem:[%s1 + $0x170] sm:$0xff]
  %v82 = vld [vmem:[%s1 + $0x178] sm:$0xff]
  %v83 = vld [vmem:[%s1 + $0x180] sm:$0xff]
  %v84 = vld [vmem:[%s1 + $0x188] sm:$0xff]
  %v85 = vld [vmem:[%s1 + $0x190] sm:$0xff]
  %v86 = vld [vmem:[%s1 + $0x198] sm:$0xff]
  %v87 = vld [vmem:[%s1 + $0x1a0] sm:$0xff]
  %v88 = vld [vmem:[%s1 + $0x1a8] sm:$0xff]
  %v89 = vld [vmem:[%s1 + $0x1b0] sm:$0xff]
  %v90 = vld [vmem:[%s1 + $0x1b8] sm:$0xff]
  %v91 = vld [vmem:[%s1 + $0x1c0] sm:$0xff]
  %v92 = vld [vmem:[%s1 + $0x1c8] sm:$0xff]
  %v93 = vld [vmem:[%s1 + $0x1d0] sm:$0xff]
  %v94 = vld [vmem:[%s1 + $0x1d8] sm:$0xff]
  %v95 = vld [vmem:[%s1 + $0x1e0] sm:$0xff]
  %v96 = vld [vmem:[%s1 + $0x1e8] sm:$0xff]
  %v97 = vld [vmem:[%s1 + $0x1f0] sm:$0xff]
  %v98 = vld [vmem:[%s1 + $0x1f8] sm:$0xff]
  %99 = vset.pattern.permute.xlu0 1
  %100 = vperm.xlu0 %99, %v18
  %v101 = vpop.permute.xlu0 %100
  %102 = vset.pattern.permute.xlu0 1
  %103 = vperm.xlu0 %102, %v19
  %v104 = vpop.permute.xlu0 %103
  %vm105 = vcmp.eq.s32.totalorder %v101, %v21
  %vm106 = vcmp.eq.s32.totalorder %v104, %v21
  %v107 = vsel %vm105, 1, 0
  %v108 = vsel %vm106, 1, 0
  %v109 = vcvt.s32.f32 %v107
  %v110 = vcvt.s32.f32 %v108
  %v111 = vpack.c.bf16 %v110, %v109
  %s112 = scalar_lea.vmem %s1, 512
  %v113 = vld [vmem:[%s112] sm:$0xff]
  %v114 = vld [vmem:[%s112 + $0x8] sm:$0xff]
  %v115 = vld [vmem:[%s112 + $0x10] sm:$0xff]
  %v116 = vld [vmem:[%s112 + $0x18] sm:$0xff]
  %v117 = vld [vmem:[%s112 + $0x20] sm:$0xff]
  %v118 = vld [vmem:[%s112 + $0x28] sm:$0xff]
  %v119 = vld [vmem:[%s112 + $0x30] sm:$0xff]
  %v120 = vld [vmem:[%s112 + $0x38] sm:$0xff]
  %v121 = vld [vmem:[%s112 + $0x40] sm:$0xff]
  %v122 = vld [vmem:[%s112 + $0x48] sm:$0xff]
  %v123 = vld [vmem:[%s112 + $0x50] sm:$0xff]
  %v124 = vld [vmem:[%s112 + $0x58] sm:$0xff]
  %v125 = vld [vmem:[%s112 + $0x60] sm:$0xff]
  %v126 = vld [vmem:[%s112 + $0x68] sm:$0xff]
  %v127 = vld [vmem:[%s112 + $0x70] sm:$0xff]
  %v128 = vld [vmem:[%s112 + $0x78] sm:$0xff]
  %v129 = vld [vmem:[%s112 + $0x80] sm:$0xff]
  %v130 = vld [vmem:[%s112 + $0x88] sm:$0xff]
  %v131 = vld [vmem:[%s112 + $0x90] sm:$0xff]
  %v132 = vld [vmem:[%s112 + $0x98] sm:$0xff]
  %v133 = vld [vmem:[%s112 + $0xa0] sm:$0xff]
  %v134 = vld [vmem:[%s112 + $0xa8] sm:$0xff]
  %v135 = vld [vmem:[%s112 + $0xb0] sm:$0xff]
  %v136 = vld [vmem:[%s112 + $0xb8] sm:$0xff]
  %v137 = vld [vmem:[%s112 + $0xc0] sm:$0xff]
  %v138 = vld [vmem:[%s112 + $0xc8] sm:$0xff]
  %v139 = vld [vmem:[%s112 + $0xd0] sm:$0xff]
  %v140 = vld [vmem:[%s112 + $0xd8] sm:$0xff]
  %v141 = vld [vmem:[%s112 + $0xe0] sm:$0xff]
  %v142 = vld [vmem:[%s112 + $0xe8] sm:$0xff]
  %v143 = vld [vmem:[%s112 + $0xf0] sm:$0xff]
  %v144 = vld [vmem:[%s112 + $0xf8] sm:$0xff]
  %v145 = vld [vmem:[%s112 + $0x100] sm:$0xff]
  %v146 = vld [vmem:[%s112 + $0x108] sm:$0xff]
  %v147 = vld [vmem:[%s112 + $0x110] sm:$0xff]
  %v148 = vld [vmem:[%s112 + $0x118] sm:$0xff]
  %v149 = vld [vmem:[%s112 + $0x120] sm:$0xff]
  %v150 = vld [vmem:[%s112 + $0x128] sm:$0xff]
  %v151 = vld [vmem:[%s112 + $0x130] sm:$0xff]
  %v152 = vld [vmem:[%s112 + $0x138] sm:$0xff]
  %v153 = vld [vmem:[%s112 + $0x140] sm:$0xff]
  %v154 = vld [vmem:[%s112 + $0x148] sm:$0xff]
  %v155 = vld [vmem:[%s112 + $0x150] sm:$0xff]
  %v156 = vld [vmem:[%s112 + $0x158] sm:$0xff]
  %v157 = vld [vmem:[%s112 + $0x160] sm:$0xff]
  %v158 = vld [vmem:[%s112 + $0x168] sm:$0xff]
  %v159 = vld [vmem:[%s112 + $0x170] sm:$0xff]
  %v160 = vld [vmem:[%s112 + $0x178] sm:$0xff]
  %v161 = vld [vmem:[%s112 + $0x180] sm:$0xff]
  %v162 = vld [vmem:[%s112 + $0x188] sm:$0xff]
  %v163 = vld [vmem:[%s112 + $0x190] sm:$0xff]
  %v164 = vld [vmem:[%s112 + $0x198] sm:$0xff]
  %v165 = vld [vmem:[%s112 + $0x1a0] sm:$0xff]
  %v166 = vld [vmem:[%s112 + $0x1a8] sm:$0xff]
  %v167 = vld [vmem:[%s112 + $0x1b0] sm:$0xff]
  %v168 = vld [vmem:[%s112 + $0x1b8] sm:$0xff]
  %v169 = vld [vmem:[%s112 + $0x1c0] sm:$0xff]
  %v170 = vld [vmem:[%s112 + $0x1c8] sm:$0xff]
  %v171 = vld [vmem:[%s112 + $0x1d0] sm:$0xff]
  %v172 = vld [vmem:[%s112 + $0x1d8] sm:$0xff]
  %v173 = vld [vmem:[%s112 + $0x1e0] sm:$0xff]
  %v174 = vld [vmem:[%s112 + $0x1e8] sm:$0xff]
  %v175 = vld [vmem:[%s112 + $0x1f0] sm:$0xff]
  %v176 = vld [vmem:[%s112 + $0x1f8] sm:$0xff]
  %v241 = vunpack.c.l.b16 %v113
  %v242 = vunpack.c.h.b16 %v113
  %v243 = vunpack.c.l.b16 %v114
  %v244 = vunpack.c.h.b16 %v114
  %v245 = vunpack.c.l.b16 %v115
  %v246 = vunpack.c.h.b16 %v115
  %v247 = vunpack.c.l.b16 %v116
  %v248 = vunpack.c.h.b16 %v116
  %v249 = vunpack.c.l.b16 %v117
  %v250 = vunpack.c.h.b16 %v117
  %v251 = vunpack.c.l.b16 %v118
  %v252 = vunpack.c.h.b16 %v118
  %v253 = vunpack.c.l.b16 %v119
  %v254 = vunpack.c.h.b16 %v119
  %v255 = vunpack.c.l.b16 %v120
  %v256 = vunpack.c.h.b16 %v120
  %v257 = vunpack.c.l.b16 %v121
  %v258 = vunpack.c.h.b16 %v121
  %v259 = vunpack.c.l.b16 %v122
  %v260 = vunpack.c.h.b16 %v122
  %v261 = vunpack.c.l.b16 %v123
  %v262 = vunpack.c.h.b16 %v123
  %v263 = vunpack.c.l.b16 %v124
  %v264 = vunpack.c.h.b16 %v124
  %v265 = vunpack.c.l.b16 %v125
  %v266 = vunpack.c.h.b16 %v125
  %v267 = vunpack.c.l.b16 %v126
  %v268 = vunpack.c.h.b16 %v126
  %v269 = vunpack.c.l.b16 %v127
  %v270 = vunpack.c.h.b16 %v127
  %v271 = vunpack.c.l.b16 %v128
  %v272 = vunpack.c.h.b16 %v128
  %v273 = vunpack.c.l.b16 %v129
  %v274 = vunpack.c.h.b16 %v129
  %v275 = vunpack.c.l.b16 %v130
  %v276 = vunpack.c.h.b16 %v130
  %v277 = vunpack.c.l.b16 %v131
  %v278 = vunpack.c.h.b16 %v131
  %v279 = vunpack.c.l.b16 %v132
  %v280 = vunpack.c.h.b16 %v132
  %v281 = vunpack.c.l.b16 %v133
  %v282 = vunpack.c.h.b16 %v133
  %v283 = vunpack.c.l.b16 %v134
  %v284 = vunpack.c.h.b16 %v134
  %v285 = vunpack.c.l.b16 %v135
  %v286 = vunpack.c.h.b16 %v135
  %v287 = vunpack.c.l.b16 %v136
  %v288 = vunpack.c.h.b16 %v136
  %v289 = vunpack.c.l.b16 %v137
  %v290 = vunpack.c.h.b16 %v137
  %v291 = vunpack.c.l.b16 %v138
  %v292 = vunpack.c.h.b16 %v138
  %v293 = vunpack.c.l.b16 %v139
  %v294 = vunpack.c.h.b16 %v139
  %v295 = vunpack.c.l.b16 %v140
  %v296 = vunpack.c.h.b16 %v140
  %v297 = vunpack.c.l.b16 %v141
  %v298 = vunpack.c.h.b16 %v141
  %v299 = vunpack.c.l.b16 %v142
  %v300 = vunpack.c.h.b16 %v142
  %v301 = vunpack.c.l.b16 %v143
  %v302 = vunpack.c.h.b16 %v143
  %v303 = vunpack.c.l.b16 %v144
  %v304 = vunpack.c.h.b16 %v144
  %v305 = vunpack.c.l.b16 %v145
  %v306 = vunpack.c.h.b16 %v145
  %v307 = vunpack.c.l.b16 %v146
  %v308 = vunpack.c.h.b16 %v146
  %v309 = vunpack.c.l.b16 %v147
  %v310 = vunpack.c.h.b16 %v147
  %v311 = vunpack.c.l.b16 %v148
  %v312 = vunpack.c.h.b16 %v148
  %v313 = vunpack.c.l.b16 %v149
  %v314 = vunpack.c.h.b16 %v149
  %v315 = vunpack.c.l.b16 %v150
  %v316 = vunpack.c.h.b16 %v150
  %v317 = vunpack.c.l.b16 %v151
  %v318 = vunpack.c.h.b16 %v151
  %v319 = vunpack.c.l.b16 %v152
  %v320 = vunpack.c.h.b16 %v152
  %v321 = vunpack.c.l.b16 %v153
  %v322 = vunpack.c.h.b16 %v153
  %v323 = vunpack.c.l.b16 %v154
  %v324 = vunpack.c.h.b16 %v154
  %v325 = vunpack.c.l.b16 %v155
  %v326 = vunpack.c.h.b16 %v155
  %v327 = vunpack.c.l.b16 %v156
  %v328 = vunpack.c.h.b16 %v156
  %v329 = vunpack.c.l.b16 %v157
  %v330 = vunpack.c.h.b16 %v157
  %v331 = vunpack.c.l.b16 %v158
  %v332 = vunpack.c.h.b16 %v158
  %v333 = vunpack.c.l.b16 %v159
  %v334 = vunpack.c.h.b16 %v159
  %v335 = vunpack.c.l.b16 %v160
  %v336 = vunpack.c.h.b16 %v160
  %v337 = vunpack.c.l.b16 %v161
  %v338 = vunpack.c.h.b16 %v161
  %v339 = vunpack.c.l.b16 %v162
  %v340 = vunpack.c.h.b16 %v162
  %v341 = vunpack.c.l.b16 %v163
  %v342 = vunpack.c.h.b16 %v163
  %v343 = vunpack.c.l.b16 %v164
  %v344 = vunpack.c.h.b16 %v164
  %v345 = vunpack.c.l.b16 %v165
  %v346 = vunpack.c.h.b16 %v165
  %v347 = vunpack.c.l.b16 %v166
  %v348 = vunpack.c.h.b16 %v166
  %v349 = vunpack.c.l.b16 %v167
  %v350 = vunpack.c.h.b16 %v167
  %v351 = vunpack.c.l.b16 %v168
  %v352 = vunpack.c.h.b16 %v168
  %v353 = vunpack.c.l.b16 %v169
  %v354 = vunpack.c.h.b16 %v169
  %v355 = vunpack.c.l.b16 %v170
  %v356 = vunpack.c.h.b16 %v170
  %v357 = vunpack.c.l.b16 %v171
  %v358 = vunpack.c.h.b16 %v171
  %v359 = vunpack.c.l.b16 %v172
  %v360 = vunpack.c.h.b16 %v172
  %v361 = vunpack.c.l.b16 %v173
  %v362 = vunpack.c.h.b16 %v173
  %v363 = vunpack.c.l.b16 %v174
  %v364 = vunpack.c.h.b16 %v174
  %v365 = vunpack.c.l.b16 %v175
  %v366 = vunpack.c.h.b16 %v175
  %v367 = vunpack.c.l.b16 %v176
  %v368 = vunpack.c.h.b16 %v176
  %v369 = vpack.c.b16 %v257, %v241
  %v370 = vpack.c.b16 %v258, %v242
  %v371 = vpack.c.b16 %v259, %v243
  %v372 = vpack.c.b16 %v260, %v244
  %v373 = vpack.c.b16 %v261, %v245
  %v374 = vpack.c.b16 %v262, %v246
  %v375 = vpack.c.b16 %v263, %v247
  %v376 = vpack.c.b16 %v264, %v248
  %v377 = vpack.c.b16 %v265, %v249
  %v378 = vpack.c.b16 %v266, %v250
  %v379 = vpack.c.b16 %v267, %v251
  %v380 = vpack.c.b16 %v268, %v252
  %v381 = vpack.c.b16 %v269, %v253
  %v382 = vpack.c.b16 %v270, %v254
  %v383 = vpack.c.b16 %v271, %v255
  %v384 = vpack.c.b16 %v272, %v256
  %v385 = vpack.c.b16 %v289, %v273
  %v386 = vpack.c.b16 %v290, %v274
  %v387 = vpack.c.b16 %v291, %v275
  %v388 = vpack.c.b16 %v292, %v276
  %v389 = vpack.c.b16 %v293, %v277
  %v390 = vpack.c.b16 %v294, %v278
  %v391 = vpack.c.b16 %v295, %v279
  %v392 = vpack.c.b16 %v296, %v280
  %v393 = vpack.c.b16 %v297, %v281
  %v394 = vpack.c.b16 %v298, %v282
  %v395 = vpack.c.b16 %v299, %v283
  %v396 = vpack.c.b16 %v300, %v284
  %v397 = vpack.c.b16 %v301, %v285
  %v398 = vpack.c.b16 %v302, %v286
  %v399 = vpack.c.b16 %v303, %v287
  %v400 = vpack.c.b16 %v304, %v288
  %v401 = vpack.c.b16 %v321, %v305
  %v402 = vpack.c.b16 %v322, %v306
  %v403 = vpack.c.b16 %v323, %v307
  %v404 = vpack.c.b16 %v324, %v308
  %v405 = vpack.c.b16 %v325, %v309
  %v406 = vpack.c.b16 %v326, %v310
  %v407 = vpack.c.b16 %v327, %v311
  %v408 = vpack.c.b16 %v328, %v312
  %v409 = vpack.c.b16 %v329, %v313
  %v410 = vpack.c.b16 %v330, %v314
  %v411 = vpack.c.b16 %v331, %v315
  %v412 = vpack.c.b16 %v332, %v316
  %v413 = vpack.c.b16 %v333, %v317
  %v414 = vpack.c.b16 %v334, %v318
  %v415 = vpack.c.b16 %v335, %v319
  %v416 = vpack.c.b16 %v336, %v320
  %v417 = vpack.c.b16 %v353, %v337
  %v418 = vpack.c.b16 %v354, %v338
  %v419 = vpack.c.b16 %v355, %v339
  %v420 = vpack.c.b16 %v356, %v340
  %v421 = vpack.c.b16 %v357, %v341
  %v422 = vpack.c.b16 %v358, %v342
  %v423 = vpack.c.b16 %v359, %v343
  %v424 = vpack.c.b16 %v360, %v344
  %v425 = vpack.c.b16 %v361, %v345
  %v426 = vpack.c.b16 %v362, %v346
  %v427 = vpack.c.b16 %v363, %v347
  %v428 = vpack.c.b16 %v364, %v348
  %v429 = vpack.c.b16 %v365, %v349
  %v430 = vpack.c.b16 %v366, %v350
  %v431 = vpack.c.b16 %v367, %v351
  %v432 = vpack.c.b16 %v368, %v352
  %vm497 = vcmask 523264
  %v499 = vsel %vm497, %v111, 0
  %501 = vmatpush.bf16.msra.mxu0 0
  %502 = vmatpush.bf16.msra.mxu0 0
  %503 = vmatpush.bf16.msra.mxu0 0
  %504 = vmatpush.bf16.msra.mxu0 0
  %505 = vmatpush.bf16.msra.mxu0 %v417
  %506 = vmatpush.bf16.msra.mxu0 %v401
  %507 = vmatpush.bf16.msra.mxu0 %v385
  %508 = vmatpush.bf16.msra.mxu0 %v369
  %509 = vmatmul.bf16.gmra.mxu0 %v499
  %v510 = vpop.f32.mrf.mxu0
  %v511 = vadd.f32 0.0, %v510
  %v512 = vpop.f32.mrf.mxu0
  %v513 = vadd.f32 0.0, %v512
  %514 = vdwg.mxu0
  %515 = vmatpush.bf16.msra.mxu0 0
  %516 = vmatpush.bf16.msra.mxu0 0
  %517 = vmatpush.bf16.msra.mxu0 0
  %518 = vmatpush.bf16.msra.mxu0 0
  %519 = vmatpush.bf16.msra.mxu0 %v418
  %520 = vmatpush.bf16.msra.mxu0 %v402
  %521 = vmatpush.bf16.msra.mxu0 %v386
  %522 = vmatpush.bf16.msra.mxu0 %v370
  %523 = vmatmul.bf16.gmra.mxu0 %v499
  %v524 = vpop.f32.mrf.mxu0
  %v525 = vadd.f32 0.0, %v524
  %v526 = vpop.f32.mrf.mxu0
  %v527 = vadd.f32 0.0, %v526
  %528 = vdwg.mxu0
  %529 = vmatpush.bf16.msra.mxu0 0
  %530 = vmatpush.bf16.msra.mxu0 0
  %531 = vmatpush.bf16.msra.mxu0 0
  %532 = vmatpush.bf16.msra.mxu0 0
  %533 = vmatpush.bf16.msra.mxu0 %v419
  %534 = vmatpush.bf16.msra.mxu0 %v403
  %535 = vmatpush.bf16.msra.mxu0 %v387
  %536 = vmatpush.bf16.msra.mxu0 %v371
  %537 = vmatmul.bf16.gmra.mxu0 %v499
  %v538 = vpop.f32.mrf.mxu0
  %v539 = vadd.f32 0.0, %v538
  %v540 = vpop.f32.mrf.mxu0
  %v541 = vadd.f32 0.0, %v540
  %542 = vdwg.mxu0
  %543 = vmatpush.bf16.msra.mxu0 0
  %544 = vmatpush.bf16.msra.mxu0 0
  %545 = vmatpush.bf16.msra.mxu0 0
  %546 = vmatpush.bf16.msra.mxu0 0
  %547 = vmatpush.bf16.msra.mxu0 %v420
  %548 = vmatpush.bf16.msra.mxu0 %v404
  %549 = vmatpush.bf16.msra.mxu0 %v388
  %550 = vmatpush.bf16.msra.mxu0 %v372
  %551 = vmatmul.bf16.gmra.mxu0 %v499
  %v552 = vpop.f32.mrf.mxu0
  %v553 = vadd.f32 0.0, %v552
  %v554 = vpop.f32.mrf.mxu0
  %v555 = vadd.f32 0.0, %v554
  %556 = vdwg.mxu0
  %557 = vmatpush.bf16.msra.mxu0 0
  %558 = vmatpush.bf16.msra.mxu0 0
  %559 = vmatpush.bf16.msra.mxu0 0
  %560 = vmatpush.bf16.msra.mxu0 0
  %561 = vmatpush.bf16.msra.mxu0 %v421
  %562 = vmatpush.bf16.msra.mxu0 %v405
  %563 = vmatpush.bf16.msra.mxu0 %v389
  %564 = vmatpush.bf16.msra.mxu0 %v373
  %565 = vmatmul.bf16.gmra.mxu0 %v499
  %v566 = vpop.f32.mrf.mxu0
  %v567 = vadd.f32 0.0, %v566
  %v568 = vpop.f32.mrf.mxu0
  %v569 = vadd.f32 0.0, %v568
  %570 = vdwg.mxu0
  %571 = vmatpush.bf16.msra.mxu0 0
  %572 = vmatpush.bf16.msra.mxu0 0
  %573 = vmatpush.bf16.msra.mxu0 0
  %574 = vmatpush.bf16.msra.mxu0 0
  %575 = vmatpush.bf16.msra.mxu0 %v422
  %576 = vmatpush.bf16.msra.mxu0 %v406
  %577 = vmatpush.bf16.msra.mxu0 %v390
  %578 = vmatpush.bf16.msra.mxu0 %v374
  %579 = vmatmul.bf16.gmra.mxu0 %v499
  %v580 = vpop.f32.mrf.mxu0
  %v581 = vadd.f32 0.0, %v580
  %v582 = vpop.f32.mrf.mxu0
  %v583 = vadd.f32 0.0, %v582
  %584 = vdwg.mxu0
  %585 = vmatpush.bf16.msra.mxu0 0
  %586 = vmatpush.bf16.msra.mxu0 0
  %587 = vmatpush.bf16.msra.mxu0 0
  %588 = vmatpush.bf16.msra.mxu0 0
  %589 = vmatpush.bf16.msra.mxu0 %v423
  %590 = vmatpush.bf16.msra.mxu0 %v407
  %591 = vmatpush.bf16.msra.mxu0 %v391
  %592 = vmatpush.bf16.msra.mxu0 %v375
  %593 = vmatmul.bf16.gmra.mxu0 %v499
  %v594 = vpop.f32.mrf.mxu0
  %v595 = vadd.f32 0.0, %v594
  %v596 = vpop.f32.mrf.mxu0
  %v597 = vadd.f32 0.0, %v596
  %598 = vdwg.mxu0
  %599 = vmatpush.bf16.msra.mxu0 0
  %600 = vmatpush.bf16.msra.mxu0 0
  %601 = vmatpush.bf16.msra.mxu0 0
  %602 = vmatpush.bf16.msra.mxu0 0
  %603 = vmatpush.bf16.msra.mxu0 %v424
  %604 = vmatpush.bf16.msra.mxu0 %v408
  %605 = vmatpush.bf16.msra.mxu0 %v392
  %606 = vmatpush.bf16.msra.mxu0 %v376
  %607 = vmatmul.bf16.gmra.mxu0 %v499
  %v608 = vpop.f32.mrf.mxu0
  %v609 = vadd.f32 0.0, %v608
  %v610 = vpop.f32.mrf.mxu0
  %v611 = vadd.f32 0.0, %v610
  %612 = vdwg.mxu0
  %613 = vmatpush.bf16.msra.mxu0 0
  %614 = vmatpush.bf16.msra.mxu0 0
  %615 = vmatpush.bf16.msra.mxu0 0
  %616 = vmatpush.bf16.msra.mxu0 0
  %617 = vmatpush.bf16.msra.mxu0 %v425
  %618 = vmatpush.bf16.msra.mxu0 %v409
  %619 = vmatpush.bf16.msra.mxu0 %v393
  %620 = vmatpush.bf16.msra.mxu0 %v377
  %621 = vmatmul.bf16.gmra.mxu0 %v499
  %v622 = vpop.f32.mrf.mxu0
  %v623 = vadd.f32 0.0, %v622
  %v624 = vpop.f32.mrf.mxu0
  %v625 = vadd.f32 0.0, %v624
  %626 = vdwg.mxu0
  %627 = vmatpush.bf16.msra.mxu0 0
  %628 = vmatpush.bf16.msra.mxu0 0
  %629 = vmatpush.bf16.msra.mxu0 0
  %630 = vmatpush.bf16.msra.mxu0 0
  %631 = vmatpush.bf16.msra.mxu0 %v426
  %632 = vmatpush.bf16.msra.mxu0 %v410
  %633 = vmatpush.bf16.msra.mxu0 %v394
  %634 = vmatpush.bf16.msra.mxu0 %v378
  %635 = vmatmul.bf16.gmra.mxu0 %v499
  %v636 = vpop.f32.mrf.mxu0
  %v637 = vadd.f32 0.0, %v636
  %v638 = vpop.f32.mrf.mxu0
  %v639 = vadd.f32 0.0, %v638
  %640 = vdwg.mxu0
  %641 = vmatpush.bf16.msra.mxu0 0
  %642 = vmatpush.bf16.msra.mxu0 0
  %643 = vmatpush.bf16.msra.mxu0 0
  %644 = vmatpush.bf16.msra.mxu0 0
  %645 = vmatpush.bf16.msra.mxu0 %v427
  %646 = vmatpush.bf16.msra.mxu0 %v411
  %647 = vmatpush.bf16.msra.mxu0 %v395
  %648 = vmatpush.bf16.msra.mxu0 %v379
  %649 = vmatmul.bf16.gmra.mxu0 %v499
  %v650 = vpop.f32.mrf.mxu0
  %v651 = vadd.f32 0.0, %v650
  %v652 = vpop.f32.mrf.mxu0
  %v653 = vadd.f32 0.0, %v652
  %654 = vdwg.mxu0
  %655 = vmatpush.bf16.msra.mxu0 0
  %656 = vmatpush.bf16.msra.mxu0 0
  %657 = vmatpush.bf16.msra.mxu0 0
  %658 = vmatpush.bf16.msra.mxu0 0
  %659 = vmatpush.bf16.msra.mxu0 %v428
  %660 = vmatpush.bf16.msra.mxu0 %v412
  %661 = vmatpush.bf16.msra.mxu0 %v396
  %662 = vmatpush.bf16.msra.mxu0 %v380
  %663 = vmatmul.bf16.gmra.mxu0 %v499
  %v664 = vpop.f32.mrf.mxu0
  %v665 = vadd.f32 0.0, %v664
  %v666 = vpop.f32.mrf.mxu0
  %v667 = vadd.f32 0.0, %v666
  %668 = vdwg.mxu0
  %669 = vmatpush.bf16.msra.mxu0 0
  %670 = vmatpush.bf16.msra.mxu0 0
  %671 = vmatpush.bf16.msra.mxu0 0
  %672 = vmatpush.bf16.msra.mxu0 0
  %673 = vmatpush.bf16.msra.mxu0 %v429
  %674 = vmatpush.bf16.msra.mxu0 %v413
  %675 = vmatpush.bf16.msra.mxu0 %v397
  %676 = vmatpush.bf16.msra.mxu0 %v381
  %677 = vmatmul.bf16.gmra.mxu0 %v499
  %v678 = vpop.f32.mrf.mxu0
  %v679 = vadd.f32 0.0, %v678
  %v680 = vpop.f32.mrf.mxu0
  %v681 = vadd.f32 0.0, %v680
  %682 = vdwg.mxu0
  %683 = vmatpush.bf16.msra.mxu0 0
  %684 = vmatpush.bf16.msra.mxu0 0
  %685 = vmatpush.bf16.msra.mxu0 0
  %686 = vmatpush.bf16.msra.mxu0 0
  %687 = vmatpush.bf16.msra.mxu0 %v430
  %688 = vmatpush.bf16.msra.mxu0 %v414
  %689 = vmatpush.bf16.msra.mxu0 %v398
  %690 = vmatpush.bf16.msra.mxu0 %v382
  %691 = vmatmul.bf16.gmra.mxu0 %v499
  %v692 = vpop.f32.mrf.mxu0
  %v693 = vadd.f32 0.0, %v692
  %v694 = vpop.f32.mrf.mxu0
  %v695 = vadd.f32 0.0, %v694
  %696 = vdwg.mxu0
  %697 = vmatpush.bf16.msra.mxu0 0
  %698 = vmatpush.bf16.msra.mxu0 0
  %699 = vmatpush.bf16.msra.mxu0 0
  %700 = vmatpush.bf16.msra.mxu0 0
  %701 = vmatpush.bf16.msra.mxu0 %v431
  %702 = vmatpush.bf16.msra.mxu0 %v415
  %703 = vmatpush.bf16.msra.mxu0 %v399
  %704 = vmatpush.bf16.msra.mxu0 %v383
  %705 = vmatmul.bf16.gmra.mxu0 %v499
  %v706 = vpop.f32.mrf.mxu0
  %v707 = vadd.f32 0.0, %v706
  %v708 = vpop.f32.mrf.mxu0
  %v709 = vadd.f32 0.0, %v708
  %710 = vdwg.mxu0
  %711 = vmatpush.bf16.msra.mxu0 0
  %712 = vmatpush.bf16.msra.mxu0 0
  %713 = vmatpush.bf16.msra.mxu0 0
  %714 = vmatpush.bf16.msra.mxu0 0
  %715 = vmatpush.bf16.msra.mxu0 %v432
  %716 = vmatpush.bf16.msra.mxu0 %v416
  %717 = vmatpush.bf16.msra.mxu0 %v400
  %718 = vmatpush.bf16.msra.mxu0 %v384
  %719 = vmatmul.bf16.gmra.mxu0 %v499
  %v720 = vpop.f32.mrf.mxu0
  %v721 = vadd.f32 0.0, %v720
  %v722 = vpop.f32.mrf.mxu0
  %v723 = vadd.f32 0.0, %v722
  %724 = vdwg.mxu0
  %v789 = vunpack.c.l.b16 %v35
  %v790 = vunpack.c.h.b16 %v35
  %v791 = vunpack.c.l.b16 %v36
  %v792 = vunpack.c.h.b16 %v36
  %v793 = vunpack.c.l.b16 %v37
  %v794 = vunpack.c.h.b16 %v37
  %v795 = vunpack.c.l.b16 %v38
  %v796 = vunpack.c.h.b16 %v38
  %v797 = vunpack.c.l.b16 %v39
  %v798 = vunpack.c.h.b16 %v39
  %v799 = vunpack.c.l.b16 %v40
  %v800 = vunpack.c.h.b16 %v40
  %v801 = vunpack.c.l.b16 %v41
  %v802 = vunpack.c.h.b16 %v41
  %v803 = vunpack.c.l.b16 %v42
  %v804 = vunpack.c.h.b16 %v42
  %v805 = vunpack.c.l.b16 %v43
  %v806 = vunpack.c.h.b16 %v43
  %v807 = vunpack.c.l.b16 %v44
  %v808 = vunpack.c.h.b16 %v44
  %v809 = vunpack.c.l.b16 %v45
  %v810 = vunpack.c.h.b16 %v45
  %v811 = vunpack.c.l.b16 %v46
  %v812 = vunpack.c.h.b16 %v46
  %v813 = vunpack.c.l.b16 %v47
  %v814 = vunpack.c.h.b16 %v47
  %v815 = vunpack.c.l.b16 %v48
  %v816 = vunpack.c.h.b16 %v48
  %v817 = vunpack.c.l.b16 %v49
  %v818 = vunpack.c.h.b16 %v49
  %v819 = vunpack.c.l.b16 %v50
  %v820 = vunpack.c.h.b16 %v50
  %v821 = vunpack.c.l.b16 %v51
  %v822 = vunpack.c.h.b16 %v51
  %v823 = vunpack.c.l.b16 %v52
  %v824 = vunpack.c.h.b16 %v52
  %v825 = vunpack.c.l.b16 %v53
  %v826 = vunpack.c.h.b16 %v53
  %v827 = vunpack.c.l.b16 %v54
  %v828 = vunpack.c.h.b16 %v54
  %v829 = vunpack.c.l.b16 %v55
  %v830 = vunpack.c.h.b16 %v55
  %v831 = vunpack.c.l.b16 %v56
  %v832 = vunpack.c.h.b16 %v56
  %v833 = vunpack.c.l.b16 %v57
  %v834 = vunpack.c.h.b16 %v57
  %v835 = vunpack.c.l.b16 %v58
  %v836 = vunpack.c.h.b16 %v58
  %v837 = vunpack.c.l.b16 %v59
  %v838 = vunpack.c.h.b16 %v59
  %v839 = vunpack.c.l.b16 %v60
  %v840 = vunpack.c.h.b16 %v60
  %v841 = vunpack.c.l.b16 %v61
  %v842 = vunpack.c.h.b16 %v61
  %v843 = vunpack.c.l.b16 %v62
  %v844 = vunpack.c.h.b16 %v62
  %v845 = vunpack.c.l.b16 %v63
  %v846 = vunpack.c.h.b16 %v63
  %v847 = vunpack.c.l.b16 %v64
  %v848 = vunpack.c.h.b16 %v64
  %v849 = vunpack.c.l.b16 %v65
  %v850 = vunpack.c.h.b16 %v65
  %v851 = vunpack.c.l.b16 %v66
  %v852 = vunpack.c.h.b16 %v66
  %v853 = vunpack.c.l.b16 %v67
  %v854 = vunpack.c.h.b16 %v67
  %v855 = vunpack.c.l.b16 %v68
  %v856 = vunpack.c.h.b16 %v68
  %v857 = vunpack.c.l.b16 %v69
  %v858 = vunpack.c.h.b16 %v69
  %v859 = vunpack.c.l.b16 %v70
  %v860 = vunpack.c.h.b16 %v70
  %v861 = vunpack.c.l.b16 %v71
  %v862 = vunpack.c.h.b16 %v71
  %v863 = vunpack.c.l.b16 %v72
  %v864 = vunpack.c.h.b16 %v72
  %v865 = vunpack.c.l.b16 %v73
  %v866 = vunpack.c.h.b16 %v73
  %v867 = vunpack.c.l.b16 %v74
  %v868 = vunpack.c.h.b16 %v74
  %v869 = vunpack.c.l.b16 %v75
  %v870 = vunpack.c.h.b16 %v75
  %v871 = vunpack.c.l.b16 %v76
  %v872 = vunpack.c.h.b16 %v76
  %v873 = vunpack.c.l.b16 %v77
  %v874 = vunpack.c.h.b16 %v77
  %v875 = vunpack.c.l.b16 %v78
  %v876 = vunpack.c.h.b16 %v78
  %v877 = vunpack.c.l.b16 %v79
  %v878 = vunpack.c.h.b16 %v79
  %v879 = vunpack.c.l.b16 %v80
  %v880 = vunpack.c.h.b16 %v80
  %v881 = vunpack.c.l.b16 %v81
  %v882 = vunpack.c.h.b16 %v81
  %v883 = vunpack.c.l.b16 %v82
  %v884 = vunpack.c.h.b16 %v82
  %v885 = vunpack.c.l.b16 %v83
  %v886 = vunpack.c.h.b16 %v83
  %v887 = vunpack.c.l.b16 %v84
  %v888 = vunpack.c.h.b16 %v84
  %v889 = vunpack.c.l.b16 %v85
  %v890 = vunpack.c.h.b16 %v85
  %v891 = vunpack.c.l.b16 %v86
  %v892 = vunpack.c.h.b16 %v86
  %v893 = vunpack.c.l.b16 %v87
  %v894 = vunpack.c.h.b16 %v87
  %v895 = vunpack.c.l.b16 %v88
  %v896 = vunpack.c.h.b16 %v88
  %v897 = vunpack.c.l.b16 %v89
  %v898 = vunpack.c.h.b16 %v89
  %v899 = vunpack.c.l.b16 %v90
  %v900 = vunpack.c.h.b16 %v90
  %v901 = vunpack.c.l.b16 %v91
  %v902 = vunpack.c.h.b16 %v91
  %v903 = vunpack.c.l.b16 %v92
  %v904 = vunpack.c.h.b16 %v92
  %v905 = vunpack.c.l.b16 %v93
  %v906 = vunpack.c.h.b16 %v93
  %v907 = vunpack.c.l.b16 %v94
  %v908 = vunpack.c.h.b16 %v94
  %v909 = vunpack.c.l.b16 %v95
  %v910 = vunpack.c.h.b16 %v95
  %v911 = vunpack.c.l.b16 %v96
  %v912 = vunpack.c.h.b16 %v96
  %v913 = vunpack.c.l.b16 %v97
  %v914 = vunpack.c.h.b16 %v97
  %v915 = vunpack.c.l.b16 %v98
  %v916 = vunpack.c.h.b16 %v98
  %v917 = vpack.c.b16 %v805, %v789
  %v918 = vpack.c.b16 %v806, %v790
  %v919 = vpack.c.b16 %v807, %v791
  %v920 = vpack.c.b16 %v808, %v792
  %v921 = vpack.c.b16 %v809, %v793
  %v922 = vpack.c.b16 %v810, %v794
  %v923 = vpack.c.b16 %v811, %v795
  %v924 = vpack.c.b16 %v812, %v796
  %v925 = vpack.c.b16 %v813, %v797
  %v926 = vpack.c.b16 %v814, %v798
  %v927 = vpack.c.b16 %v815, %v799
  %v928 = vpack.c.b16 %v816, %v800
  %v929 = vpack.c.b16 %v817, %v801
  %v930 = vpack.c.b16 %v818, %v802
  %v931 = vpack.c.b16 %v819, %v803
  %v932 = vpack.c.b16 %v820, %v804
  %v933 = vpack.c.b16 %v837, %v821
  %v934 = vpack.c.b16 %v838, %v822
  %v935 = vpack.c.b16 %v839, %v823
  %v936 = vpack.c.b16 %v840, %v824
  %v937 = vpack.c.b16 %v841, %v825
  %v938 = vpack.c.b16 %v842, %v826
  %v939 = vpack.c.b16 %v843, %v827
  %v940 = vpack.c.b16 %v844, %v828
  %v941 = vpack.c.b16 %v845, %v829
  %v942 = vpack.c.b16 %v846, %v830
  %v943 = vpack.c.b16 %v847, %v831
  %v944 = vpack.c.b16 %v848, %v832
  %v945 = vpack.c.b16 %v849, %v833
  %v946 = vpack.c.b16 %v850, %v834
  %v947 = vpack.c.b16 %v851, %v835
  %v948 = vpack.c.b16 %v852, %v836
  %v949 = vpack.c.b16 %v869, %v853
  %v950 = vpack.c.b16 %v870, %v854
  %v951 = vpack.c.b16 %v871, %v855
  %v952 = vpack.c.b16 %v872, %v856
  %v953 = vpack.c.b16 %v873, %v857
  %v954 = vpack.c.b16 %v874, %v858
  %v955 = vpack.c.b16 %v875, %v859
  %v956 = vpack.c.b16 %v876, %v860
  %v957 = vpack.c.b16 %v877, %v861
  %v958 = vpack.c.b16 %v878, %v862
  %v959 = vpack.c.b16 %v879, %v863
  %v960 = vpack.c.b16 %v880, %v864
  %v961 = vpack.c.b16 %v881, %v865
  %v962 = vpack.c.b16 %v882, %v866
  %v963 = vpack.c.b16 %v883, %v867
  %v964 = vpack.c.b16 %v884, %v868
  %v965 = vpack.c.b16 %v901, %v885
  %v966 = vpack.c.b16 %v902, %v886
  %v967 = vpack.c.b16 %v903, %v887
  %v968 = vpack.c.b16 %v904, %v888
  %v969 = vpack.c.b16 %v905, %v889
  %v970 = vpack.c.b16 %v906, %v890
  %v971 = vpack.c.b16 %v907, %v891
  %v972 = vpack.c.b16 %v908, %v892
  %v973 = vpack.c.b16 %v909, %v893
  %v974 = vpack.c.b16 %v910, %v894
  %v975 = vpack.c.b16 %v911, %v895
  %v976 = vpack.c.b16 %v912, %v896
  %v977 = vpack.c.b16 %v913, %v897
  %v978 = vpack.c.b16 %v914, %v898
  %v979 = vpack.c.b16 %v915, %v899
  %v980 = vpack.c.b16 %v916, %v900
  %v1046 = vsel %vm497, %v34, 0
  %1048 = vmatpush.bf16.msra.mxu0 0
  %1049 = vmatpush.bf16.msra.mxu0 0
  %1050 = vmatpush.bf16.msra.mxu0 0
  %1051 = vmatpush.bf16.msra.mxu0 0
  %1052 = vmatpush.bf16.msra.mxu0 %v965
  %1053 = vmatpush.bf16.msra.mxu0 %v949
  %1054 = vmatpush.bf16.msra.mxu0 %v933
  %1055 = vmatpush.bf16.msra.mxu0 %v917
  %1056 = vmatmul.bf16.gmra.mxu0 %v1046
  %v1057 = vpop.f32.mrf.mxu0
  %v1058 = vadd.f32 %v511, %v1057
  %v1059 = vpop.f32.mrf.mxu0
  %v1060 = vadd.f32 %v513, %v1059
  %1061 = vdwg.mxu0
  %1062 = vmatpush.bf16.msra.mxu0 0
  %1063 = vmatpush.bf16.msra.mxu0 0
  %1064 = vmatpush.bf16.msra.mxu0 0
  %1065 = vmatpush.bf16.msra.mxu0 0
  %1066 = vmatpush.bf16.msra.mxu0 %v966
  %1067 = vmatpush.bf16.msra.mxu0 %v950
  %1068 = vmatpush.bf16.msra.mxu0 %v934
  %1069 = vmatpush.bf16.msra.mxu0 %v918
  %1070 = vmatmul.bf16.gmra.mxu0 %v1046
  %v1071 = vpop.f32.mrf.mxu0
  %v1072 = vadd.f32 %v525, %v1071
  %v1073 = vpop.f32.mrf.mxu0
  %v1074 = vadd.f32 %v527, %v1073
  %1075 = vdwg.mxu0
  %1076 = vmatpush.bf16.msra.mxu0 0
  %1077 = vmatpush.bf16.msra.mxu0 0
  %1078 = vmatpush.bf16.msra.mxu0 0
  %1079 = vmatpush.bf16.msra.mxu0 0
  %1080 = vmatpush.bf16.msra.mxu0 %v967
  %1081 = vmatpush.bf16.msra.mxu0 %v951
  %1082 = vmatpush.bf16.msra.mxu0 %v935
  %1083 = vmatpush.bf16.msra.mxu0 %v919
  %1084 = vmatmul.bf16.gmra.mxu0 %v1046
  %v1085 = vpop.f32.mrf.mxu0
  %v1086 = vadd.f32 %v539, %v1085
  %v1087 = vpop.f32.mrf.mxu0
  %v1088 = vadd.f32 %v541, %v1087
  %1089 = vdwg.mxu0
  %1090 = vmatpush.bf16.msra.mxu0 0
  %1091 = vmatpush.bf16.msra.mxu0 0
  %1092 = vmatpush.bf16.msra.mxu0 0
  %1093 = vmatpush.bf16.msra.mxu0 0
  %1094 = vmatpush.bf16.msra.mxu0 %v968
  %1095 = vmatpush.bf16.msra.mxu0 %v952
  %1096 = vmatpush.bf16.msra.mxu0 %v936
  %1097 = vmatpush.bf16.msra.mxu0 %v920
  %1098 = vmatmul.bf16.gmra.mxu0 %v1046
  %v1099 = vpop.f32.mrf.mxu0
  %v1100 = vadd.f32 %v553, %v1099
  %v1101 = vpop.f32.mrf.mxu0
  %v1102 = vadd.f32 %v555, %v1101
  %1103 = vdwg.mxu0
  %1104 = vmatpush.bf16.msra.mxu0 0
  %1105 = vmatpush.bf16.msra.mxu0 0
  %1106 = vmatpush.bf16.msra.mxu0 0
  %1107 = vmatpush.bf16.msra.mxu0 0
  %1108 = vmatpush.bf16.msra.mxu0 %v969
  %1109 = vmatpush.bf16.msra.mxu0 %v953
  %1110 = vmatpush.bf16.msra.mxu0 %v937
  %1111 = vmatpush.bf16.msra.mxu0 %v921
  %1112 = vmatmul.bf16.gmra.mxu0 %v1046
  %v1113 = vpop.f32.mrf.mxu0
  %v1114 = vadd.f32 %v567, %v1113
  %v1115 = vpop.f32.mrf.mxu0
  %v1116 = vadd.f32 %v569, %v1115
  %1117 = vdwg.mxu0
  %1118 = vmatpush.bf16.msra.mxu0 0
  %1119 = vmatpush.bf16.msra.mxu0 0
  %1120 = vmatpush.bf16.msra.mxu0 0
  %1121 = vmatpush.bf16.msra.mxu0 0
  %1122 = vmatpush.bf16.msra.mxu0 %v970
  %1123 = vmatpush.bf16.msra.mxu0 %v954
  %1124 = vmatpush.bf16.msra.mxu0 %v938
  %1125 = vmatpush.bf16.msra.mxu0 %v922
  %1126 = vmatmul.bf16.gmra.mxu0 %v1046
  %v1127 = vpop.f32.mrf.mxu0
  %v1128 = vadd.f32 %v581, %v1127
  %v1129 = vpop.f32.mrf.mxu0
  %v1130 = vadd.f32 %v583, %v1129
  %1131 = vdwg.mxu0
  %1132 = vmatpush.bf16.msra.mxu0 0
  %1133 = vmatpush.bf16.msra.mxu0 0
  %1134 = vmatpush.bf16.msra.mxu0 0
  %1135 = vmatpush.bf16.msra.mxu0 0
  %1136 = vmatpush.bf16.msra.mxu0 %v971
  %1137 = vmatpush.bf16.msra.mxu0 %v955
  %1138 = vmatpush.bf16.msra.mxu0 %v939
  %1139 = vmatpush.bf16.msra.mxu0 %v923
  %1140 = vmatmul.bf16.gmra.mxu0 %v1046
  %v1141 = vpop.f32.mrf.mxu0
  %v1142 = vadd.f32 %v595, %v1141
  %v1143 = vpop.f32.mrf.mxu0
  %v1144 = vadd.f32 %v597, %v1143
  %1145 = vdwg.mxu0
  %1146 = vmatpush.bf16.msra.mxu0 0
  %1147 = vmatpush.bf16.msra.mxu0 0
  %1148 = vmatpush.bf16.msra.mxu0 0
  %1149 = vmatpush.bf16.msra.mxu0 0
  %1150 = vmatpush.bf16.msra.mxu0 %v972
  %1151 = vmatpush.bf16.msra.mxu0 %v956
  %1152 = vmatpush.bf16.msra.mxu0 %v940
  %1153 = vmatpush.bf16.msra.mxu0 %v924
  %1154 = vmatmul.bf16.gmra.mxu0 %v1046
  %v1155 = vpop.f32.mrf.mxu0
  %v1156 = vadd.f32 %v609, %v1155
  %v1157 = vpop.f32.mrf.mxu0
  %v1158 = vadd.f32 %v611, %v1157
  %1159 = vdwg.mxu0
  %1160 = vmatpush.bf16.msra.mxu0 0
  %1161 = vmatpush.bf16.msra.mxu0 0
  %1162 = vmatpush.bf16.msra.mxu0 0
  %1163 = vmatpush.bf16.msra.mxu0 0
  %1164 = vmatpush.bf16.msra.mxu0 %v973
  %1165 = vmatpush.bf16.msra.mxu0 %v957
  %1166 = vmatpush.bf16.msra.mxu0 %v941
  %1167 = vmatpush.bf16.msra.mxu0 %v925
  %1168 = vmatmul.bf16.gmra.mxu0 %v1046
  %v1169 = vpop.f32.mrf.mxu0
  %v1170 = vadd.f32 %v623, %v1169
  %v1171 = vpop.f32.mrf.mxu0
  %v1172 = vadd.f32 %v625, %v1171
  %1173 = vdwg.mxu0
  %1174 = vmatpush.bf16.msra.mxu0 0
  %1175 = vmatpush.bf16.msra.mxu0 0
  %1176 = vmatpush.bf16.msra.mxu0 0
  %1177 = vmatpush.bf16.msra.mxu0 0
  %1178 = vmatpush.bf16.msra.mxu0 %v974
  %1179 = vmatpush.bf16.msra.mxu0 %v958
  %1180 = vmatpush.bf16.msra.mxu0 %v942
  %1181 = vmatpush.bf16.msra.mxu0 %v926
  %1182 = vmatmul.bf16.gmra.mxu0 %v1046
  %v1183 = vpop.f32.mrf.mxu0
  %v1184 = vadd.f32 %v637, %v1183
  %v1185 = vpop.f32.mrf.mxu0
  %v1186 = vadd.f32 %v639, %v1185
  %1187 = vdwg.mxu0
  %1188 = vmatpush.bf16.msra.mxu0 0
  %1189 = vmatpush.bf16.msra.mxu0 0
  %1190 = vmatpush.bf16.msra.mxu0 0
  %1191 = vmatpush.bf16.msra.mxu0 0
  %1192 = vmatpush.bf16.msra.mxu0 %v975
  %1193 = vmatpush.bf16.msra.mxu0 %v959
  %1194 = vmatpush.bf16.msra.mxu0 %v943
  %1195 = vmatpush.bf16.msra.mxu0 %v927
  %1196 = vmatmul.bf16.gmra.mxu0 %v1046
  %v1197 = vpop.f32.mrf.mxu0
  %v1198 = vadd.f32 %v651, %v1197
  %v1199 = vpop.f32.mrf.mxu0
  %v1200 = vadd.f32 %v653, %v1199
  %1201 = vdwg.mxu0
  %1202 = vmatpush.bf16.msra.mxu0 0
  %1203 = vmatpush.bf16.msra.mxu0 0
  %1204 = vmatpush.bf16.msra.mxu0 0
  %1205 = vmatpush.bf16.msra.mxu0 0
  %1206 = vmatpush.bf16.msra.mxu0 %v976
  %1207 = vmatpush.bf16.msra.mxu0 %v960
  %1208 = vmatpush.bf16.msra.mxu0 %v944
  %1209 = vmatpush.bf16.msra.mxu0 %v928
  %1210 = vmatmul.bf16.gmra.mxu0 %v1046
  %v1211 = vpop.f32.mrf.mxu0
  %v1212 = vadd.f32 %v665, %v1211
  %v1213 = vpop.f32.mrf.mxu0
  %v1214 = vadd.f32 %v667, %v1213
  %1215 = vdwg.mxu0
  %1216 = vmatpush.bf16.msra.mxu0 0
  %1217 = vmatpush.bf16.msra.mxu0 0
  %1218 = vmatpush.bf16.msra.mxu0 0
  %1219 = vmatpush.bf16.msra.mxu0 0
  %1220 = vmatpush.bf16.msra.mxu0 %v977
  %1221 = vmatpush.bf16.msra.mxu0 %v961
  %1222 = vmatpush.bf16.msra.mxu0 %v945
  %1223 = vmatpush.bf16.msra.mxu0 %v929
  %1224 = vmatmul.bf16.gmra.mxu0 %v1046
  %v1225 = vpop.f32.mrf.mxu0
  %v1226 = vadd.f32 %v679, %v1225
  %v1227 = vpop.f32.mrf.mxu0
  %v1228 = vadd.f32 %v681, %v1227
  %1229 = vdwg.mxu0
  %1230 = vmatpush.bf16.msra.mxu0 0
  %1231 = vmatpush.bf16.msra.mxu0 0
  %1232 = vmatpush.bf16.msra.mxu0 0
  %1233 = vmatpush.bf16.msra.mxu0 0
  %1234 = vmatpush.bf16.msra.mxu0 %v978
  %1235 = vmatpush.bf16.msra.mxu0 %v962
  %1236 = vmatpush.bf16.msra.mxu0 %v946
  %1237 = vmatpush.bf16.msra.mxu0 %v930
  %1238 = vmatmul.bf16.gmra.mxu0 %v1046
  %v1239 = vpop.f32.mrf.mxu0
  %v1240 = vadd.f32 %v693, %v1239
  %v1241 = vpop.f32.mrf.mxu0
  %v1242 = vadd.f32 %v695, %v1241
  %1243 = vdwg.mxu0
  %1244 = vmatpush.bf16.msra.mxu0 0
  %1245 = vmatpush.bf16.msra.mxu0 0
  %1246 = vmatpush.bf16.msra.mxu0 0
  %1247 = vmatpush.bf16.msra.mxu0 0
  %1248 = vmatpush.bf16.msra.mxu0 %v979
  %1249 = vmatpush.bf16.msra.mxu0 %v963
  %1250 = vmatpush.bf16.msra.mxu0 %v947
  %1251 = vmatpush.bf16.msra.mxu0 %v931
  %1252 = vmatmul.bf16.gmra.mxu0 %v1046
  %v1253 = vpop.f32.mrf.mxu0
  %v1254 = vadd.f32 %v707, %v1253
  %v1255 = vpop.f32.mrf.mxu0
  %v1256 = vadd.f32 %v709, %v1255
  %1257 = vdwg.mxu0
  %1258 = vmatpush.bf16.msra.mxu0 0
  %1259 = vmatpush.bf16.msra.mxu0 0
  %1260 = vmatpush.bf16.msra.mxu0 0
  %1261 = vmatpush.bf16.msra.mxu0 0
  %1262 = vmatpush.bf16.msra.mxu0 %v980
  %1263 = vmatpush.bf16.msra.mxu0 %v964
  %1264 = vmatpush.bf16.msra.mxu0 %v948
  %1265 = vmatpush.bf16.msra.mxu0 %v932
  %1266 = vmatmul.bf16.gmra.mxu0 %v1046
  %v1267 = vpop.f32.mrf.mxu0
  %v1268 = vadd.f32 %v721, %v1267
  %v1269 = vpop.f32.mrf.mxu0
  %v1270 = vadd.f32 %v723, %v1269
  %1271 = vdwg.mxu0
  %v1272 = vpack.c.bf16 %v1060, %v1058
  %v1273 = vpack.c.bf16 %v1074, %v1072
  %v1274 = vpack.c.bf16 %v1088, %v1086
  %v1275 = vpack.c.bf16 %v1102, %v1100
  %v1276 = vpack.c.bf16 %v1116, %v1114
  %v1277 = vpack.c.bf16 %v1130, %v1128
  %v1278 = vpack.c.bf16 %v1144, %v1142
  %v1279 = vpack.c.bf16 %v1158, %v1156
  %v1280 = vpack.c.bf16 %v1172, %v1170
  %v1281 = vpack.c.bf16 %v1186, %v1184
  %v1282 = vpack.c.bf16 %v1200, %v1198
  %v1283 = vpack.c.bf16 %v1214, %v1212
  %v1284 = vpack.c.bf16 %v1228, %v1226
  %v1285 = vpack.c.bf16 %v1242, %v1240
  %v1286 = vpack.c.bf16 %v1256, %v1254
  %v1287 = vpack.c.bf16 %v1270, %v1268
  %v1288 = vld [vmem:[%s2] sm:$0xff]
  %v1289 = vld [vmem:[%s2 + $0x8] sm:$0xff]
  %v1290 = vld [vmem:[%s2 + $0x10] sm:$0xff]
  %v1291 = vld [vmem:[%s2 + $0x18] sm:$0xff]
  %v1292 = vld [vmem:[%s2 + $0x20] sm:$0xff]
  %v1293 = vld [vmem:[%s2 + $0x28] sm:$0xff]
  %v1294 = vld [vmem:[%s2 + $0x30] sm:$0xff]
  %v1295 = vld [vmem:[%s2 + $0x38] sm:$0xff]
  %v1296 = vld [vmem:[%s2 + $0x40] sm:$0xff]
  %v1297 = vld [vmem:[%s2 + $0x48] sm:$0xff]
  %v1298 = vld [vmem:[%s2 + $0x50] sm:$0xff]
  %v1299 = vld [vmem:[%s2 + $0x58] sm:$0xff]
  %v1300 = vld [vmem:[%s2 + $0x60] sm:$0xff]
  %v1301 = vld [vmem:[%s2 + $0x68] sm:$0xff]
  %v1302 = vld [vmem:[%s2 + $0x70] sm:$0xff]
  %v1303 = vld [vmem:[%s2 + $0x78] sm:$0xff]
  %v1304 = vld [vmem:[%s2 + $0x80] sm:$0xff]
  %v1305 = vld [vmem:[%s2 + $0x88] sm:$0xff]
  %v1306 = vld [vmem:[%s2 + $0x90] sm:$0xff]
  %v1307 = vld [vmem:[%s2 + $0x98] sm:$0xff]
  %v1308 = vld [vmem:[%s2 + $0xa0] sm:$0xff]
  %v1309 = vld [vmem:[%s2 + $0xa8] sm:$0xff]
  %v1310 = vld [vmem:[%s2 + $0xb0] sm:$0xff]
  %v1311 = vld [vmem:[%s2 + $0xb8] sm:$0xff]
  %v1312 = vld [vmem:[%s2 + $0xc0] sm:$0xff]
  %v1313 = vld [vmem:[%s2 + $0xc8] sm:$0xff]
  %v1314 = vld [vmem:[%s2 + $0xd0] sm:$0xff]
  %v1315 = vld [vmem:[%s2 + $0xd8] sm:$0xff]
  %v1316 = vld [vmem:[%s2 + $0xe0] sm:$0xff]
  %v1317 = vld [vmem:[%s2 + $0xe8] sm:$0xff]
  %v1318 = vld [vmem:[%s2 + $0xf0] sm:$0xff]
  %v1319 = vld [vmem:[%s2 + $0xf8] sm:$0xff]
  %v1320 = vld [vmem:[%s2 + $0x100] sm:$0xff]
  %v1321 = vld [vmem:[%s2 + $0x108] sm:$0xff]
  %v1322 = vld [vmem:[%s2 + $0x110] sm:$0xff]
  %v1323 = vld [vmem:[%s2 + $0x118] sm:$0xff]
  %v1324 = vld [vmem:[%s2 + $0x120] sm:$0xff]
  %v1325 = vld [vmem:[%s2 + $0x128] sm:$0xff]
  %v1326 = vld [vmem:[%s2 + $0x130] sm:$0xff]
  %v1327 = vld [vmem:[%s2 + $0x138] sm:$0xff]
  %v1328 = vld [vmem:[%s2 + $0x140] sm:$0xff]
  %v1329 = vld [vmem:[%s2 + $0x148] sm:$0xff]
  %v1330 = vld [vmem:[%s2 + $0x150] sm:$0xff]
  %v1331 = vld [vmem:[%s2 + $0x158] sm:$0xff]
  %v1332 = vld [vmem:[%s2 + $0x160] sm:$0xff]
  %v1333 = vld [vmem:[%s2 + $0x168] sm:$0xff]
  %v1334 = vld [vmem:[%s2 + $0x170] sm:$0xff]
  %v1335 = vld [vmem:[%s2 + $0x178] sm:$0xff]
  %v1336 = vld [vmem:[%s2 + $0x180] sm:$0xff]
  %v1337 = vld [vmem:[%s2 + $0x188] sm:$0xff]
  %v1338 = vld [vmem:[%s2 + $0x190] sm:$0xff]
  %v1339 = vld [vmem:[%s2 + $0x198] sm:$0xff]
  %v1340 = vld [vmem:[%s2 + $0x1a0] sm:$0xff]
  %v1341 = vld [vmem:[%s2 + $0x1a8] sm:$0xff]
  %v1342 = vld [vmem:[%s2 + $0x1b0] sm:$0xff]
  %v1343 = vld [vmem:[%s2 + $0x1b8] sm:$0xff]
  %v1344 = vld [vmem:[%s2 + $0x1c0] sm:$0xff]
  %v1345 = vld [vmem:[%s2 + $0x1c8] sm:$0xff]
  %v1346 = vld [vmem:[%s2 + $0x1d0] sm:$0xff]
  %v1347 = vld [vmem:[%s2 + $0x1d8] sm:$0xff]
  %v1348 = vld [vmem:[%s2 + $0x1e0] sm:$0xff]
  %v1349 = vld [vmem:[%s2 + $0x1e8] sm:$0xff]
  %v1350 = vld [vmem:[%s2 + $0x1f0] sm:$0xff]
  %v1351 = vld [vmem:[%s2 + $0x1f8] sm:$0xff]
  %v1352 = vld [vmem:[%s2 + $0x200] sm:$0xff]
  %v1353 = vld [vmem:[%s2 + $0x208] sm:$0xff]
  %v1354 = vld [vmem:[%s2 + $0x210] sm:$0xff]
  %v1355 = vld [vmem:[%s2 + $0x218] sm:$0xff]
  %v1356 = vld [vmem:[%s2 + $0x220] sm:$0xff]
  %v1357 = vld [vmem:[%s2 + $0x228] sm:$0xff]
  %v1358 = vld [vmem:[%s2 + $0x230] sm:$0xff]
  %v1359 = vld [vmem:[%s2 + $0x238] sm:$0xff]
  %v1360 = vld [vmem:[%s2 + $0x240] sm:$0xff]
  %v1361 = vld [vmem:[%s2 + $0x248] sm:$0xff]
  %v1362 = vld [vmem:[%s2 + $0x250] sm:$0xff]
  %v1363 = vld [vmem:[%s2 + $0x258] sm:$0xff]
  %v1364 = vld [vmem:[%s2 + $0x260] sm:$0xff]
  %v1365 = vld [vmem:[%s2 + $0x268] sm:$0xff]
  %v1366 = vld [vmem:[%s2 + $0x270] sm:$0xff]
  %v1367 = vld [vmem:[%s2 + $0x278] sm:$0xff]
  %v1368 = vld [vmem:[%s2 + $0x280] sm:$0xff]
  %v1369 = vld [vmem:[%s2 + $0x288] sm:$0xff]
  %v1370 = vld [vmem:[%s2 + $0x290] sm:$0xff]
  %v1371 = vld [vmem:[%s2 + $0x298] sm:$0xff]
  %v1372 = vld [vmem:[%s2 + $0x2a0] sm:$0xff]
  %v1373 = vld [vmem:[%s2 + $0x2a8] sm:$0xff]
  %v1374 = vld [vmem:[%s2 + $0x2b0] sm:$0xff]
  %v1375 = vld [vmem:[%s2 + $0x2b8] sm:$0xff]
  %v1376 = vld [vmem:[%s2 + $0x2c0] sm:$0xff]
  %v1377 = vld [vmem:[%s2 + $0x2c8] sm:$0xff]
  %v1378 = vld [vmem:[%s2 + $0x2d0] sm:$0xff]
  %v1379 = vld [vmem:[%s2 + $0x2d8] sm:$0xff]
  %v1380 = vld [vmem:[%s2 + $0x2e0] sm:$0xff]
  %v1381 = vld [vmem:[%s2 + $0x2e8] sm:$0xff]
  %v1382 = vld [vmem:[%s2 + $0x2f0] sm:$0xff]
  %v1383 = vld [vmem:[%s2 + $0x2f8] sm:$0xff]
  %v1384 = vld [vmem:[%s2 + $0x300] sm:$0xff]
  %v1385 = vld [vmem:[%s2 + $0x308] sm:$0xff]
  %v1386 = vld [vmem:[%s2 + $0x310] sm:$0xff]
  %v1387 = vld [vmem:[%s2 + $0x318] sm:$0xff]
  %v1388 = vld [vmem:[%s2 + $0x320] sm:$0xff]
  %v1389 = vld [vmem:[%s2 + $0x328] sm:$0xff]
  %v1390 = vld [vmem:[%s2 + $0x330] sm:$0xff]
  %v1391 = vld [vmem:[%s2 + $0x338] sm:$0xff]
  %v1392 = vld [vmem:[%s2 + $0x340] sm:$0xff]
  %v1393 = vld [vmem:[%s2 + $0x348] sm:$0xff]
  %v1394 = vld [vmem:[%s2 + $0x350] sm:$0xff]
  %v1395 = vld [vmem:[%s2 + $0x358] sm:$0xff]
  %v1396 = vld [vmem:[%s2 + $0x360] sm:$0xff]
  %v1397 = vld [vmem:[%s2 + $0x368] sm:$0xff]
  %v1398 = vld [vmem:[%s2 + $0x370] sm:$0xff]
  %v1399 = vld [vmem:[%s2 + $0x378] sm:$0xff]
  %v1400 = vld [vmem:[%s2 + $0x380] sm:$0xff]
  %v1401 = vld [vmem:[%s2 + $0x388] sm:$0xff]
  %v1402 = vld [vmem:[%s2 + $0x390] sm:$0xff]
  %v1403 = vld [vmem:[%s2 + $0x398] sm:$0xff]
  %v1404 = vld [vmem:[%s2 + $0x3a0] sm:$0xff]
  %v1405 = vld [vmem:[%s2 + $0x3a8] sm:$0xff]
  %v1406 = vld [vmem:[%s2 + $0x3b0] sm:$0xff]
  %v1407 = vld [vmem:[%s2 + $0x3b8] sm:$0xff]
  %v1408 = vld [vmem:[%s2 + $0x3c0] sm:$0xff]
  %v1409 = vld [vmem:[%s2 + $0x3c8] sm:$0xff]
  %v1410 = vld [vmem:[%s2 + $0x3d0] sm:$0xff]
  %v1411 = vld [vmem:[%s2 + $0x3d8] sm:$0xff]
  %v1412 = vld [vmem:[%s2 + $0x3e0] sm:$0xff]
  %v1413 = vld [vmem:[%s2 + $0x3e8] sm:$0xff]
  %v1414 = vld [vmem:[%s2 + $0x3f0] sm:$0xff]
  %v1415 = vld [vmem:[%s2 + $0x3f8] sm:$0xff]
  %v1416 = vld [vmem:[%s2 + $0x400] sm:$0xff]
  %v1417 = vld [vmem:[%s2 + $0x408] sm:$0xff]
  %v1418 = vld [vmem:[%s2 + $0x410] sm:$0xff]
  %v1419 = vld [vmem:[%s2 + $0x418] sm:$0xff]
  %v1420 = vld [vmem:[%s2 + $0x420] sm:$0xff]
  %v1421 = vld [vmem:[%s2 + $0x428] sm:$0xff]
  %v1422 = vld [vmem:[%s2 + $0x430] sm:$0xff]
  %v1423 = vld [vmem:[%s2 + $0x438] sm:$0xff]
  %v1424 = vld [vmem:[%s2 + $0x440] sm:$0xff]
  %v1425 = vld [vmem:[%s2 + $0x448] sm:$0xff]
  %v1426 = vld [vmem:[%s2 + $0x450] sm:$0xff]
  %v1427 = vld [vmem:[%s2 + $0x458] sm:$0xff]
  %v1428 = vld [vmem:[%s2 + $0x460] sm:$0xff]
  %v1429 = vld [vmem:[%s2 + $0x468] sm:$0xff]
  %v1430 = vld [vmem:[%s2 + $0x470] sm:$0xff]
  %v1431 = vld [vmem:[%s2 + $0x478] sm:$0xff]
  %v1432 = vld [vmem:[%s2 + $0x480] sm:$0xff]
  %v1433 = vld [vmem:[%s2 + $0x488] sm:$0xff]
  %v1434 = vld [vmem:[%s2 + $0x490] sm:$0xff]
  %v1435 = vld [vmem:[%s2 + $0x498] sm:$0xff]
  %v1436 = vld [vmem:[%s2 + $0x4a0] sm:$0xff]
  %v1437 = vld [vmem:[%s2 + $0x4a8] sm:$0xff]
  %v1438 = vld [vmem:[%s2 + $0x4b0] sm:$0xff]
  %v1439 = vld [vmem:[%s2 + $0x4b8] sm:$0xff]
  %v1440 = vld [vmem:[%s2 + $0x4c0] sm:$0xff]
  %v1441 = vld [vmem:[%s2 + $0x4c8] sm:$0xff]
  %v1442 = vld [vmem:[%s2 + $0x4d0] sm:$0xff]
  %v1443 = vld [vmem:[%s2 + $0x4d8] sm:$0xff]
  %v1444 = vld [vmem:[%s2 + $0x4e0] sm:$0xff]
  %v1445 = vld [vmem:[%s2 + $0x4e8] sm:$0xff]
  %v1446 = vld [vmem:[%s2 + $0x4f0] sm:$0xff]
  %v1447 = vld [vmem:[%s2 + $0x4f8] sm:$0xff]
  %v1448 = vld [vmem:[%s2 + $0x500] sm:$0xff]
  %v1449 = vld [vmem:[%s2 + $0x508] sm:$0xff]
  %v1450 = vld [vmem:[%s2 + $0x510] sm:$0xff]
  %v1451 = vld [vmem:[%s2 + $0x518] sm:$0xff]
  %v1452 = vld [vmem:[%s2 + $0x520] sm:$0xff]
  %v1453 = vld [vmem:[%s2 + $0x528] sm:$0xff]
  %v1454 = vld [vmem:[%s2 + $0x530] sm:$0xff]
  %v1455 = vld [vmem:[%s2 + $0x538] sm:$0xff]
  %v1456 = vld [vmem:[%s2 + $0x540] sm:$0xff]
  %v1457 = vld [vmem:[%s2 + $0x548] sm:$0xff]
  %v1458 = vld [vmem:[%s2 + $0x550] sm:$0xff]
  %v1459 = vld [vmem:[%s2 + $0x558] sm:$0xff]
  %v1460 = vld [vmem:[%s2 + $0x560] sm:$0xff]
  %v1461 = vld [vmem:[%s2 + $0x568] sm:$0xff]
  %v1462 = vld [vmem:[%s2 + $0x570] sm:$0xff]
  %v1463 = vld [vmem:[%s2 + $0x578] sm:$0xff]
  %v1464 = vld [vmem:[%s2 + $0x580] sm:$0xff]
  %v1465 = vld [vmem:[%s2 + $0x588] sm:$0xff]
  %v1466 = vld [vmem:[%s2 + $0x590] sm:$0xff]
  %v1467 = vld [vmem:[%s2 + $0x598] sm:$0xff]
  %v1468 = vld [vmem:[%s2 + $0x5a0] sm:$0xff]
  %v1469 = vld [vmem:[%s2 + $0x5a8] sm:$0xff]
  %v1470 = vld [vmem:[%s2 + $0x5b0] sm:$0xff]
  %v1471 = vld [vmem:[%s2 + $0x5b8] sm:$0xff]
  %v1472 = vld [vmem:[%s2 + $0x5c0] sm:$0xff]
  %v1473 = vld [vmem:[%s2 + $0x5c8] sm:$0xff]
  %v1474 = vld [vmem:[%s2 + $0x5d0] sm:$0xff]
  %v1475 = vld [vmem:[%s2 + $0x5d8] sm:$0xff]
  %v1476 = vld [vmem:[%s2 + $0x5e0] sm:$0xff]
  %v1477 = vld [vmem:[%s2 + $0x5e8] sm:$0xff]
  %v1478 = vld [vmem:[%s2 + $0x5f0] sm:$0xff]
  %v1479 = vld [vmem:[%s2 + $0x5f8] sm:$0xff]
  %v1480 = vld [vmem:[%s2 + $0x600] sm:$0xff]
  %v1481 = vld [vmem:[%s2 + $0x608] sm:$0xff]
  %v1482 = vld [vmem:[%s2 + $0x610] sm:$0xff]
  %v1483 = vld [vmem:[%s2 + $0x618] sm:$0xff]
  %v1484 = vld [vmem:[%s2 + $0x620] sm:$0xff]
  %v1485 = vld [vmem:[%s2 + $0x628] sm:$0xff]
  %v1486 = vld [vmem:[%s2 + $0x630] sm:$0xff]
  %v1487 = vld [vmem:[%s2 + $0x638] sm:$0xff]
  %v1488 = vld [vmem:[%s2 + $0x640] sm:$0xff]
  %v1489 = vld [vmem:[%s2 + $0x648] sm:$0xff]
  %v1490 = vld [vmem:[%s2 + $0x650] sm:$0xff]
  %v1491 = vld [vmem:[%s2 + $0x658] sm:$0xff]
  %v1492 = vld [vmem:[%s2 + $0x660] sm:$0xff]
  %v1493 = vld [vmem:[%s2 + $0x668] sm:$0xff]
  %v1494 = vld [vmem:[%s2 + $0x670] sm:$0xff]
  %v1495 = vld [vmem:[%s2 + $0x678] sm:$0xff]
  %v1496 = vld [vmem:[%s2 + $0x680] sm:$0xff]
  %v1497 = vld [vmem:[%s2 + $0x688] sm:$0xff]
  %v1498 = vld [vmem:[%s2 + $0x690] sm:$0xff]
  %v1499 = vld [vmem:[%s2 + $0x698] sm:$0xff]
  %v1500 = vld [vmem:[%s2 + $0x6a0] sm:$0xff]
  %v1501 = vld [vmem:[%s2 + $0x6a8] sm:$0xff]
  %v1502 = vld [vmem:[%s2 + $0x6b0] sm:$0xff]
  %v1503 = vld [vmem:[%s2 + $0x6b8] sm:$0xff]
  %v1504 = vld [vmem:[%s2 + $0x6c0] sm:$0xff]
  %v1505 = vld [vmem:[%s2 + $0x6c8] sm:$0xff]
  %v1506 = vld [vmem:[%s2 + $0x6d0] sm:$0xff]
  %v1507 = vld [vmem:[%s2 + $0x6d8] sm:$0xff]
  %v1508 = vld [vmem:[%s2 + $0x6e0] sm:$0xff]
  %v1509 = vld [vmem:[%s2 + $0x6e8] sm:$0xff]
  %v1510 = vld [vmem:[%s2 + $0x6f0] sm:$0xff]
  %v1511 = vld [vmem:[%s2 + $0x6f8] sm:$0xff]
  %v1512 = vld [vmem:[%s2 + $0x700] sm:$0xff]
  %v1513 = vld [vmem:[%s2 + $0x708] sm:$0xff]
  %v1514 = vld [vmem:[%s2 + $0x710] sm:$0xff]
  %v1515 = vld [vmem:[%s2 + $0x718] sm:$0xff]
  %v1516 = vld [vmem:[%s2 + $0x720] sm:$0xff]
  %v1517 = vld [vmem:[%s2 + $0x728] sm:$0xff]
  %v1518 = vld [vmem:[%s2 + $0x730] sm:$0xff]
  %v1519 = vld [vmem:[%s2 + $0x738] sm:$0xff]
  %v1520 = vld [vmem:[%s2 + $0x740] sm:$0xff]
  %v1521 = vld [vmem:[%s2 + $0x748] sm:$0xff]
  %v1522 = vld [vmem:[%s2 + $0x750] sm:$0xff]
  %v1523 = vld [vmem:[%s2 + $0x758] sm:$0xff]
  %v1524 = vld [vmem:[%s2 + $0x760] sm:$0xff]
  %v1525 = vld [vmem:[%s2 + $0x768] sm:$0xff]
  %v1526 = vld [vmem:[%s2 + $0x770] sm:$0xff]
  %v1527 = vld [vmem:[%s2 + $0x778] sm:$0xff]
  %v1528 = vld [vmem:[%s2 + $0x780] sm:$0xff]
  %v1529 = vld [vmem:[%s2 + $0x788] sm:$0xff]
  %v1530 = vld [vmem:[%s2 + $0x790] sm:$0xff]
  %v1531 = vld [vmem:[%s2 + $0x798] sm:$0xff]
  %v1532 = vld [vmem:[%s2 + $0x7a0] sm:$0xff]
  %v1533 = vld [vmem:[%s2 + $0x7a8] sm:$0xff]
  %v1534 = vld [vmem:[%s2 + $0x7b0] sm:$0xff]
  %v1535 = vld [vmem:[%s2 + $0x7b8] sm:$0xff]
  %v1536 = vld [vmem:[%s2 + $0x7c0] sm:$0xff]
  %v1537 = vld [vmem:[%s2 + $0x7c8] sm:$0xff]
  %v1538 = vld [vmem:[%s2 + $0x7d0] sm:$0xff]
  %v1539 = vld [vmem:[%s2 + $0x7d8] sm:$0xff]
  %v1540 = vld [vmem:[%s2 + $0x7e0] sm:$0xff]
  %v1541 = vld [vmem:[%s2 + $0x7e8] sm:$0xff]
  %v1542 = vld [vmem:[%s2 + $0x7f0] sm:$0xff]
  %v1543 = vld [vmem:[%s2 + $0x7f8] sm:$0xff]
  %v1544 = vld [vmem:[%s2 + $0x800] sm:$0xff]
  %v1545 = vld [vmem:[%s2 + $0x808] sm:$0xff]
  %v1546 = vld [vmem:[%s2 + $0x810] sm:$0xff]
  %v1547 = vld [vmem:[%s2 + $0x818] sm:$0xff]
  %v1548 = vld [vmem:[%s2 + $0x820] sm:$0xff]
  %v1549 = vld [vmem:[%s2 + $0x828] sm:$0xff]
  %v1550 = vld [vmem:[%s2 + $0x830] sm:$0xff]
  %v1551 = vld [vmem:[%s2 + $0x838] sm:$0xff]
  %v1552 = vld [vmem:[%s2 + $0x840] sm:$0xff]
  %v1553 = vld [vmem:[%s2 + $0x848] sm:$0xff]
  %v1554 = vld [vmem:[%s2 + $0x850] sm:$0xff]
  %v1555 = vld [vmem:[%s2 + $0x858] sm:$0xff]
  %v1556 = vld [vmem:[%s2 + $0x860] sm:$0xff]
  %v1557 = vld [vmem:[%s2 + $0x868] sm:$0xff]
  %v1558 = vld [vmem:[%s2 + $0x870] sm:$0xff]
  %v1559 = vld [vmem:[%s2 + $0x878] sm:$0xff]
  %v1560 = vld [vmem:[%s2 + $0x880] sm:$0xff]
  %v1561 = vld [vmem:[%s2 + $0x888] sm:$0xff]
  %v1562 = vld [vmem:[%s2 + $0x890] sm:$0xff]
  %v1563 = vld [vmem:[%s2 + $0x898] sm:$0xff]
  %v1564 = vld [vmem:[%s2 + $0x8a0] sm:$0xff]
  %v1565 = vld [vmem:[%s2 + $0x8a8] sm:$0xff]
  %v1566 = vld [vmem:[%s2 + $0x8b0] sm:$0xff]
  %v1567 = vld [vmem:[%s2 + $0x8b8] sm:$0xff]
  %v1568 = vld [vmem:[%s2 + $0x8c0] sm:$0xff]
  %v1569 = vld [vmem:[%s2 + $0x8c8] sm:$0xff]
  %v1570 = vld [vmem:[%s2 + $0x8d0] sm:$0xff]
  %v1571 = vld [vmem:[%s2 + $0x8d8] sm:$0xff]
  %v1572 = vld [vmem:[%s2 + $0x8e0] sm:$0xff]
  %v1573 = vld [vmem:[%s2 + $0x8e8] sm:$0xff]
  %v1574 = vld [vmem:[%s2 + $0x8f0] sm:$0xff]
  %v1575 = vld [vmem:[%s2 + $0x8f8] sm:$0xff]
  %v1576 = vld [vmem:[%s2 + $0x900] sm:$0xff]
  %v1577 = vld [vmem:[%s2 + $0x908] sm:$0xff]
  %v1578 = vld [vmem:[%s2 + $0x910] sm:$0xff]
  %v1579 = vld [vmem:[%s2 + $0x918] sm:$0xff]
  %v1580 = vld [vmem:[%s2 + $0x920] sm:$0xff]
  %v1581 = vld [vmem:[%s2 + $0x928] sm:$0xff]
  %v1582 = vld [vmem:[%s2 + $0x930] sm:$0xff]
  %v1583 = vld [vmem:[%s2 + $0x938] sm:$0xff]
  %v1584 = vld [vmem:[%s2 + $0x940] sm:$0xff]
  %v1585 = vld [vmem:[%s2 + $0x948] sm:$0xff]
  %v1586 = vld [vmem:[%s2 + $0x950] sm:$0xff]
  %v1587 = vld [vmem:[%s2 + $0x958] sm:$0xff]
  %v1588 = vld [vmem:[%s2 + $0x960] sm:$0xff]
  %v1589 = vld [vmem:[%s2 + $0x968] sm:$0xff]
  %v1590 = vld [vmem:[%s2 + $0x970] sm:$0xff]
  %v1591 = vld [vmem:[%s2 + $0x978] sm:$0xff]
  %v1592 = vld [vmem:[%s2 + $0x980] sm:$0xff]
  %v1593 = vld [vmem:[%s2 + $0x988] sm:$0xff]
  %v1594 = vld [vmem:[%s2 + $0x990] sm:$0xff]
  %v1595 = vld [vmem:[%s2 + $0x998] sm:$0xff]
  %v1596 = vld [vmem:[%s2 + $0x9a0] sm:$0xff]
  %v1597 = vld [vmem:[%s2 + $0x9a8] sm:$0xff]
  %v1598 = vld [vmem:[%s2 + $0x9b0] sm:$0xff]
  %v1599 = vld [vmem:[%s2 + $0x9b8] sm:$0xff]
  %v1600 = vld [vmem:[%s2 + $0x9c0] sm:$0xff]
  %v1601 = vld [vmem:[%s2 + $0x9c8] sm:$0xff]
  %v1602 = vld [vmem:[%s2 + $0x9d0] sm:$0xff]
  %v1603 = vld [vmem:[%s2 + $0x9d8] sm:$0xff]
  %v1604 = vld [vmem:[%s2 + $0x9e0] sm:$0xff]
  %v1605 = vld [vmem:[%s2 + $0x9e8] sm:$0xff]
  %v1606 = vld [vmem:[%s2 + $0x9f0] sm:$0xff]
  %v1607 = vld [vmem:[%s2 + $0x9f8] sm:$0xff]
  %v1608 = vld [vmem:[%s2 + $0xa00] sm:$0xff]
  %v1609 = vld [vmem:[%s2 + $0xa08] sm:$0xff]
  %v1610 = vld [vmem:[%s2 + $0xa10] sm:$0xff]
  %v1611 = vld [vmem:[%s2 + $0xa18] sm:$0xff]
  %v1612 = vld [vmem:[%s2 + $0xa20] sm:$0xff]
  %v1613 = vld [vmem:[%s2 + $0xa28] sm:$0xff]
  %v1614 = vld [vmem:[%s2 + $0xa30] sm:$0xff]
  %v1615 = vld [vmem:[%s2 + $0xa38] sm:$0xff]
  %v1616 = vld [vmem:[%s2 + $0xa40] sm:$0xff]
  %v1617 = vld [vmem:[%s2 + $0xa48] sm:$0xff]
  %v1618 = vld [vmem:[%s2 + $0xa50] sm:$0xff]
  %v1619 = vld [vmem:[%s2 + $0xa58] sm:$0xff]
  %v1620 = vld [vmem:[%s2 + $0xa60] sm:$0xff]
  %v1621 = vld [vmem:[%s2 + $0xa68] sm:$0xff]
  %v1622 = vld [vmem:[%s2 + $0xa70] sm:$0xff]
  %v1623 = vld [vmem:[%s2 + $0xa78] sm:$0xff]
  %v1624 = vld [vmem:[%s2 + $0xa80] sm:$0xff]
  %v1625 = vld [vmem:[%s2 + $0xa88] sm:$0xff]
  %v1626 = vld [vmem:[%s2 + $0xa90] sm:$0xff]
  %v1627 = vld [vmem:[%s2 + $0xa98] sm:$0xff]
  %v1628 = vld [vmem:[%s2 + $0xaa0] sm:$0xff]
  %v1629 = vld [vmem:[%s2 + $0xaa8] sm:$0xff]
  %v1630 = vld [vmem:[%s2 + $0xab0] sm:$0xff]
  %v1631 = vld [vmem:[%s2 + $0xab8] sm:$0xff]
  %v1632 = vld [vmem:[%s2 + $0xac0] sm:$0xff]
  %v1633 = vld [vmem:[%s2 + $0xac8] sm:$0xff]
  %v1634 = vld [vmem:[%s2 + $0xad0] sm:$0xff]
  %v1635 = vld [vmem:[%s2 + $0xad8] sm:$0xff]
  %v1636 = vld [vmem:[%s2 + $0xae0] sm:$0xff]
  %v1637 = vld [vmem:[%s2 + $0xae8] sm:$0xff]
  %v1638 = vld [vmem:[%s2 + $0xaf0] sm:$0xff]
  %v1639 = vld [vmem:[%s2 + $0xaf8] sm:$0xff]
  %v1640 = vld [vmem:[%s2 + $0xb00] sm:$0xff]
  %v1641 = vld [vmem:[%s2 + $0xb08] sm:$0xff]
  %v1642 = vld [vmem:[%s2 + $0xb10] sm:$0xff]
  %v1643 = vld [vmem:[%s2 + $0xb18] sm:$0xff]
  %v1644 = vld [vmem:[%s2 + $0xb20] sm:$0xff]
  %v1645 = vld [vmem:[%s2 + $0xb28] sm:$0xff]
  %v1646 = vld [vmem:[%s2 + $0xb30] sm:$0xff]
  %v1647 = vld [vmem:[%s2 + $0xb38] sm:$0xff]
  %v1648 = vld [vmem:[%s2 + $0xb40] sm:$0xff]
  %v1649 = vld [vmem:[%s2 + $0xb48] sm:$0xff]
  %v1650 = vld [vmem:[%s2 + $0xb50] sm:$0xff]
  %v1651 = vld [vmem:[%s2 + $0xb58] sm:$0xff]
  %v1652 = vld [vmem:[%s2 + $0xb60] sm:$0xff]
  %v1653 = vld [vmem:[%s2 + $0xb68] sm:$0xff]
  %v1654 = vld [vmem:[%s2 + $0xb70] sm:$0xff]
  %v1655 = vld [vmem:[%s2 + $0xb78] sm:$0xff]
  %v1656 = vld [vmem:[%s2 + $0xb80] sm:$0xff]
  %v1657 = vld [vmem:[%s2 + $0xb88] sm:$0xff]
  %v1658 = vld [vmem:[%s2 + $0xb90] sm:$0xff]
  %v1659 = vld [vmem:[%s2 + $0xb98] sm:$0xff]
  %v1660 = vld [vmem:[%s2 + $0xba0] sm:$0xff]
  %v1661 = vld [vmem:[%s2 + $0xba8] sm:$0xff]
  %v1662 = vld [vmem:[%s2 + $0xbb0] sm:$0xff]
  %v1663 = vld [vmem:[%s2 + $0xbb8] sm:$0xff]
  %v1664 = vld [vmem:[%s2 + $0xbc0] sm:$0xff]
  %v1665 = vld [vmem:[%s2 + $0xbc8] sm:$0xff]
  %v1666 = vld [vmem:[%s2 + $0xbd0] sm:$0xff]
  %v1667 = vld [vmem:[%s2 + $0xbd8] sm:$0xff]
  %v1668 = vld [vmem:[%s2 + $0xbe0] sm:$0xff]
  %v1669 = vld [vmem:[%s2 + $0xbe8] sm:$0xff]
  %v1670 = vld [vmem:[%s2 + $0xbf0] sm:$0xff]
  %v1671 = vld [vmem:[%s2 + $0xbf8] sm:$0xff]
  %v1672 = vld [vmem:[%s2 + $0xc00] sm:$0xff]
  %v1673 = vld [vmem:[%s2 + $0xc08] sm:$0xff]
  %v1674 = vld [vmem:[%s2 + $0xc10] sm:$0xff]
  %v1675 = vld [vmem:[%s2 + $0xc18] sm:$0xff]
  %v1676 = vld [vmem:[%s2 + $0xc20] sm:$0xff]
  %v1677 = vld [vmem:[%s2 + $0xc28] sm:$0xff]
  %v1678 = vld [vmem:[%s2 + $0xc30] sm:$0xff]
  %v1679 = vld [vmem:[%s2 + $0xc38] sm:$0xff]
  %v1680 = vld [vmem:[%s2 + $0xc40] sm:$0xff]
  %v1681 = vld [vmem:[%s2 + $0xc48] sm:$0xff]
  %v1682 = vld [vmem:[%s2 + $0xc50] sm:$0xff]
  %v1683 = vld [vmem:[%s2 + $0xc58] sm:$0xff]
  %v1684 = vld [vmem:[%s2 + $0xc60] sm:$0xff]
  %v1685 = vld [vmem:[%s2 + $0xc68] sm:$0xff]
  %v1686 = vld [vmem:[%s2 + $0xc70] sm:$0xff]
  %v1687 = vld [vmem:[%s2 + $0xc78] sm:$0xff]
  %v1688 = vld [vmem:[%s2 + $0xc80] sm:$0xff]
  %v1689 = vld [vmem:[%s2 + $0xc88] sm:$0xff]
  %v1690 = vld [vmem:[%s2 + $0xc90] sm:$0xff]
  %v1691 = vld [vmem:[%s2 + $0xc98] sm:$0xff]
  %v1692 = vld [vmem:[%s2 + $0xca0] sm:$0xff]
  %v1693 = vld [vmem:[%s2 + $0xca8] sm:$0xff]
  %v1694 = vld [vmem:[%s2 + $0xcb0] sm:$0xff]
  %v1695 = vld [vmem:[%s2 + $0xcb8] sm:$0xff]
  %v1696 = vld [vmem:[%s2 + $0xcc0] sm:$0xff]
  %v1697 = vld [vmem:[%s2 + $0xcc8] sm:$0xff]
  %v1698 = vld [vmem:[%s2 + $0xcd0] sm:$0xff]
  %v1699 = vld [vmem:[%s2 + $0xcd8] sm:$0xff]
  %v1700 = vld [vmem:[%s2 + $0xce0] sm:$0xff]
  %v1701 = vld [vmem:[%s2 + $0xce8] sm:$0xff]
  %v1702 = vld [vmem:[%s2 + $0xcf0] sm:$0xff]
  %v1703 = vld [vmem:[%s2 + $0xcf8] sm:$0xff]
  %v1704 = vld [vmem:[%s2 + $0xd00] sm:$0xff]
  %v1705 = vld [vmem:[%s2 + $0xd08] sm:$0xff]
  %v1706 = vld [vmem:[%s2 + $0xd10] sm:$0xff]
  %v1707 = vld [vmem:[%s2 + $0xd18] sm:$0xff]
  %v1708 = vld [vmem:[%s2 + $0xd20] sm:$0xff]
  %v1709 = vld [vmem:[%s2 + $0xd28] sm:$0xff]
  %v1710 = vld [vmem:[%s2 + $0xd30] sm:$0xff]
  %v1711 = vld [vmem:[%s2 + $0xd38] sm:$0xff]
  %v1712 = vld [vmem:[%s2 + $0xd40] sm:$0xff]
  %v1713 = vld [vmem:[%s2 + $0xd48] sm:$0xff]
  %v1714 = vld [vmem:[%s2 + $0xd50] sm:$0xff]
  %v1715 = vld [vmem:[%s2 + $0xd58] sm:$0xff]
  %v1716 = vld [vmem:[%s2 + $0xd60] sm:$0xff]
  %v1717 = vld [vmem:[%s2 + $0xd68] sm:$0xff]
  %v1718 = vld [vmem:[%s2 + $0xd70] sm:$0xff]
  %v1719 = vld [vmem:[%s2 + $0xd78] sm:$0xff]
  %v1720 = vld [vmem:[%s2 + $0xd80] sm:$0xff]
  %v1721 = vld [vmem:[%s2 + $0xd88] sm:$0xff]
  %v1722 = vld [vmem:[%s2 + $0xd90] sm:$0xff]
  %v1723 = vld [vmem:[%s2 + $0xd98] sm:$0xff]
  %v1724 = vld [vmem:[%s2 + $0xda0] sm:$0xff]
  %v1725 = vld [vmem:[%s2 + $0xda8] sm:$0xff]
  %v1726 = vld [vmem:[%s2 + $0xdb0] sm:$0xff]
  %v1727 = vld [vmem:[%s2 + $0xdb8] sm:$0xff]
  %v1728 = vld [vmem:[%s2 + $0xdc0] sm:$0xff]
  %v1729 = vld [vmem:[%s2 + $0xdc8] sm:$0xff]
  %v1730 = vld [vmem:[%s2 + $0xdd0] sm:$0xff]
  %v1731 = vld [vmem:[%s2 + $0xdd8] sm:$0xff]
  %v1732 = vld [vmem:[%s2 + $0xde0] sm:$0xff]
  %v1733 = vld [vmem:[%s2 + $0xde8] sm:$0xff]
  %v1734 = vld [vmem:[%s2 + $0xdf0] sm:$0xff]
  %v1735 = vld [vmem:[%s2 + $0xdf8] sm:$0xff]
  %v1736 = vld [vmem:[%s2 + $0xe00] sm:$0xff]
  %v1737 = vld [vmem:[%s2 + $0xe08] sm:$0xff]
  %v1738 = vld [vmem:[%s2 + $0xe10] sm:$0xff]
  %v1739 = vld [vmem:[%s2 + $0xe18] sm:$0xff]
  %v1740 = vld [vmem:[%s2 + $0xe20] sm:$0xff]
  %v1741 = vld [vmem:[%s2 + $0xe28] sm:$0xff]
  %v1742 = vld [vmem:[%s2 + $0xe30] sm:$0xff]
  %v1743 = vld [vmem:[%s2 + $0xe38] sm:$0xff]
  %v1744 = vld [vmem:[%s2 + $0xe40] sm:$0xff]
  %v1745 = vld [vmem:[%s2 + $0xe48] sm:$0xff]
  %v1746 = vld [vmem:[%s2 + $0xe50] sm:$0xff]
  %v1747 = vld [vmem:[%s2 + $0xe58] sm:$0xff]
  %v1748 = vld [vmem:[%s2 + $0xe60] sm:$0xff]
  %v1749 = vld [vmem:[%s2 + $0xe68] sm:$0xff]
  %v1750 = vld [vmem:[%s2 + $0xe70] sm:$0xff]
  %v1751 = vld [vmem:[%s2 + $0xe78] sm:$0xff]
  %v1752 = vld [vmem:[%s2 + $0xe80] sm:$0xff]
  %v1753 = vld [vmem:[%s2 + $0xe88] sm:$0xff]
  %v1754 = vld [vmem:[%s2 + $0xe90] sm:$0xff]
  %v1755 = vld [vmem:[%s2 + $0xe98] sm:$0xff]
  %v1756 = vld [vmem:[%s2 + $0xea0] sm:$0xff]
  %v1757 = vld [vmem:[%s2 + $0xea8] sm:$0xff]
  %v1758 = vld [vmem:[%s2 + $0xeb0] sm:$0xff]
  %v1759 = vld [vmem:[%s2 + $0xeb8] sm:$0xff]
  %v1760 = vld [vmem:[%s2 + $0xec0] sm:$0xff]
  %v1761 = vld [vmem:[%s2 + $0xec8] sm:$0xff]
  %v1762 = vld [vmem:[%s2 + $0xed0] sm:$0xff]
  %v1763 = vld [vmem:[%s2 + $0xed8] sm:$0xff]
  %v1764 = vld [vmem:[%s2 + $0xee0] sm:$0xff]
  %v1765 = vld [vmem:[%s2 + $0xee8] sm:$0xff]
  %v1766 = vld [vmem:[%s2 + $0xef0] sm:$0xff]
  %v1767 = vld [vmem:[%s2 + $0xef8] sm:$0xff]
  %v1768 = vld [vmem:[%s2 + $0xf00] sm:$0xff]
  %v1769 = vld [vmem:[%s2 + $0xf08] sm:$0xff]
  %v1770 = vld [vmem:[%s2 + $0xf10] sm:$0xff]
  %v1771 = vld [vmem:[%s2 + $0xf18] sm:$0xff]
  %v1772 = vld [vmem:[%s2 + $0xf20] sm:$0xff]
  %v1773 = vld [vmem:[%s2 + $0xf28] sm:$0xff]
  %v1774 = vld [vmem:[%s2 + $0xf30] sm:$0xff]
  %v1775 = vld [vmem:[%s2 + $0xf38] sm:$0xff]
  %v1776 = vld [vmem:[%s2 + $0xf40] sm:$0xff]
  %v1777 = vld [vmem:[%s2 + $0xf48] sm:$0xff]
  %v1778 = vld [vmem:[%s2 + $0xf50] sm:$0xff]
  %v1779 = vld [vmem:[%s2 + $0xf58] sm:$0xff]
  %v1780 = vld [vmem:[%s2 + $0xf60] sm:$0xff]
  %v1781 = vld [vmem:[%s2 + $0xf68] sm:$0xff]
  %v1782 = vld [vmem:[%s2 + $0xf70] sm:$0xff]
  %v1783 = vld [vmem:[%s2 + $0xf78] sm:$0xff]
  %v1784 = vld [vmem:[%s2 + $0xf80] sm:$0xff]
  %v1785 = vld [vmem:[%s2 + $0xf88] sm:$0xff]
  %v1786 = vld [vmem:[%s2 + $0xf90] sm:$0xff]
  %v1787 = vld [vmem:[%s2 + $0xf98] sm:$0xff]
  %v1788 = vld [vmem:[%s2 + $0xfa0] sm:$0xff]
  %v1789 = vld [vmem:[%s2 + $0xfa8] sm:$0xff]
  %v1790 = vld [vmem:[%s2 + $0xfb0] sm:$0xff]
  %v1791 = vld [vmem:[%s2 + $0xfb8] sm:$0xff]
  %v1792 = vld [vmem:[%s2 + $0xfc0] sm:$0xff]
  %v1793 = vld [vmem:[%s2 + $0xfc8] sm:$0xff]
  %v1794 = vld [vmem:[%s2 + $0xfd0] sm:$0xff]
  %v1795 = vld [vmem:[%s2 + $0xfd8] sm:$0xff]
  %v1796 = vld [vmem:[%s2 + $0xfe0] sm:$0xff]
  %v1797 = vld [vmem:[%s2 + $0xfe8] sm:$0xff]
  %v1798 = vld [vmem:[%s2 + $0xff0] sm:$0xff]
  %v1799 = vld [vmem:[%s2 + $0xff8] sm:$0xff]
  %v1800 = vld [vmem:[%s3] sm:$0xf]
  %v1802 = vperm.slane %v1800, 0
  %v1803 = vperm.slane %v1800, 1
  %v1804 = vperm.slane %v1800, 2
  %v1805 = vperm.slane %v1800, 3
  %v2322 = vunpack.c.l.b16 %v1288
  %v2323 = vunpack.c.h.b16 %v1288
  %v2324 = vunpack.c.l.b16 %v1289
  %v2325 = vunpack.c.h.b16 %v1289
  %v2326 = vunpack.c.l.b16 %v1290
  %v2327 = vunpack.c.h.b16 %v1290
  %v2328 = vunpack.c.l.b16 %v1291
  %v2329 = vunpack.c.h.b16 %v1291
  %v2330 = vunpack.c.l.b16 %v1292
  %v2331 = vunpack.c.h.b16 %v1292
  %v2332 = vunpack.c.l.b16 %v1293
  %v2333 = vunpack.c.h.b16 %v1293
  %v2334 = vunpack.c.l.b16 %v1294
  %v2335 = vunpack.c.h.b16 %v1294
  %v2336 = vunpack.c.l.b16 %v1295
  %v2337 = vunpack.c.h.b16 %v1295
  %v2338 = vunpack.c.l.b16 %v1296
  %v2339 = vunpack.c.h.b16 %v1296
  %v2340 = vunpack.c.l.b16 %v1297
  %v2341 = vunpack.c.h.b16 %v1297
  %v2342 = vunpack.c.l.b16 %v1298
  %v2343 = vunpack.c.h.b16 %v1298
  %v2344 = vunpack.c.l.b16 %v1299
  %v2345 = vunpack.c.h.b16 %v1299
  %v2346 = vunpack.c.l.b16 %v1300
  %v2347 = vunpack.c.h.b16 %v1300
  %v2348 = vunpack.c.l.b16 %v1301
  %v2349 = vunpack.c.h.b16 %v1301
  %v2350 = vunpack.c.l.b16 %v1302
  %v2351 = vunpack.c.h.b16 %v1302
  %v2352 = vunpack.c.l.b16 %v1303
  %v2353 = vunpack.c.h.b16 %v1303
  %v2354 = vunpack.c.l.b16 %v1304
  %v2355 = vunpack.c.h.b16 %v1304
  %v2356 = vunpack.c.l.b16 %v1305
  %v2357 = vunpack.c.h.b16 %v1305
  %v2358 = vunpack.c.l.b16 %v1306
  %v2359 = vunpack.c.h.b16 %v1306
  %v2360 = vunpack.c.l.b16 %v1307
  %v2361 = vunpack.c.h.b16 %v1307
  %v2362 = vunpack.c.l.b16 %v1308
  %v2363 = vunpack.c.h.b16 %v1308
  %v2364 = vunpack.c.l.b16 %v1309
  %v2365 = vunpack.c.h.b16 %v1309
  %v2366 = vunpack.c.l.b16 %v1310
  %v2367 = vunpack.c.h.b16 %v1310
  %v2368 = vunpack.c.l.b16 %v1311
  %v2369 = vunpack.c.h.b16 %v1311
  %v2370 = vunpack.c.l.b16 %v1312
  %v2371 = vunpack.c.h.b16 %v1312
  %v2372 = vunpack.c.l.b16 %v1313
  %v2373 = vunpack.c.h.b16 %v1313
  %v2374 = vunpack.c.l.b16 %v1314
  %v2375 = vunpack.c.h.b16 %v1314
  %v2376 = vunpack.c.l.b16 %v1315
  %v2377 = vunpack.c.h.b16 %v1315
  %v2378 = vunpack.c.l.b16 %v1316
  %v2379 = vunpack.c.h.b16 %v1316
  %v2380 = vunpack.c.l.b16 %v1317
  %v2381 = vunpack.c.h.b16 %v1317
  %v2382 = vunpack.c.l.b16 %v1318
  %v2383 = vunpack.c.h.b16 %v1318
  %v2384 = vunpack.c.l.b16 %v1319
  %v2385 = vunpack.c.h.b16 %v1319
  %v2386 = vunpack.c.l.b16 %v1320
  %v2387 = vunpack.c.h.b16 %v1320
  %v2388 = vunpack.c.l.b16 %v1321
  %v2389 = vunpack.c.h.b16 %v1321
  %v2390 = vunpack.c.l.b16 %v1322
  %v2391 = vunpack.c.h.b16 %v1322
  %v2392 = vunpack.c.l.b16 %v1323
  %v2393 = vunpack.c.h.b16 %v1323
  %v2394 = vunpack.c.l.b16 %v1324
  %v2395 = vunpack.c.h.b16 %v1324
  %v2396 = vunpack.c.l.b16 %v1325
  %v2397 = vunpack.c.h.b16 %v1325
  %v2398 = vunpack.c.l.b16 %v1326
  %v2399 = vunpack.c.h.b16 %v1326
  %v2400 = vunpack.c.l.b16 %v1327
  %v2401 = vunpack.c.h.b16 %v1327
  %v2402 = vunpack.c.l.b16 %v1328
  %v2403 = vunpack.c.h.b16 %v1328
  %v2404 = vunpack.c.l.b16 %v1329
  %v2405 = vunpack.c.h.b16 %v1329
  %v2406 = vunpack.c.l.b16 %v1330
  %v2407 = vunpack.c.h.b16 %v1330
  %v2408 = vunpack.c.l.b16 %v1331
  %v2409 = vunpack.c.h.b16 %v1331
  %v2410 = vunpack.c.l.b16 %v1332
  %v2411 = vunpack.c.h.b16 %v1332
  %v2412 = vunpack.c.l.b16 %v1333
  %v2413 = vunpack.c.h.b16 %v1333
  %v2414 = vunpack.c.l.b16 %v1334
  %v2415 = vunpack.c.h.b16 %v1334
  %v2416 = vunpack.c.l.b16 %v1335
  %v2417 = vunpack.c.h.b16 %v1335
  %v2418 = vunpack.c.l.b16 %v1336
  %v2419 = vunpack.c.h.b16 %v1336
  %v2420 = vunpack.c.l.b16 %v1337
  %v2421 = vunpack.c.h.b16 %v1337
  %v2422 = vunpack.c.l.b16 %v1338
  %v2423 = vunpack.c.h.b16 %v1338
  %v2424 = vunpack.c.l.b16 %v1339
  %v2425 = vunpack.c.h.b16 %v1339
  %v2426 = vunpack.c.l.b16 %v1340
  %v2427 = vunpack.c.h.b16 %v1340
  %v2428 = vunpack.c.l.b16 %v1341
  %v2429 = vunpack.c.h.b16 %v1341
  %v2430 = vunpack.c.l.b16 %v1342
  %v2431 = vunpack.c.h.b16 %v1342
  %v2432 = vunpack.c.l.b16 %v1343
  %v2433 = vunpack.c.h.b16 %v1343
  %v2434 = vunpack.c.l.b16 %v1344
  %v2435 = vunpack.c.h.b16 %v1344
  %v2436 = vunpack.c.l.b16 %v1345
  %v2437 = vunpack.c.h.b16 %v1345
  %v2438 = vunpack.c.l.b16 %v1346
  %v2439 = vunpack.c.h.b16 %v1346
  %v2440 = vunpack.c.l.b16 %v1347
  %v2441 = vunpack.c.h.b16 %v1347
  %v2442 = vunpack.c.l.b16 %v1348
  %v2443 = vunpack.c.h.b16 %v1348
  %v2444 = vunpack.c.l.b16 %v1349
  %v2445 = vunpack.c.h.b16 %v1349
  %v2446 = vunpack.c.l.b16 %v1350
  %v2447 = vunpack.c.h.b16 %v1350
  %v2448 = vunpack.c.l.b16 %v1351
  %v2449 = vunpack.c.h.b16 %v1351
  %v2450 = vunpack.c.l.b16 %v1352
  %v2451 = vunpack.c.h.b16 %v1352
  %v2452 = vunpack.c.l.b16 %v1353
  %v2453 = vunpack.c.h.b16 %v1353
  %v2454 = vunpack.c.l.b16 %v1354
  %v2455 = vunpack.c.h.b16 %v1354
  %v2456 = vunpack.c.l.b16 %v1355
  %v2457 = vunpack.c.h.b16 %v1355
  %v2458 = vunpack.c.l.b16 %v1356
  %v2459 = vunpack.c.h.b16 %v1356
  %v2460 = vunpack.c.l.b16 %v1357
  %v2461 = vunpack.c.h.b16 %v1357
  %v2462 = vunpack.c.l.b16 %v1358
  %v2463 = vunpack.c.h.b16 %v1358
  %v2464 = vunpack.c.l.b16 %v1359
  %v2465 = vunpack.c.h.b16 %v1359
  %v2466 = vunpack.c.l.b16 %v1360
  %v2467 = vunpack.c.h.b16 %v1360
  %v2468 = vunpack.c.l.b16 %v1361
  %v2469 = vunpack.c.h.b16 %v1361
  %v2470 = vunpack.c.l.b16 %v1362
  %v2471 = vunpack.c.h.b16 %v1362
  %v2472 = vunpack.c.l.b16 %v1363
  %v2473 = vunpack.c.h.b16 %v1363
  %v2474 = vunpack.c.l.b16 %v1364
  %v2475 = vunpack.c.h.b16 %v1364
  %v2476 = vunpack.c.l.b16 %v1365
  %v2477 = vunpack.c.h.b16 %v1365
  %v2478 = vunpack.c.l.b16 %v1366
  %v2479 = vunpack.c.h.b16 %v1366
  %v2480 = vunpack.c.l.b16 %v1367
  %v2481 = vunpack.c.h.b16 %v1367
  %v2482 = vunpack.c.l.b16 %v1368
  %v2483 = vunpack.c.h.b16 %v1368
  %v2484 = vunpack.c.l.b16 %v1369
  %v2485 = vunpack.c.h.b16 %v1369
  %v2486 = vunpack.c.l.b16 %v1370
  %v2487 = vunpack.c.h.b16 %v1370
  %v2488 = vunpack.c.l.b16 %v1371
  %v2489 = vunpack.c.h.b16 %v1371
  %v2490 = vunpack.c.l.b16 %v1372
  %v2491 = vunpack.c.h.b16 %v1372
  %v2492 = vunpack.c.l.b16 %v1373
  %v2493 = vunpack.c.h.b16 %v1373
  %v2494 = vunpack.c.l.b16 %v1374
  %v2495 = vunpack.c.h.b16 %v1374
  %v2496 = vunpack.c.l.b16 %v1375
  %v2497 = vunpack.c.h.b16 %v1375
  %v2498 = vunpack.c.l.b16 %v1376
  %v2499 = vunpack.c.h.b16 %v1376
  %v2500 = vunpack.c.l.b16 %v1377
  %v2501 = vunpack.c.h.b16 %v1377
  %v2502 = vunpack.c.l.b16 %v1378
  %v2503 = vunpack.c.h.b16 %v1378
  %v2504 = vunpack.c.l.b16 %v1379
  %v2505 = vunpack.c.h.b16 %v1379
  %v2506 = vunpack.c.l.b16 %v1380
  %v2507 = vunpack.c.h.b16 %v1380
  %v2508 = vunpack.c.l.b16 %v1381
  %v2509 = vunpack.c.h.b16 %v1381
  %v2510 = vunpack.c.l.b16 %v1382
  %v2511 = vunpack.c.h.b16 %v1382
  %v2512 = vunpack.c.l.b16 %v1383
  %v2513 = vunpack.c.h.b16 %v1383
  %v2514 = vunpack.c.l.b16 %v1384
  %v2515 = vunpack.c.h.b16 %v1384
  %v2516 = vunpack.c.l.b16 %v1385
  %v2517 = vunpack.c.h.b16 %v1385
  %v2518 = vunpack.c.l.b16 %v1386
  %v2519 = vunpack.c.h.b16 %v1386
  %v2520 = vunpack.c.l.b16 %v1387
  %v2521 = vunpack.c.h.b16 %v1387
  %v2522 = vunpack.c.l.b16 %v1388
  %v2523 = vunpack.c.h.b16 %v1388
  %v2524 = vunpack.c.l.b16 %v1389
  %v2525 = vunpack.c.h.b16 %v1389
  %v2526 = vunpack.c.l.b16 %v1390
  %v2527 = vunpack.c.h.b16 %v1390
  %v2528 = vunpack.c.l.b16 %v1391
  %v2529 = vunpack.c.h.b16 %v1391
  %v2530 = vunpack.c.l.b16 %v1392
  %v2531 = vunpack.c.h.b16 %v1392
  %v2532 = vunpack.c.l.b16 %v1393
  %v2533 = vunpack.c.h.b16 %v1393
  %v2534 = vunpack.c.l.b16 %v1394
  %v2535 = vunpack.c.h.b16 %v1394
  %v2536 = vunpack.c.l.b16 %v1395
  %v2537 = vunpack.c.h.b16 %v1395
  %v2538 = vunpack.c.l.b16 %v1396
  %v2539 = vunpack.c.h.b16 %v1396
  %v2540 = vunpack.c.l.b16 %v1397
  %v2541 = vunpack.c.h.b16 %v1397
  %v2542 = vunpack.c.l.b16 %v1398
  %v2543 = vunpack.c.h.b16 %v1398
  %v2544 = vunpack.c.l.b16 %v1399
  %v2545 = vunpack.c.h.b16 %v1399
  %v2546 = vunpack.c.l.b16 %v1400
  %v2547 = vunpack.c.h.b16 %v1400
  %v2548 = vunpack.c.l.b16 %v1401
  %v2549 = vunpack.c.h.b16 %v1401
  %v2550 = vunpack.c.l.b16 %v1402
  %v2551 = vunpack.c.h.b16 %v1402
  %v2552 = vunpack.c.l.b16 %v1403
  %v2553 = vunpack.c.h.b16 %v1403
  %v2554 = vunpack.c.l.b16 %v1404
  %v2555 = vunpack.c.h.b16 %v1404
  %v2556 = vunpack.c.l.b16 %v1405
  %v2557 = vunpack.c.h.b16 %v1405
  %v2558 = vunpack.c.l.b16 %v1406
  %v2559 = vunpack.c.h.b16 %v1406
  %v2560 = vunpack.c.l.b16 %v1407
  %v2561 = vunpack.c.h.b16 %v1407
  %v2562 = vunpack.c.l.b16 %v1408
  %v2563 = vunpack.c.h.b16 %v1408
  %v2564 = vunpack.c.l.b16 %v1409
  %v2565 = vunpack.c.h.b16 %v1409
  %v2566 = vunpack.c.l.b16 %v1410
  %v2567 = vunpack.c.h.b16 %v1410
  %v2568 = vunpack.c.l.b16 %v1411
  %v2569 = vunpack.c.h.b16 %v1411
  %v2570 = vunpack.c.l.b16 %v1412
  %v2571 = vunpack.c.h.b16 %v1412
  %v2572 = vunpack.c.l.b16 %v1413
  %v2573 = vunpack.c.h.b16 %v1413
  %v2574 = vunpack.c.l.b16 %v1414
  %v2575 = vunpack.c.h.b16 %v1414
  %v2576 = vunpack.c.l.b16 %v1415
  %v2577 = vunpack.c.h.b16 %v1415
  %v2578 = vunpack.c.l.b16 %v1416
  %v2579 = vunpack.c.h.b16 %v1416
  %v2580 = vunpack.c.l.b16 %v1417
  %v2581 = vunpack.c.h.b16 %v1417
  %v2582 = vunpack.c.l.b16 %v1418
  %v2583 = vunpack.c.h.b16 %v1418
  %v2584 = vunpack.c.l.b16 %v1419
  %v2585 = vunpack.c.h.b16 %v1419
  %v2586 = vunpack.c.l.b16 %v1420
  %v2587 = vunpack.c.h.b16 %v1420
  %v2588 = vunpack.c.l.b16 %v1421
  %v2589 = vunpack.c.h.b16 %v1421
  %v2590 = vunpack.c.l.b16 %v1422
  %v2591 = vunpack.c.h.b16 %v1422
  %v2592 = vunpack.c.l.b16 %v1423
  %v2593 = vunpack.c.h.b16 %v1423
  %v2594 = vunpack.c.l.b16 %v1424
  %v2595 = vunpack.c.h.b16 %v1424
  %v2596 = vunpack.c.l.b16 %v1425
  %v2597 = vunpack.c.h.b16 %v1425
  %v2598 = vunpack.c.l.b16 %v1426
  %v2599 = vunpack.c.h.b16 %v1426
  %v2600 = vunpack.c.l.b16 %v1427
  %v2601 = vunpack.c.h.b16 %v1427
  %v2602 = vunpack.c.l.b16 %v1428
  %v2603 = vunpack.c.h.b16 %v1428
  %v2604 = vunpack.c.l.b16 %v1429
  %v2605 = vunpack.c.h.b16 %v1429
  %v2606 = vunpack.c.l.b16 %v1430
  %v2607 = vunpack.c.h.b16 %v1430
  %v2608 = vunpack.c.l.b16 %v1431
  %v2609 = vunpack.c.h.b16 %v1431
  %v2610 = vunpack.c.l.b16 %v1432
  %v2611 = vunpack.c.h.b16 %v1432
  %v2612 = vunpack.c.l.b16 %v1433
  %v2613 = vunpack.c.h.b16 %v1433
  %v2614 = vunpack.c.l.b16 %v1434
  %v2615 = vunpack.c.h.b16 %v1434
  %v2616 = vunpack.c.l.b16 %v1435
  %v2617 = vunpack.c.h.b16 %v1435
  %v2618 = vunpack.c.l.b16 %v1436
  %v2619 = vunpack.c.h.b16 %v1436
  %v2620 = vunpack.c.l.b16 %v1437
  %v2621 = vunpack.c.h.b16 %v1437
  %v2622 = vunpack.c.l.b16 %v1438
  %v2623 = vunpack.c.h.b16 %v1438
  %v2624 = vunpack.c.l.b16 %v1439
  %v2625 = vunpack.c.h.b16 %v1439
  %v2626 = vunpack.c.l.b16 %v1440
  %v2627 = vunpack.c.h.b16 %v1440
  %v2628 = vunpack.c.l.b16 %v1441
  %v2629 = vunpack.c.h.b16 %v1441
  %v2630 = vunpack.c.l.b16 %v1442
  %v2631 = vunpack.c.h.b16 %v1442
  %v2632 = vunpack.c.l.b16 %v1443
  %v2633 = vunpack.c.h.b16 %v1443
  %v2634 = vunpack.c.l.b16 %v1444
  %v2635 = vunpack.c.h.b16 %v1444
  %v2636 = vunpack.c.l.b16 %v1445
  %v2637 = vunpack.c.h.b16 %v1445
  %v2638 = vunpack.c.l.b16 %v1446
  %v2639 = vunpack.c.h.b16 %v1446
  %v2640 = vunpack.c.l.b16 %v1447
  %v2641 = vunpack.c.h.b16 %v1447
  %v2642 = vunpack.c.l.b16 %v1448
  %v2643 = vunpack.c.h.b16 %v1448
  %v2644 = vunpack.c.l.b16 %v1449
  %v2645 = vunpack.c.h.b16 %v1449
  %v2646 = vunpack.c.l.b16 %v1450
  %v2647 = vunpack.c.h.b16 %v1450
  %v2648 = vunpack.c.l.b16 %v1451
  %v2649 = vunpack.c.h.b16 %v1451
  %v2650 = vunpack.c.l.b16 %v1452
  %v2651 = vunpack.c.h.b16 %v1452
  %v2652 = vunpack.c.l.b16 %v1453
  %v2653 = vunpack.c.h.b16 %v1453
  %v2654 = vunpack.c.l.b16 %v1454
  %v2655 = vunpack.c.h.b16 %v1454
  %v2656 = vunpack.c.l.b16 %v1455
  %v2657 = vunpack.c.h.b16 %v1455
  %v2658 = vunpack.c.l.b16 %v1456
  %v2659 = vunpack.c.h.b16 %v1456
  %v2660 = vunpack.c.l.b16 %v1457
  %v2661 = vunpack.c.h.b16 %v1457
  %v2662 = vunpack.c.l.b16 %v1458
  %v2663 = vunpack.c.h.b16 %v1458
  %v2664 = vunpack.c.l.b16 %v1459
  %v2665 = vunpack.c.h.b16 %v1459
  %v2666 = vunpack.c.l.b16 %v1460
  %v2667 = vunpack.c.h.b16 %v1460
  %v2668 = vunpack.c.l.b16 %v1461
  %v2669 = vunpack.c.h.b16 %v1461
  %v2670 = vunpack.c.l.b16 %v1462
  %v2671 = vunpack.c.h.b16 %v1462
  %v2672 = vunpack.c.l.b16 %v1463
  %v2673 = vunpack.c.h.b16 %v1463
  %v2674 = vunpack.c.l.b16 %v1464
  %v2675 = vunpack.c.h.b16 %v1464
  %v2676 = vunpack.c.l.b16 %v1465
  %v2677 = vunpack.c.h.b16 %v1465
  %v2678 = vunpack.c.l.b16 %v1466
  %v2679 = vunpack.c.h.b16 %v1466
  %v2680 = vunpack.c.l.b16 %v1467
  %v2681 = vunpack.c.h.b16 %v1467
  %v2682 = vunpack.c.l.b16 %v1468
  %v2683 = vunpack.c.h.b16 %v1468
  %v2684 = vunpack.c.l.b16 %v1469
  %v2685 = vunpack.c.h.b16 %v1469
  %v2686 = vunpack.c.l.b16 %v1470
  %v2687 = vunpack.c.h.b16 %v1470
  %v2688 = vunpack.c.l.b16 %v1471
  %v2689 = vunpack.c.h.b16 %v1471
  %v2690 = vunpack.c.l.b16 %v1472
  %v2691 = vunpack.c.h.b16 %v1472
  %v2692 = vunpack.c.l.b16 %v1473
  %v2693 = vunpack.c.h.b16 %v1473
  %v2694 = vunpack.c.l.b16 %v1474
  %v2695 = vunpack.c.h.b16 %v1474
  %v2696 = vunpack.c.l.b16 %v1475
  %v2697 = vunpack.c.h.b16 %v1475
  %v2698 = vunpack.c.l.b16 %v1476
  %v2699 = vunpack.c.h.b16 %v1476
  %v2700 = vunpack.c.l.b16 %v1477
  %v2701 = vunpack.c.h.b16 %v1477
  %v2702 = vunpack.c.l.b16 %v1478
  %v2703 = vunpack.c.h.b16 %v1478
  %v2704 = vunpack.c.l.b16 %v1479
  %v2705 = vunpack.c.h.b16 %v1479
  %v2706 = vunpack.c.l.b16 %v1480
  %v2707 = vunpack.c.h.b16 %v1480
  %v2708 = vunpack.c.l.b16 %v1481
  %v2709 = vunpack.c.h.b16 %v1481
  %v2710 = vunpack.c.l.b16 %v1482
  %v2711 = vunpack.c.h.b16 %v1482
  %v2712 = vunpack.c.l.b16 %v1483
  %v2713 = vunpack.c.h.b16 %v1483
  %v2714 = vunpack.c.l.b16 %v1484
  %v2715 = vunpack.c.h.b16 %v1484
  %v2716 = vunpack.c.l.b16 %v1485
  %v2717 = vunpack.c.h.b16 %v1485
  %v2718 = vunpack.c.l.b16 %v1486
  %v2719 = vunpack.c.h.b16 %v1486
  %v2720 = vunpack.c.l.b16 %v1487
  %v2721 = vunpack.c.h.b16 %v1487
  %v2722 = vunpack.c.l.b16 %v1488
  %v2723 = vunpack.c.h.b16 %v1488
  %v2724 = vunpack.c.l.b16 %v1489
  %v2725 = vunpack.c.h.b16 %v1489
  %v2726 = vunpack.c.l.b16 %v1490
  %v2727 = vunpack.c.h.b16 %v1490
  %v2728 = vunpack.c.l.b16 %v1491
  %v2729 = vunpack.c.h.b16 %v1491
  %v2730 = vunpack.c.l.b16 %v1492
  %v2731 = vunpack.c.h.b16 %v1492
  %v2732 = vunpack.c.l.b16 %v1493
  %v2733 = vunpack.c.h.b16 %v1493
  %v2734 = vunpack.c.l.b16 %v1494
  %v2735 = vunpack.c.h.b16 %v1494
  %v2736 = vunpack.c.l.b16 %v1495
  %v2737 = vunpack.c.h.b16 %v1495
  %v2738 = vunpack.c.l.b16 %v1496
  %v2739 = vunpack.c.h.b16 %v1496
  %v2740 = vunpack.c.l.b16 %v1497
  %v2741 = vunpack.c.h.b16 %v1497
  %v2742 = vunpack.c.l.b16 %v1498
  %v2743 = vunpack.c.h.b16 %v1498
  %v2744 = vunpack.c.l.b16 %v1499
  %v2745 = vunpack.c.h.b16 %v1499
  %v2746 = vunpack.c.l.b16 %v1500
  %v2747 = vunpack.c.h.b16 %v1500
  %v2748 = vunpack.c.l.b16 %v1501
  %v2749 = vunpack.c.h.b16 %v1501
  %v2750 = vunpack.c.l.b16 %v1502
  %v2751 = vunpack.c.h.b16 %v1502
  %v2752 = vunpack.c.l.b16 %v1503
  %v2753 = vunpack.c.h.b16 %v1503
  %v2754 = vunpack.c.l.b16 %v1504
  %v2755 = vunpack.c.h.b16 %v1504
  %v2756 = vunpack.c.l.b16 %v1505
  %v2757 = vunpack.c.h.b16 %v1505
  %v2758 = vunpack.c.l.b16 %v1506
  %v2759 = vunpack.c.h.b16 %v1506
  %v2760 = vunpack.c.l.b16 %v1507
  %v2761 = vunpack.c.h.b16 %v1507
  %v2762 = vunpack.c.l.b16 %v1508
  %v2763 = vunpack.c.h.b16 %v1508
  %v2764 = vunpack.c.l.b16 %v1509
  %v2765 = vunpack.c.h.b16 %v1509
  %v2766 = vunpack.c.l.b16 %v1510
  %v2767 = vunpack.c.h.b16 %v1510
  %v2768 = vunpack.c.l.b16 %v1511
  %v2769 = vunpack.c.h.b16 %v1511
  %v2770 = vunpack.c.l.b16 %v1512
  %v2771 = vunpack.c.h.b16 %v1512
  %v2772 = vunpack.c.l.b16 %v1513
  %v2773 = vunpack.c.h.b16 %v1513
  %v2774 = vunpack.c.l.b16 %v1514
  %v2775 = vunpack.c.h.b16 %v1514
  %v2776 = vunpack.c.l.b16 %v1515
  %v2777 = vunpack.c.h.b16 %v1515
  %v2778 = vunpack.c.l.b16 %v1516
  %v2779 = vunpack.c.h.b16 %v1516
  %v2780 = vunpack.c.l.b16 %v1517
  %v2781 = vunpack.c.h.b16 %v1517
  %v2782 = vunpack.c.l.b16 %v1518
  %v2783 = vunpack.c.h.b16 %v1518
  %v2784 = vunpack.c.l.b16 %v1519
  %v2785 = vunpack.c.h.b16 %v1519
  %v2786 = vunpack.c.l.b16 %v1520
  %v2787 = vunpack.c.h.b16 %v1520
  %v2788 = vunpack.c.l.b16 %v1521
  %v2789 = vunpack.c.h.b16 %v1521
  %v2790 = vunpack.c.l.b16 %v1522
  %v2791 = vunpack.c.h.b16 %v1522
  %v2792 = vunpack.c.l.b16 %v1523
  %v2793 = vunpack.c.h.b16 %v1523
  %v2794 = vunpack.c.l.b16 %v1524
  %v2795 = vunpack.c.h.b16 %v1524
  %v2796 = vunpack.c.l.b16 %v1525
  %v2797 = vunpack.c.h.b16 %v1525
  %v2798 = vunpack.c.l.b16 %v1526
  %v2799 = vunpack.c.h.b16 %v1526
  %v2800 = vunpack.c.l.b16 %v1527
  %v2801 = vunpack.c.h.b16 %v1527
  %v2802 = vunpack.c.l.b16 %v1528
  %v2803 = vunpack.c.h.b16 %v1528
  %v2804 = vunpack.c.l.b16 %v1529
  %v2805 = vunpack.c.h.b16 %v1529
  %v2806 = vunpack.c.l.b16 %v1530
  %v2807 = vunpack.c.h.b16 %v1530
  %v2808 = vunpack.c.l.b16 %v1531
  %v2809 = vunpack.c.h.b16 %v1531
  %v2810 = vunpack.c.l.b16 %v1532
  %v2811 = vunpack.c.h.b16 %v1532
  %v2812 = vunpack.c.l.b16 %v1533
  %v2813 = vunpack.c.h.b16 %v1533
  %v2814 = vunpack.c.l.b16 %v1534
  %v2815 = vunpack.c.h.b16 %v1534
  %v2816 = vunpack.c.l.b16 %v1535
  %v2817 = vunpack.c.h.b16 %v1535
  %v2818 = vunpack.c.l.b16 %v1536
  %v2819 = vunpack.c.h.b16 %v1536
  %v2820 = vunpack.c.l.b16 %v1537
  %v2821 = vunpack.c.h.b16 %v1537
  %v2822 = vunpack.c.l.b16 %v1538
  %v2823 = vunpack.c.h.b16 %v1538
  %v2824 = vunpack.c.l.b16 %v1539
  %v2825 = vunpack.c.h.b16 %v1539
  %v2826 = vunpack.c.l.b16 %v1540
  %v2827 = vunpack.c.h.b16 %v1540
  %v2828 = vunpack.c.l.b16 %v1541
  %v2829 = vunpack.c.h.b16 %v1541
  %v2830 = vunpack.c.l.b16 %v1542
  %v2831 = vunpack.c.h.b16 %v1542
  %v2832 = vunpack.c.l.b16 %v1543
  %v2833 = vunpack.c.h.b16 %v1543
  %v2834 = vunpack.c.l.b16 %v1544
  %v2835 = vunpack.c.h.b16 %v1544
  %v2836 = vunpack.c.l.b16 %v1545
  %v2837 = vunpack.c.h.b16 %v1545
  %v2838 = vunpack.c.l.b16 %v1546
  %v2839 = vunpack.c.h.b16 %v1546
  %v2840 = vunpack.c.l.b16 %v1547
  %v2841 = vunpack.c.h.b16 %v1547
  %v2842 = vunpack.c.l.b16 %v1548
  %v2843 = vunpack.c.h.b16 %v1548
  %v2844 = vunpack.c.l.b16 %v1549
  %v2845 = vunpack.c.h.b16 %v1549
  %v2846 = vunpack.c.l.b16 %v1550
  %v2847 = vunpack.c.h.b16 %v1550
  %v2848 = vunpack.c.l.b16 %v1551
  %v2849 = vunpack.c.h.b16 %v1551
  %v2850 = vunpack.c.l.b16 %v1552
  %v2851 = vunpack.c.h.b16 %v1552
  %v2852 = vunpack.c.l.b16 %v1553
  %v2853 = vunpack.c.h.b16 %v1553
  %v2854 = vunpack.c.l.b16 %v1554
  %v2855 = vunpack.c.h.b16 %v1554
  %v2856 = vunpack.c.l.b16 %v1555
  %v2857 = vunpack.c.h.b16 %v1555
  %v2858 = vunpack.c.l.b16 %v1556
  %v2859 = vunpack.c.h.b16 %v1556
  %v2860 = vunpack.c.l.b16 %v1557
  %v2861 = vunpack.c.h.b16 %v1557
  %v2862 = vunpack.c.l.b16 %v1558
  %v2863 = vunpack.c.h.b16 %v1558
  %v2864 = vunpack.c.l.b16 %v1559
  %v2865 = vunpack.c.h.b16 %v1559
  %v2866 = vunpack.c.l.b16 %v1560
  %v2867 = vunpack.c.h.b16 %v1560
  %v2868 = vunpack.c.l.b16 %v1561
  %v2869 = vunpack.c.h.b16 %v1561
  %v2870 = vunpack.c.l.b16 %v1562
  %v2871 = vunpack.c.h.b16 %v1562
  %v2872 = vunpack.c.l.b16 %v1563
  %v2873 = vunpack.c.h.b16 %v1563
  %v2874 = vunpack.c.l.b16 %v1564
  %v2875 = vunpack.c.h.b16 %v1564
  %v2876 = vunpack.c.l.b16 %v1565
  %v2877 = vunpack.c.h.b16 %v1565
  %v2878 = vunpack.c.l.b16 %v1566
  %v2879 = vunpack.c.h.b16 %v1566
  %v2880 = vunpack.c.l.b16 %v1567
  %v2881 = vunpack.c.h.b16 %v1567
  %v2882 = vunpack.c.l.b16 %v1568
  %v2883 = vunpack.c.h.b16 %v1568
  %v2884 = vunpack.c.l.b16 %v1569
  %v2885 = vunpack.c.h.b16 %v1569
  %v2886 = vunpack.c.l.b16 %v1570
  %v2887 = vunpack.c.h.b16 %v1570
  %v2888 = vunpack.c.l.b16 %v1571
  %v2889 = vunpack.c.h.b16 %v1571
  %v2890 = vunpack.c.l.b16 %v1572
  %v2891 = vunpack.c.h.b16 %v1572
  %v2892 = vunpack.c.l.b16 %v1573
  %v2893 = vunpack.c.h.b16 %v1573
  %v2894 = vunpack.c.l.b16 %v1574
  %v2895 = vunpack.c.h.b16 %v1574
  %v2896 = vunpack.c.l.b16 %v1575
  %v2897 = vunpack.c.h.b16 %v1575
  %v2898 = vunpack.c.l.b16 %v1576
  %v2899 = vunpack.c.h.b16 %v1576
  %v2900 = vunpack.c.l.b16 %v1577
  %v2901 = vunpack.c.h.b16 %v1577
  %v2902 = vunpack.c.l.b16 %v1578
  %v2903 = vunpack.c.h.b16 %v1578
  %v2904 = vunpack.c.l.b16 %v1579
  %v2905 = vunpack.c.h.b16 %v1579
  %v2906 = vunpack.c.l.b16 %v1580
  %v2907 = vunpack.c.h.b16 %v1580
  %v2908 = vunpack.c.l.b16 %v1581
  %v2909 = vunpack.c.h.b16 %v1581
  %v2910 = vunpack.c.l.b16 %v1582
  %v2911 = vunpack.c.h.b16 %v1582
  %v2912 = vunpack.c.l.b16 %v1583
  %v2913 = vunpack.c.h.b16 %v1583
  %v2914 = vunpack.c.l.b16 %v1584
  %v2915 = vunpack.c.h.b16 %v1584
  %v2916 = vunpack.c.l.b16 %v1585
  %v2917 = vunpack.c.h.b16 %v1585
  %v2918 = vunpack.c.l.b16 %v1586
  %v2919 = vunpack.c.h.b16 %v1586
  %v2920 = vunpack.c.l.b16 %v1587
  %v2921 = vunpack.c.h.b16 %v1587
  %v2922 = vunpack.c.l.b16 %v1588
  %v2923 = vunpack.c.h.b16 %v1588
  %v2924 = vunpack.c.l.b16 %v1589
  %v2925 = vunpack.c.h.b16 %v1589
  %v2926 = vunpack.c.l.b16 %v1590
  %v2927 = vunpack.c.h.b16 %v1590
  %v2928 = vunpack.c.l.b16 %v1591
  %v2929 = vunpack.c.h.b16 %v1591
  %v2930 = vunpack.c.l.b16 %v1592
  %v2931 = vunpack.c.h.b16 %v1592
  %v2932 = vunpack.c.l.b16 %v1593
  %v2933 = vunpack.c.h.b16 %v1593
  %v2934 = vunpack.c.l.b16 %v1594
  %v2935 = vunpack.c.h.b16 %v1594
  %v2936 = vunpack.c.l.b16 %v1595
  %v2937 = vunpack.c.h.b16 %v1595
  %v2938 = vunpack.c.l.b16 %v1596
  %v2939 = vunpack.c.h.b16 %v1596
  %v2940 = vunpack.c.l.b16 %v1597
  %v2941 = vunpack.c.h.b16 %v1597
  %v2942 = vunpack.c.l.b16 %v1598
  %v2943 = vunpack.c.h.b16 %v1598
  %v2944 = vunpack.c.l.b16 %v1599
  %v2945 = vunpack.c.h.b16 %v1599
  %v2946 = vunpack.c.l.b16 %v1600
  %v2947 = vunpack.c.h.b16 %v1600
  %v2948 = vunpack.c.l.b16 %v1601
  %v2949 = vunpack.c.h.b16 %v1601
  %v2950 = vunpack.c.l.b16 %v1602
  %v2951 = vunpack.c.h.b16 %v1602
  %v2952 = vunpack.c.l.b16 %v1603
  %v2953 = vunpack.c.h.b16 %v1603
  %v2954 = vunpack.c.l.b16 %v1604
  %v2955 = vunpack.c.h.b16 %v1604
  %v2956 = vunpack.c.l.b16 %v1605
  %v2957 = vunpack.c.h.b16 %v1605
  %v2958 = vunpack.c.l.b16 %v1606
  %v2959 = vunpack.c.h.b16 %v1606
  %v2960 = vunpack.c.l.b16 %v1607
  %v2961 = vunpack.c.h.b16 %v1607
  %v2962 = vunpack.c.l.b16 %v1608
  %v2963 = vunpack.c.h.b16 %v1608
  %v2964 = vunpack.c.l.b16 %v1609
  %v2965 = vunpack.c.h.b16 %v1609
  %v2966 = vunpack.c.l.b16 %v1610
  %v2967 = vunpack.c.h.b16 %v1610
  %v2968 = vunpack.c.l.b16 %v1611
  %v2969 = vunpack.c.h.b16 %v1611
  %v2970 = vunpack.c.l.b16 %v1612
  %v2971 = vunpack.c.h.b16 %v1612
  %v2972 = vunpack.c.l.b16 %v1613
  %v2973 = vunpack.c.h.b16 %v1613
  %v2974 = vunpack.c.l.b16 %v1614
  %v2975 = vunpack.c.h.b16 %v1614
  %v2976 = vunpack.c.l.b16 %v1615
  %v2977 = vunpack.c.h.b16 %v1615
  %v2978 = vunpack.c.l.b16 %v1616
  %v2979 = vunpack.c.h.b16 %v1616
  %v2980 = vunpack.c.l.b16 %v1617
  %v2981 = vunpack.c.h.b16 %v1617
  %v2982 = vunpack.c.l.b16 %v1618
  %v2983 = vunpack.c.h.b16 %v1618
  %v2984 = vunpack.c.l.b16 %v1619
  %v2985 = vunpack.c.h.b16 %v1619
  %v2986 = vunpack.c.l.b16 %v1620
  %v2987 = vunpack.c.h.b16 %v1620
  %v2988 = vunpack.c.l.b16 %v1621
  %v2989 = vunpack.c.h.b16 %v1621
  %v2990 = vunpack.c.l.b16 %v1622
  %v2991 = vunpack.c.h.b16 %v1622
  %v2992 = vunpack.c.l.b16 %v1623
  %v2993 = vunpack.c.h.b16 %v1623
  %v2994 = vunpack.c.l.b16 %v1624
  %v2995 = vunpack.c.h.b16 %v1624
  %v2996 = vunpack.c.l.b16 %v1625
  %v2997 = vunpack.c.h.b16 %v1625
  %v2998 = vunpack.c.l.b16 %v1626
  %v2999 = vunpack.c.h.b16 %v1626
  %v3000 = vunpack.c.l.b16 %v1627
  %v3001 = vunpack.c.h.b16 %v1627
  %v3002 = vunpack.c.l.b16 %v1628
  %v3003 = vunpack.c.h.b16 %v1628
  %v3004 = vunpack.c.l.b16 %v1629
  %v3005 = vunpack.c.h.b16 %v1629
  %v3006 = vunpack.c.l.b16 %v1630
  %v3007 = vunpack.c.h.b16 %v1630
  %v3008 = vunpack.c.l.b16 %v1631
  %v3009 = vunpack.c.h.b16 %v1631
  %v3010 = vunpack.c.l.b16 %v1632
  %v3011 = vunpack.c.h.b16 %v1632
  %v3012 = vunpack.c.l.b16 %v1633
  %v3013 = vunpack.c.h.b16 %v1633
  %v3014 = vunpack.c.l.b16 %v1634
  %v3015 = vunpack.c.h.b16 %v1634
  %v3016 = vunpack.c.l.b16 %v1635
  %v3017 = vunpack.c.h.b16 %v1635
  %v3018 = vunpack.c.l.b16 %v1636
  %v3019 = vunpack.c.h.b16 %v1636
  %v3020 = vunpack.c.l.b16 %v1637
  %v3021 = vunpack.c.h.b16 %v1637
  %v3022 = vunpack.c.l.b16 %v1638
  %v3023 = vunpack.c.h.b16 %v1638
  %v3024 = vunpack.c.l.b16 %v1639
  %v3025 = vunpack.c.h.b16 %v1639
  %v3026 = vunpack.c.l.b16 %v1640
  %v3027 = vunpack.c.h.b16 %v1640
  %v3028 = vunpack.c.l.b16 %v1641
  %v3029 = vunpack.c.h.b16 %v1641
  %v3030 = vunpack.c.l.b16 %v1642
  %v3031 = vunpack.c.h.b16 %v1642
  %v3032 = vunpack.c.l.b16 %v1643
  %v3033 = vunpack.c.h.b16 %v1643
  %v3034 = vunpack.c.l.b16 %v1644
  %v3035 = vunpack.c.h.b16 %v1644
  %v3036 = vunpack.c.l.b16 %v1645
  %v3037 = vunpack.c.h.b16 %v1645
  %v3038 = vunpack.c.l.b16 %v1646
  %v3039 = vunpack.c.h.b16 %v1646
  %v3040 = vunpack.c.l.b16 %v1647
  %v3041 = vunpack.c.h.b16 %v1647
  %v3042 = vunpack.c.l.b16 %v1648
  %v3043 = vunpack.c.h.b16 %v1648
  %v3044 = vunpack.c.l.b16 %v1649
  %v3045 = vunpack.c.h.b16 %v1649
  %v3046 = vunpack.c.l.b16 %v1650
  %v3047 = vunpack.c.h.b16 %v1650
  %v3048 = vunpack.c.l.b16 %v1651
  %v3049 = vunpack.c.h.b16 %v1651
  %v3050 = vunpack.c.l.b16 %v1652
  %v3051 = vunpack.c.h.b16 %v1652
  %v3052 = vunpack.c.l.b16 %v1653
  %v3053 = vunpack.c.h.b16 %v1653
  %v3054 = vunpack.c.l.b16 %v1654
  %v3055 = vunpack.c.h.b16 %v1654
  %v3056 = vunpack.c.l.b16 %v1655
  %v3057 = vunpack.c.h.b16 %v1655
  %v3058 = vunpack.c.l.b16 %v1656
  %v3059 = vunpack.c.h.b16 %v1656
  %v3060 = vunpack.c.l.b16 %v1657
  %v3061 = vunpack.c.h.b16 %v1657
  %v3062 = vunpack.c.l.b16 %v1658
  %v3063 = vunpack.c.h.b16 %v1658
  %v3064 = vunpack.c.l.b16 %v1659
  %v3065 = vunpack.c.h.b16 %v1659
  %v3066 = vunpack.c.l.b16 %v1660
  %v3067 = vunpack.c.h.b16 %v1660
  %v3068 = vunpack.c.l.b16 %v1661
  %v3069 = vunpack.c.h.b16 %v1661
  %v3070 = vunpack.c.l.b16 %v1662
  %v3071 = vunpack.c.h.b16 %v1662
  %v3072 = vunpack.c.l.b16 %v1663
  %v3073 = vunpack.c.h.b16 %v1663
  %v3074 = vunpack.c.l.b16 %v1664
  %v3075 = vunpack.c.h.b16 %v1664
  %v3076 = vunpack.c.l.b16 %v1665
  %v3077 = vunpack.c.h.b16 %v1665
  %v3078 = vunpack.c.l.b16 %v1666
  %v3079 = vunpack.c.h.b16 %v1666
  %v3080 = vunpack.c.l.b16 %v1667
  %v3081 = vunpack.c.h.b16 %v1667
  %v3082 = vunpack.c.l.b16 %v1668
  %v3083 = vunpack.c.h.b16 %v1668
  %v3084 = vunpack.c.l.b16 %v1669
  %v3085 = vunpack.c.h.b16 %v1669
  %v3086 = vunpack.c.l.b16 %v1670
  %v3087 = vunpack.c.h.b16 %v1670
  %v3088 = vunpack.c.l.b16 %v1671
  %v3089 = vunpack.c.h.b16 %v1671
  %v3090 = vunpack.c.l.b16 %v1672
  %v3091 = vunpack.c.h.b16 %v1672
  %v3092 = vunpack.c.l.b16 %v1673
  %v3093 = vunpack.c.h.b16 %v1673
  %v3094 = vunpack.c.l.b16 %v1674
  %v3095 = vunpack.c.h.b16 %v1674
  %v3096 = vunpack.c.l.b16 %v1675
  %v3097 = vunpack.c.h.b16 %v1675
  %v3098 = vunpack.c.l.b16 %v1676
  %v3099 = vunpack.c.h.b16 %v1676
  %v3100 = vunpack.c.l.b16 %v1677
  %v3101 = vunpack.c.h.b16 %v1677
  %v3102 = vunpack.c.l.b16 %v1678
  %v3103 = vunpack.c.h.b16 %v1678
  %v3104 = vunpack.c.l.b16 %v1679
  %v3105 = vunpack.c.h.b16 %v1679
  %v3106 = vunpack.c.l.b16 %v1680
  %v3107 = vunpack.c.h.b16 %v1680
  %v3108 = vunpack.c.l.b16 %v1681
  %v3109 = vunpack.c.h.b16 %v1681
  %v3110 = vunpack.c.l.b16 %v1682
  %v3111 = vunpack.c.h.b16 %v1682
  %v3112 = vunpack.c.l.b16 %v1683
  %v3113 = vunpack.c.h.b16 %v1683
  %v3114 = vunpack.c.l.b16 %v1684
  %v3115 = vunpack.c.h.b16 %v1684
  %v3116 = vunpack.c.l.b16 %v1685
  %v3117 = vunpack.c.h.b16 %v1685
  %v3118 = vunpack.c.l.b16 %v1686
  %v3119 = vunpack.c.h.b16 %v1686
  %v3120 = vunpack.c.l.b16 %v1687
  %v3121 = vunpack.c.h.b16 %v1687
  %v3122 = vunpack.c.l.b16 %v1688
  %v3123 = vunpack.c.h.b16 %v1688
  %v3124 = vunpack.c.l.b16 %v1689
  %v3125 = vunpack.c.h.b16 %v1689
  %v3126 = vunpack.c.l.b16 %v1690
  %v3127 = vunpack.c.h.b16 %v1690
  %v3128 = vunpack.c.l.b16 %v1691
  %v3129 = vunpack.c.h.b16 %v1691
  %v3130 = vunpack.c.l.b16 %v1692
  %v3131 = vunpack.c.h.b16 %v1692
  %v3132 = vunpack.c.l.b16 %v1693
  %v3133 = vunpack.c.h.b16 %v1693
  %v3134 = vunpack.c.l.b16 %v1694
  %v3135 = vunpack.c.h.b16 %v1694
  %v3136 = vunpack.c.l.b16 %v1695
  %v3137 = vunpack.c.h.b16 %v1695
  %v3138 = vunpack.c.l.b16 %v1696
  %v3139 = vunpack.c.h.b16 %v1696
  %v3140 = vunpack.c.l.b16 %v1697
  %v3141 = vunpack.c.h.b16 %v1697
  %v3142 = vunpack.c.l.b16 %v1698
  %v3143 = vunpack.c.h.b16 %v1698
  %v3144 = vunpack.c.l.b16 %v1699
  %v3145 = vunpack.c.h.b16 %v1699
  %v3146 = vunpack.c.l.b16 %v1700
  %v3147 = vunpack.c.h.b16 %v1700
  %v3148 = vunpack.c.l.b16 %v1701
  %v3149 = vunpack.c.h.b16 %v1701
  %v3150 = vunpack.c.l.b16 %v1702
  %v3151 = vunpack.c.h.b16 %v1702
  %v3152 = vunpack.c.l.b16 %v1703
  %v3153 = vunpack.c.h.b16 %v1703
  %v3154 = vunpack.c.l.b16 %v1704
  %v3155 = vunpack.c.h.b16 %v1704
  %v3156 = vunpack.c.l.b16 %v1705
  %v3157 = vunpack.c.h.b16 %v1705
  %v3158 = vunpack.c.l.b16 %v1706
  %v3159 = vunpack.c.h.b16 %v1706
  %v3160 = vunpack.c.l.b16 %v1707
  %v3161 = vunpack.c.h.b16 %v1707
  %v3162 = vunpack.c.l.b16 %v1708
  %v3163 = vunpack.c.h.b16 %v1708
  %v3164 = vunpack.c.l.b16 %v1709
  %v3165 = vunpack.c.h.b16 %v1709
  %v3166 = vunpack.c.l.b16 %v1710
  %v3167 = vunpack.c.h.b16 %v1710
  %v3168 = vunpack.c.l.b16 %v1711
  %v3169 = vunpack.c.h.b16 %v1711
  %v3170 = vunpack.c.l.b16 %v1712
  %v3171 = vunpack.c.h.b16 %v1712
  %v3172 = vunpack.c.l.b16 %v1713
  %v3173 = vunpack.c.h.b16 %v1713
  %v3174 = vunpack.c.l.b16 %v1714
  %v3175 = vunpack.c.h.b16 %v1714
  %v3176 = vunpack.c.l.b16 %v1715
  %v3177 = vunpack.c.h.b16 %v1715
  %v3178 = vunpack.c.l.b16 %v1716
  %v3179 = vunpack.c.h.b16 %v1716
  %v3180 = vunpack.c.l.b16 %v1717
  %v3181 = vunpack.c.h.b16 %v1717
  %v3182 = vunpack.c.l.b16 %v1718
  %v3183 = vunpack.c.h.b16 %v1718
  %v3184 = vunpack.c.l.b16 %v1719
  %v3185 = vunpack.c.h.b16 %v1719
  %v3186 = vunpack.c.l.b16 %v1720
  %v3187 = vunpack.c.h.b16 %v1720
  %v3188 = vunpack.c.l.b16 %v1721
  %v3189 = vunpack.c.h.b16 %v1721
  %v3190 = vunpack.c.l.b16 %v1722
  %v3191 = vunpack.c.h.b16 %v1722
  %v3192 = vunpack.c.l.b16 %v1723
  %v3193 = vunpack.c.h.b16 %v1723
  %v3194 = vunpack.c.l.b16 %v1724
  %v3195 = vunpack.c.h.b16 %v1724
  %v3196 = vunpack.c.l.b16 %v1725
  %v3197 = vunpack.c.h.b16 %v1725
  %v3198 = vunpack.c.l.b16 %v1726
  %v3199 = vunpack.c.h.b16 %v1726
  %v3200 = vunpack.c.l.b16 %v1727
  %v3201 = vunpack.c.h.b16 %v1727
  %v3202 = vunpack.c.l.b16 %v1728
  %v3203 = vunpack.c.h.b16 %v1728
  %v3204 = vunpack.c.l.b16 %v1729
  %v3205 = vunpack.c.h.b16 %v1729
  %v3206 = vunpack.c.l.b16 %v1730
  %v3207 = vunpack.c.h.b16 %v1730
  %v3208 = vunpack.c.l.b16 %v1731
  %v3209 = vunpack.c.h.b16 %v1731
  %v3210 = vunpack.c.l.b16 %v1732
  %v3211 = vunpack.c.h.b16 %v1732
  %v3212 = vunpack.c.l.b16 %v1733
  %v3213 = vunpack.c.h.b16 %v1733
  %v3214 = vunpack.c.l.b16 %v1734
  %v3215 = vunpack.c.h.b16 %v1734
  %v3216 = vunpack.c.l.b16 %v1735
  %v3217 = vunpack.c.h.b16 %v1735
  %v3218 = vunpack.c.l.b16 %v1736
  %v3219 = vunpack.c.h.b16 %v1736
  %v3220 = vunpack.c.l.b16 %v1737
  %v3221 = vunpack.c.h.b16 %v1737
  %v3222 = vunpack.c.l.b16 %v1738
  %v3223 = vunpack.c.h.b16 %v1738
  %v3224 = vunpack.c.l.b16 %v1739
  %v3225 = vunpack.c.h.b16 %v1739
  %v3226 = vunpack.c.l.b16 %v1740
  %v3227 = vunpack.c.h.b16 %v1740
  %v3228 = vunpack.c.l.b16 %v1741
  %v3229 = vunpack.c.h.b16 %v1741
  %v3230 = vunpack.c.l.b16 %v1742
  %v3231 = vunpack.c.h.b16 %v1742
  %v3232 = vunpack.c.l.b16 %v1743
  %v3233 = vunpack.c.h.b16 %v1743
  %v3234 = vunpack.c.l.b16 %v1744
  %v3235 = vunpack.c.h.b16 %v1744
  %v3236 = vunpack.c.l.b16 %v1745
  %v3237 = vunpack.c.h.b16 %v1745
  %v3238 = vunpack.c.l.b16 %v1746
  %v3239 = vunpack.c.h.b16 %v1746
  %v3240 = vunpack.c.l.b16 %v1747
  %v3241 = vunpack.c.h.b16 %v1747
  %v3242 = vunpack.c.l.b16 %v1748
  %v3243 = vunpack.c.h.b16 %v1748
  %v3244 = vunpack.c.l.b16 %v1749
  %v3245 = vunpack.c.h.b16 %v1749
  %v3246 = vunpack.c.l.b16 %v1750
  %v3247 = vunpack.c.h.b16 %v1750
  %v3248 = vunpack.c.l.b16 %v1751
  %v3249 = vunpack.c.h.b16 %v1751
  %v3250 = vunpack.c.l.b16 %v1752
  %v3251 = vunpack.c.h.b16 %v1752
  %v3252 = vunpack.c.l.b16 %v1753
  %v3253 = vunpack.c.h.b16 %v1753
  %v3254 = vunpack.c.l.b16 %v1754
  %v3255 = vunpack.c.h.b16 %v1754
  %v3256 = vunpack.c.l.b16 %v1755
  %v3257 = vunpack.c.h.b16 %v1755
  %v3258 = vunpack.c.l.b16 %v1756
  %v3259 = vunpack.c.h.b16 %v1756
  %v3260 = vunpack.c.l.b16 %v1757
  %v3261 = vunpack.c.h.b16 %v1757
  %v3262 = vunpack.c.l.b16 %v1758
  %v3263 = vunpack.c.h.b16 %v1758
  %v3264 = vunpack.c.l.b16 %v1759
  %v3265 = vunpack.c.h.b16 %v1759
  %v3266 = vunpack.c.l.b16 %v1760
  %v3267 = vunpack.c.h.b16 %v1760
  %v3268 = vunpack.c.l.b16 %v1761
  %v3269 = vunpack.c.h.b16 %v1761
  %v3270 = vunpack.c.l.b16 %v1762
  %v3271 = vunpack.c.h.b16 %v1762
  %v3272 = vunpack.c.l.b16 %v1763
  %v3273 = vunpack.c.h.b16 %v1763
  %v3274 = vunpack.c.l.b16 %v1764
  %v3275 = vunpack.c.h.b16 %v1764
  %v3276 = vunpack.c.l.b16 %v1765
  %v3277 = vunpack.c.h.b16 %v1765
  %v3278 = vunpack.c.l.b16 %v1766
  %v3279 = vunpack.c.h.b16 %v1766
  %v3280 = vunpack.c.l.b16 %v1767
  %v3281 = vunpack.c.h.b16 %v1767
  %v3282 = vunpack.c.l.b16 %v1768
  %v3283 = vunpack.c.h.b16 %v1768
  %v3284 = vunpack.c.l.b16 %v1769
  %v3285 = vunpack.c.h.b16 %v1769
  %v3286 = vunpack.c.l.b16 %v1770
  %v3287 = vunpack.c.h.b16 %v1770
  %v3288 = vunpack.c.l.b16 %v1771
  %v3289 = vunpack.c.h.b16 %v1771
  %v3290 = vunpack.c.l.b16 %v1772
  %v3291 = vunpack.c.h.b16 %v1772
  %v3292 = vunpack.c.l.b16 %v1773
  %v3293 = vunpack.c.h.b16 %v1773
  %v3294 = vunpack.c.l.b16 %v1774
  %v3295 = vunpack.c.h.b16 %v1774
  %v3296 = vunpack.c.l.b16 %v1775
  %v3297 = vunpack.c.h.b16 %v1775
  %v3298 = vunpack.c.l.b16 %v1776
  %v3299 = vunpack.c.h.b16 %v1776
  %v3300 = vunpack.c.l.b16 %v1777
  %v3301 = vunpack.c.h.b16 %v1777
  %v3302 = vunpack.c.l.b16 %v1778
  %v3303 = vunpack.c.h.b16 %v1778
  %v3304 = vunpack.c.l.b16 %v1779
  %v3305 = vunpack.c.h.b16 %v1779
  %v3306 = vunpack.c.l.b16 %v1780
  %v3307 = vunpack.c.h.b16 %v1780
  %v3308 = vunpack.c.l.b16 %v1781
  %v3309 = vunpack.c.h.b16 %v1781
  %v3310 = vunpack.c.l.b16 %v1782
  %v3311 = vunpack.c.h.b16 %v1782
  %v3312 = vunpack.c.l.b16 %v1783
  %v3313 = vunpack.c.h.b16 %v1783
  %v3314 = vunpack.c.l.b16 %v1784
  %v3315 = vunpack.c.h.b16 %v1784
  %v3316 = vunpack.c.l.b16 %v1785
  %v3317 = vunpack.c.h.b16 %v1785
  %v3318 = vunpack.c.l.b16 %v1786
  %v3319 = vunpack.c.h.b16 %v1786
  %v3320 = vunpack.c.l.b16 %v1787
  %v3321 = vunpack.c.h.b16 %v1787
  %v3322 = vunpack.c.l.b16 %v1788
  %v3323 = vunpack.c.h.b16 %v1788
  %v3324 = vunpack.c.l.b16 %v1789
  %v3325 = vunpack.c.h.b16 %v1789
  %v3326 = vunpack.c.l.b16 %v1790
  %v3327 = vunpack.c.h.b16 %v1790
  %v3328 = vunpack.c.l.b16 %v1791
  %v3329 = vunpack.c.h.b16 %v1791
  %v3330 = vunpack.c.l.b16 %v1792
  %v3331 = vunpack.c.h.b16 %v1792
  %v3332 = vunpack.c.l.b16 %v1793
  %v3333 = vunpack.c.h.b16 %v1793
  %v3334 = vunpack.c.l.b16 %v1794
  %v3335 = vunpack.c.h.b16 %v1794
  %v3336 = vunpack.c.l.b16 %v1795
  %v3337 = vunpack.c.h.b16 %v1795
  %v3338 = vunpack.c.l.b16 %v1796
  %v3339 = vunpack.c.h.b16 %v1796
  %v3340 = vunpack.c.l.b16 %v1797
  %v3341 = vunpack.c.h.b16 %v1797
  %v3342 = vunpack.c.l.b16 %v1798
  %v3343 = vunpack.c.h.b16 %v1798
  %v3344 = vunpack.c.l.b16 %v1799
  %v3345 = vunpack.c.h.b16 %v1799
  %v3346 = vpack.c.b16 %v2326, %v2322
  %v3347 = vpack.c.b16 %v2327, %v2323
  %v3348 = vpack.c.b16 %v2328, %v2324
  %v3349 = vpack.c.b16 %v2329, %v2325
  %v3350 = vpack.c.b16 %v2334, %v2330
  %v3351 = vpack.c.b16 %v2335, %v2331
  %v3352 = vpack.c.b16 %v2336, %v2332
  %v3353 = vpack.c.b16 %v2337, %v2333
  %v3354 = vpack.c.b16 %v2342, %v2338
  %v3355 = vpack.c.b16 %v2343, %v2339
  %v3356 = vpack.c.b16 %v2344, %v2340
  %v3357 = vpack.c.b16 %v2345, %v2341
  %v3358 = vpack.c.b16 %v2350, %v2346
  %v3359 = vpack.c.b16 %v2351, %v2347
  %v3360 = vpack.c.b16 %v2352, %v2348
  %v3361 = vpack.c.b16 %v2353, %v2349
  %v3362 = vpack.c.b16 %v2358, %v2354
  %v3363 = vpack.c.b16 %v2359, %v2355
  %v3364 = vpack.c.b16 %v2360, %v2356
  %v3365 = vpack.c.b16 %v2361, %v2357
  %v3366 = vpack.c.b16 %v2366, %v2362
  %v3367 = vpack.c.b16 %v2367, %v2363
  %v3368 = vpack.c.b16 %v2368, %v2364
  %v3369 = vpack.c.b16 %v2369, %v2365
  %v3370 = vpack.c.b16 %v2374, %v2370
  %v3371 = vpack.c.b16 %v2375, %v2371
  %v3372 = vpack.c.b16 %v2376, %v2372
  %v3373 = vpack.c.b16 %v2377, %v2373
  %v3374 = vpack.c.b16 %v2382, %v2378
  %v3375 = vpack.c.b16 %v2383, %v2379
  %v3376 = vpack.c.b16 %v2384, %v2380
  %v3377 = vpack.c.b16 %v2385, %v2381
  %v3378 = vpack.c.b16 %v2390, %v2386
  %v3379 = vpack.c.b16 %v2391, %v2387
  %v3380 = vpack.c.b16 %v2392, %v2388
  %v3381 = vpack.c.b16 %v2393, %v2389
  %v3382 = vpack.c.b16 %v2398, %v2394
  %v3383 = vpack.c.b16 %v2399, %v2395
  %v3384 = vpack.c.b16 %v2400, %v2396
  %v3385 = vpack.c.b16 %v2401, %v2397
  %v3386 = vpack.c.b16 %v2406, %v2402
  %v3387 = vpack.c.b16 %v2407, %v2403
  %v3388 = vpack.c.b16 %v2408, %v2404
  %v3389 = vpack.c.b16 %v2409, %v2405
  %v3390 = vpack.c.b16 %v2414, %v2410
  %v3391 = vpack.c.b16 %v2415, %v2411
  %v3392 = vpack.c.b16 %v2416, %v2412
  %v3393 = vpack.c.b16 %v2417, %v2413
  %v3394 = vpack.c.b16 %v2422, %v2418
  %v3395 = vpack.c.b16 %v2423, %v2419
  %v3396 = vpack.c.b16 %v2424, %v2420
  %v3397 = vpack.c.b16 %v2425, %v2421
  %v3398 = vpack.c.b16 %v2430, %v2426
  %v3399 = vpack.c.b16 %v2431, %v2427
  %v3400 = vpack.c.b16 %v2432, %v2428
  %v3401 = vpack.c.b16 %v2433, %v2429
  %v3402 = vpack.c.b16 %v2438, %v2434
  %v3403 = vpack.c.b16 %v2439, %v2435
  %v3404 = vpack.c.b16 %v2440, %v2436
  %v3405 = vpack.c.b16 %v2441, %v2437
  %v3406 = vpack.c.b16 %v2446, %v2442
  %v3407 = vpack.c.b16 %v2447, %v2443
  %v3408 = vpack.c.b16 %v2448, %v2444
  %v3409 = vpack.c.b16 %v2449, %v2445
  %v3410 = vpack.c.b16 %v2454, %v2450
  %v3411 = vpack.c.b16 %v2455, %v2451
  %v3412 = vpack.c.b16 %v2456, %v2452
  %v3413 = vpack.c.b16 %v2457, %v2453
  %v3414 = vpack.c.b16 %v2462, %v2458
  %v3415 = vpack.c.b16 %v2463, %v2459
  %v3416 = vpack.c.b16 %v2464, %v2460
  %v3417 = vpack.c.b16 %v2465, %v2461
  %v3418 = vpack.c.b16 %v2470, %v2466
  %v3419 = vpack.c.b16 %v2471, %v2467
  %v3420 = vpack.c.b16 %v2472, %v2468
  %v3421 = vpack.c.b16 %v2473, %v2469
  %v3422 = vpack.c.b16 %v2478, %v2474
  %v3423 = vpack.c.b16 %v2479, %v2475
  %v3424 = vpack.c.b16 %v2480, %v2476
  %v3425 = vpack.c.b16 %v2481, %v2477
  %v3426 = vpack.c.b16 %v2486, %v2482
  %v3427 = vpack.c.b16 %v2487, %v2483
  %v3428 = vpack.c.b16 %v2488, %v2484
  %v3429 = vpack.c.b16 %v2489, %v2485
  %v3430 = vpack.c.b16 %v2494, %v2490
  %v3431 = vpack.c.b16 %v2495, %v2491
  %v3432 = vpack.c.b16 %v2496, %v2492
  %v3433 = vpack.c.b16 %v2497, %v2493
  %v3434 = vpack.c.b16 %v2502, %v2498
  %v3435 = vpack.c.b16 %v2503, %v2499
  %v3436 = vpack.c.b16 %v2504, %v2500
  %v3437 = vpack.c.b16 %v2505, %v2501
  %v3438 = vpack.c.b16 %v2510, %v2506
  %v3439 = vpack.c.b16 %v2511, %v2507
  %v3440 = vpack.c.b16 %v2512, %v2508
  %v3441 = vpack.c.b16 %v2513, %v2509
  %v3442 = vpack.c.b16 %v2518, %v2514
  %v3443 = vpack.c.b16 %v2519, %v2515
  %v3444 = vpack.c.b16 %v2520, %v2516
  %v3445 = vpack.c.b16 %v2521, %v2517
  %v3446 = vpack.c.b16 %v2526, %v2522
  %v3447 = vpack.c.b16 %v2527, %v2523
  %v3448 = vpack.c.b16 %v2528, %v2524
  %v3449 = vpack.c.b16 %v2529, %v2525
  %v3450 = vpack.c.b16 %v2534, %v2530
  %v3451 = vpack.c.b16 %v2535, %v2531
  %v3452 = vpack.c.b16 %v2536, %v2532
  %v3453 = vpack.c.b16 %v2537, %v2533
  %v3454 = vpack.c.b16 %v2542, %v2538
  %v3455 = vpack.c.b16 %v2543, %v2539
  %v3456 = vpack.c.b16 %v2544, %v2540
  %v3457 = vpack.c.b16 %v2545, %v2541
  %v3458 = vpack.c.b16 %v2550, %v2546
  %v3459 = vpack.c.b16 %v2551, %v2547
  %v3460 = vpack.c.b16 %v2552, %v2548
  %v3461 = vpack.c.b16 %v2553, %v2549
  %v3462 = vpack.c.b16 %v2558, %v2554
  %v3463 = vpack.c.b16 %v2559, %v2555
  %v3464 = vpack.c.b16 %v2560, %v2556
  %v3465 = vpack.c.b16 %v2561, %v2557
  %v3466 = vpack.c.b16 %v2566, %v2562
  %v3467 = vpack.c.b16 %v2567, %v2563
  %v3468 = vpack.c.b16 %v2568, %v2564
  %v3469 = vpack.c.b16 %v2569, %v2565
  %v3470 = vpack.c.b16 %v2574, %v2570
  %v3471 = vpack.c.b16 %v2575, %v2571
  %v3472 = vpack.c.b16 %v2576, %v2572
  %v3473 = vpack.c.b16 %v2577, %v2573
  %v3474 = vpack.c.b16 %v2582, %v2578
  %v3475 = vpack.c.b16 %v2583, %v2579
  %v3476 = vpack.c.b16 %v2584, %v2580
  %v3477 = vpack.c.b16 %v2585, %v2581
  %v3478 = vpack.c.b16 %v2590, %v2586
  %v3479 = vpack.c.b16 %v2591, %v2587
  %v3480 = vpack.c.b16 %v2592, %v2588
  %v3481 = vpack.c.b16 %v2593, %v2589
  %v3482 = vpack.c.b16 %v2598, %v2594
  %v3483 = vpack.c.b16 %v2599, %v2595
  %v3484 = vpack.c.b16 %v2600, %v2596
  %v3485 = vpack.c.b16 %v2601, %v2597
  %v3486 = vpack.c.b16 %v2606, %v2602
  %v3487 = vpack.c.b16 %v2607, %v2603
  %v3488 = vpack.c.b16 %v2608, %v2604
  %v3489 = vpack.c.b16 %v2609, %v2605
  %v3490 = vpack.c.b16 %v2614, %v2610
  %v3491 = vpack.c.b16 %v2615, %v2611
  %v3492 = vpack.c.b16 %v2616, %v2612
  %v3493 = vpack.c.b16 %v2617, %v2613
  %v3494 = vpack.c.b16 %v2622, %v2618
  %v3495 = vpack.c.b16 %v2623, %v2619
  %v3496 = vpack.c.b16 %v2624, %v2620
  %v3497 = vpack.c.b16 %v2625, %v2621
  %v3498 = vpack.c.b16 %v2630, %v2626
  %v3499 = vpack.c.b16 %v2631, %v2627
  %v3500 = vpack.c.b16 %v2632, %v2628
  %v3501 = vpack.c.b16 %v2633, %v2629
  %v3502 = vpack.c.b16 %v2638, %v2634
  %v3503 = vpack.c.b16 %v2639, %v2635
  %v3504 = vpack.c.b16 %v2640, %v2636
  %v3505 = vpack.c.b16 %v2641, %v2637
  %v3506 = vpack.c.b16 %v2646, %v2642
  %v3507 = vpack.c.b16 %v2647, %v2643
  %v3508 = vpack.c.b16 %v2648, %v2644
  %v3509 = vpack.c.b16 %v2649, %v2645
  %v3510 = vpack.c.b16 %v2654, %v2650
  %v3511 = vpack.c.b16 %v2655, %v2651
  %v3512 = vpack.c.b16 %v2656, %v2652
  %v3513 = vpack.c.b16 %v2657, %v2653
  %v3514 = vpack.c.b16 %v2662, %v2658
  %v3515 = vpack.c.b16 %v2663, %v2659
  %v3516 = vpack.c.b16 %v2664, %v2660
  %v3517 = vpack.c.b16 %v2665, %v2661
  %v3518 = vpack.c.b16 %v2670, %v2666
  %v3519 = vpack.c.b16 %v2671, %v2667
  %v3520 = vpack.c.b16 %v2672, %v2668
  %v3521 = vpack.c.b16 %v2673, %v2669
  %v3522 = vpack.c.b16 %v2678, %v2674
  %v3523 = vpack.c.b16 %v2679, %v2675
  %v3524 = vpack.c.b16 %v2680, %v2676
  %v3525 = vpack.c.b16 %v2681, %v2677
  %v3526 = vpack.c.b16 %v2686, %v2682
  %v3527 = vpack.c.b16 %v2687, %v2683
  %v3528 = vpack.c.b16 %v2688, %v2684
  %v3529 = vpack.c.b16 %v2689, %v2685
  %v3530 = vpack.c.b16 %v2694, %v2690
  %v3531 = vpack.c.b16 %v2695, %v2691
  %v3532 = vpack.c.b16 %v2696, %v2692
  %v3533 = vpack.c.b16 %v2697, %v2693
  %v3534 = vpack.c.b16 %v2702, %v2698
  %v3535 = vpack.c.b16 %v2703, %v2699
  %v3536 = vpack.c.b16 %v2704, %v2700
  %v3537 = vpack.c.b16 %v2705, %v2701
  %v3538 = vpack.c.b16 %v2710, %v2706
  %v3539 = vpack.c.b16 %v2711, %v2707
  %v3540 = vpack.c.b16 %v2712, %v2708
  %v3541 = vpack.c.b16 %v2713, %v2709
  %v3542 = vpack.c.b16 %v2718, %v2714
  %v3543 = vpack.c.b16 %v2719, %v2715
  %v3544 = vpack.c.b16 %v2720, %v2716
  %v3545 = vpack.c.b16 %v2721, %v2717
  %v3546 = vpack.c.b16 %v2726, %v2722
  %v3547 = vpack.c.b16 %v2727, %v2723
  %v3548 = vpack.c.b16 %v2728, %v2724
  %v3549 = vpack.c.b16 %v2729, %v2725
  %v3550 = vpack.c.b16 %v2734, %v2730
  %v3551 = vpack.c.b16 %v2735, %v2731
  %v3552 = vpack.c.b16 %v2736, %v2732
  %v3553 = vpack.c.b16 %v2737, %v2733
  %v3554 = vpack.c.b16 %v2742, %v2738
  %v3555 = vpack.c.b16 %v2743, %v2739
  %v3556 = vpack.c.b16 %v2744, %v2740
  %v3557 = vpack.c.b16 %v2745, %v2741
  %v3558 = vpack.c.b16 %v2750, %v2746
  %v3559 = vpack.c.b16 %v2751, %v2747
  %v3560 = vpack.c.b16 %v2752, %v2748
  %v3561 = vpack.c.b16 %v2753, %v2749
  %v3562 = vpack.c.b16 %v2758, %v2754
  %v3563 = vpack.c.b16 %v2759, %v2755
  %v3564 = vpack.c.b16 %v2760, %v2756
  %v3565 = vpack.c.b16 %v2761, %v2757
  %v3566 = vpack.c.b16 %v2766, %v2762
  %v3567 = vpack.c.b16 %v2767, %v2763
  %v3568 = vpack.c.b16 %v2768, %v2764
  %v3569 = vpack.c.b16 %v2769, %v2765
  %v3570 = vpack.c.b16 %v2774, %v2770
  %v3571 = vpack.c.b16 %v2775, %v2771
  %v3572 = vpack.c.b16 %v2776, %v2772
  %v3573 = vpack.c.b16 %v2777, %v2773
  %v3574 = vpack.c.b16 %v2782, %v2778
  %v3575 = vpack.c.b16 %v2783, %v2779
  %v3576 = vpack.c.b16 %v2784, %v2780
  %v3577 = vpack.c.b16 %v2785, %v2781
  %v3578 = vpack.c.b16 %v2790, %v2786
  %v3579 = vpack.c.b16 %v2791, %v2787
  %v3580 = vpack.c.b16 %v2792, %v2788
  %v3581 = vpack.c.b16 %v2793, %v2789
  %v3582 = vpack.c.b16 %v2798, %v2794
  %v3583 = vpack.c.b16 %v2799, %v2795
  %v3584 = vpack.c.b16 %v2800, %v2796
  %v3585 = vpack.c.b16 %v2801, %v2797
  %v3586 = vpack.c.b16 %v2806, %v2802
  %v3587 = vpack.c.b16 %v2807, %v2803
  %v3588 = vpack.c.b16 %v2808, %v2804
  %v3589 = vpack.c.b16 %v2809, %v2805
  %v3590 = vpack.c.b16 %v2814, %v2810
  %v3591 = vpack.c.b16 %v2815, %v2811
  %v3592 = vpack.c.b16 %v2816, %v2812
  %v3593 = vpack.c.b16 %v2817, %v2813
  %v3594 = vpack.c.b16 %v2822, %v2818
  %v3595 = vpack.c.b16 %v2823, %v2819
  %v3596 = vpack.c.b16 %v2824, %v2820
  %v3597 = vpack.c.b16 %v2825, %v2821
  %v3598 = vpack.c.b16 %v2830, %v2826
  %v3599 = vpack.c.b16 %v2831, %v2827
  %v3600 = vpack.c.b16 %v2832, %v2828
  %v3601 = vpack.c.b16 %v2833, %v2829
  %v3602 = vpack.c.b16 %v2838, %v2834
  %v3603 = vpack.c.b16 %v2839, %v2835
  %v3604 = vpack.c.b16 %v2840, %v2836
  %v3605 = vpack.c.b16 %v2841, %v2837
  %v3606 = vpack.c.b16 %v2846, %v2842
  %v3607 = vpack.c.b16 %v2847, %v2843
  %v3608 = vpack.c.b16 %v2848, %v2844
  %v3609 = vpack.c.b16 %v2849, %v2845
  %v3610 = vpack.c.b16 %v2854, %v2850
  %v3611 = vpack.c.b16 %v2855, %v2851
  %v3612 = vpack.c.b16 %v2856, %v2852
  %v3613 = vpack.c.b16 %v2857, %v2853
  %v3614 = vpack.c.b16 %v2862, %v2858
  %v3615 = vpack.c.b16 %v2863, %v2859
  %v3616 = vpack.c.b16 %v2864, %v2860
  %v3617 = vpack.c.b16 %v2865, %v2861
  %v3618 = vpack.c.b16 %v2870, %v2866
  %v3619 = vpack.c.b16 %v2871, %v2867
  %v3620 = vpack.c.b16 %v2872, %v2868
  %v3621 = vpack.c.b16 %v2873, %v2869
  %v3622 = vpack.c.b16 %v2878, %v2874
  %v3623 = vpack.c.b16 %v2879, %v2875
  %v3624 = vpack.c.b16 %v2880, %v2876
  %v3625 = vpack.c.b16 %v2881, %v2877
  %v3626 = vpack.c.b16 %v2886, %v2882
  %v3627 = vpack.c.b16 %v2887, %v2883
  %v3628 = vpack.c.b16 %v2888, %v2884
  %v3629 = vpack.c.b16 %v2889, %v2885
  %v3630 = vpack.c.b16 %v2894, %v2890
  %v3631 = vpack.c.b16 %v2895, %v2891
  %v3632 = vpack.c.b16 %v2896, %v2892
  %v3633 = vpack.c.b16 %v2897, %v2893
  %v3634 = vpack.c.b16 %v2902, %v2898
  %v3635 = vpack.c.b16 %v2903, %v2899
  %v3636 = vpack.c.b16 %v2904, %v2900
  %v3637 = vpack.c.b16 %v2905, %v2901
  %v3638 = vpack.c.b16 %v2910, %v2906
  %v3639 = vpack.c.b16 %v2911, %v2907
  %v3640 = vpack.c.b16 %v2912, %v2908
  %v3641 = vpack.c.b16 %v2913, %v2909
  %v3642 = vpack.c.b16 %v2918, %v2914
  %v3643 = vpack.c.b16 %v2919, %v2915
  %v3644 = vpack.c.b16 %v2920, %v2916
  %v3645 = vpack.c.b16 %v2921, %v2917
  %v3646 = vpack.c.b16 %v2926, %v2922
  %v3647 = vpack.c.b16 %v2927, %v2923
  %v3648 = vpack.c.b16 %v2928, %v2924
  %v3649 = vpack.c.b16 %v2929, %v2925
  %v3650 = vpack.c.b16 %v2934, %v2930
  %v3651 = vpack.c.b16 %v2935, %v2931
  %v3652 = vpack.c.b16 %v2936, %v2932
  %v3653 = vpack.c.b16 %v2937, %v2933
  %v3654 = vpack.c.b16 %v2942, %v2938
  %v3655 = vpack.c.b16 %v2943, %v2939
  %v3656 = vpack.c.b16 %v2944, %v2940
  %v3657 = vpack.c.b16 %v2945, %v2941
  %v3658 = vpack.c.b16 %v2950, %v2946
  %v3659 = vpack.c.b16 %v2951, %v2947
  %v3660 = vpack.c.b16 %v2952, %v2948
  %v3661 = vpack.c.b16 %v2953, %v2949
  %v3662 = vpack.c.b16 %v2958, %v2954
  %v3663 = vpack.c.b16 %v2959, %v2955
  %v3664 = vpack.c.b16 %v2960, %v2956
  %v3665 = vpack.c.b16 %v2961, %v2957
  %v3666 = vpack.c.b16 %v2966, %v2962
  %v3667 = vpack.c.b16 %v2967, %v2963
  %v3668 = vpack.c.b16 %v2968, %v2964
  %v3669 = vpack.c.b16 %v2969, %v2965
  %v3670 = vpack.c.b16 %v2974, %v2970
  %v3671 = vpack.c.b16 %v2975, %v2971
  %v3672 = vpack.c.b16 %v2976, %v2972
  %v3673 = vpack.c.b16 %v2977, %v2973
  %v3674 = vpack.c.b16 %v2982, %v2978
  %v3675 = vpack.c.b16 %v2983, %v2979
  %v3676 = vpack.c.b16 %v2984, %v2980
  %v3677 = vpack.c.b16 %v2985, %v2981
  %v3678 = vpack.c.b16 %v2990, %v2986
  %v3679 = vpack.c.b16 %v2991, %v2987
  %v3680 = vpack.c.b16 %v2992, %v2988
  %v3681 = vpack.c.b16 %v2993, %v2989
  %v3682 = vpack.c.b16 %v2998, %v2994
  %v3683 = vpack.c.b16 %v2999, %v2995
  %v3684 = vpack.c.b16 %v3000, %v2996
  %v3685 = vpack.c.b16 %v3001, %v2997
  %v3686 = vpack.c.b16 %v3006, %v3002
  %v3687 = vpack.c.b16 %v3007, %v3003
  %v3688 = vpack.c.b16 %v3008, %v3004
  %v3689 = vpack.c.b16 %v3009, %v3005
  %v3690 = vpack.c.b16 %v3014, %v3010
  %v3691 = vpack.c.b16 %v3015, %v3011
  %v3692 = vpack.c.b16 %v3016, %v3012
  %v3693 = vpack.c.b16 %v3017, %v3013
  %v3694 = vpack.c.b16 %v3022, %v3018
  %v3695 = vpack.c.b16 %v3023, %v3019
  %v3696 = vpack.c.b16 %v3024, %v3020
  %v3697 = vpack.c.b16 %v3025, %v3021
  %v3698 = vpack.c.b16 %v3030, %v3026
  %v3699 = vpack.c.b16 %v3031, %v3027
  %v3700 = vpack.c.b16 %v3032, %v3028
  %v3701 = vpack.c.b16 %v3033, %v3029
  %v3702 = vpack.c.b16 %v3038, %v3034
  %v3703 = vpack.c.b16 %v3039, %v3035
  %v3704 = vpack.c.b16 %v3040, %v3036
  %v3705 = vpack.c.b16 %v3041, %v3037
  %v3706 = vpack.c.b16 %v3046, %v3042
  %v3707 = vpack.c.b16 %v3047, %v3043
  %v3708 = vpack.c.b16 %v3048, %v3044
  %v3709 = vpack.c.b16 %v3049, %v3045
  %v3710 = vpack.c.b16 %v3054, %v3050
  %v3711 = vpack.c.b16 %v3055, %v3051
  %v3712 = vpack.c.b16 %v3056, %v3052
  %v3713 = vpack.c.b16 %v3057, %v3053
  %v3714 = vpack.c.b16 %v3062, %v3058
  %v3715 = vpack.c.b16 %v3063, %v3059
  %v3716 = vpack.c.b16 %v3064, %v3060
  %v3717 = vpack.c.b16 %v3065, %v3061
  %v3718 = vpack.c.b16 %v3070, %v3066
  %v3719 = vpack.c.b16 %v3071, %v3067
  %v3720 = vpack.c.b16 %v3072, %v3068
  %v3721 = vpack.c.b16 %v3073, %v3069
  %v3722 = vpack.c.b16 %v3078, %v3074
  %v3723 = vpack.c.b16 %v3079, %v3075
  %v3724 = vpack.c.b16 %v3080, %v3076
  %v3725 = vpack.c.b16 %v3081, %v3077
  %v3726 = vpack.c.b16 %v3086, %v3082
  %v3727 = vpack.c.b16 %v3087, %v3083
  %v3728 = vpack.c.b16 %v3088, %v3084
  %v3729 = vpack.c.b16 %v3089, %v3085
  %v3730 = vpack.c.b16 %v3094, %v3090
  %v3731 = vpack.c.b16 %v3095, %v3091
  %v3732 = vpack.c.b16 %v3096, %v3092
  %v3733 = vpack.c.b16 %v3097, %v3093
  %v3734 = vpack.c.b16 %v3102, %v3098
  %v3735 = vpack.c.b16 %v3103, %v3099
  %v3736 = vpack.c.b16 %v3104, %v3100
  %v3737 = vpack.c.b16 %v3105, %v3101
  %v3738 = vpack.c.b16 %v3110, %v3106
  %v3739 = vpack.c.b16 %v3111, %v3107
  %v3740 = vpack.c.b16 %v3112, %v3108
  %v3741 = vpack.c.b16 %v3113, %v3109
  %v3742 = vpack.c.b16 %v3118, %v3114
  %v3743 = vpack.c.b16 %v3119, %v3115
  %v3744 = vpack.c.b16 %v3120, %v3116
  %v3745 = vpack.c.b16 %v3121, %v3117
  %v3746 = vpack.c.b16 %v3126, %v3122
  %v3747 = vpack.c.b16 %v3127, %v3123
  %v3748 = vpack.c.b16 %v3128, %v3124
  %v3749 = vpack.c.b16 %v3129, %v3125
  %v3750 = vpack.c.b16 %v3134, %v3130
  %v3751 = vpack.c.b16 %v3135, %v3131
  %v3752 = vpack.c.b16 %v3136, %v3132
  %v3753 = vpack.c.b16 %v3137, %v3133
  %v3754 = vpack.c.b16 %v3142, %v3138
  %v3755 = vpack.c.b16 %v3143, %v3139
  %v3756 = vpack.c.b16 %v3144, %v3140
  %v3757 = vpack.c.b16 %v3145, %v3141
  %v3758 = vpack.c.b16 %v3150, %v3146
  %v3759 = vpack.c.b16 %v3151, %v3147
  %v3760 = vpack.c.b16 %v3152, %v3148
  %v3761 = vpack.c.b16 %v3153, %v3149
  %v3762 = vpack.c.b16 %v3158, %v3154
  %v3763 = vpack.c.b16 %v3159, %v3155
  %v3764 = vpack.c.b16 %v3160, %v3156
  %v3765 = vpack.c.b16 %v3161, %v3157
  %v3766 = vpack.c.b16 %v3166, %v3162
  %v3767 = vpack.c.b16 %v3167, %v3163
  %v3768 = vpack.c.b16 %v3168, %v3164
  %v3769 = vpack.c.b16 %v3169, %v3165
  %v3770 = vpack.c.b16 %v3174, %v3170
  %v3771 = vpack.c.b16 %v3175, %v3171
  %v3772 = vpack.c.b16 %v3176, %v3172
  %v3773 = vpack.c.b16 %v3177, %v3173
  %v3774 = vpack.c.b16 %v3182, %v3178
  %v3775 = vpack.c.b16 %v3183, %v3179
  %v3776 = vpack.c.b16 %v3184, %v3180
  %v3777 = vpack.c.b16 %v3185, %v3181
  %v3778 = vpack.c.b16 %v3190, %v3186
  %v3779 = vpack.c.b16 %v3191, %v3187
  %v3780 = vpack.c.b16 %v3192, %v3188
  %v3781 = vpack.c.b16 %v3193, %v3189
  %v3782 = vpack.c.b16 %v3198, %v3194
  %v3783 = vpack.c.b16 %v3199, %v3195
  %v3784 = vpack.c.b16 %v3200, %v3196
  %v3785 = vpack.c.b16 %v3201, %v3197
  %v3786 = vpack.c.b16 %v3206, %v3202
  %v3787 = vpack.c.b16 %v3207, %v3203
  %v3788 = vpack.c.b16 %v3208, %v3204
  %v3789 = vpack.c.b16 %v3209, %v3205
  %v3790 = vpack.c.b16 %v3214, %v3210
  %v3791 = vpack.c.b16 %v3215, %v3211
  %v3792 = vpack.c.b16 %v3216, %v3212
  %v3793 = vpack.c.b16 %v3217, %v3213
  %v3794 = vpack.c.b16 %v3222, %v3218
  %v3795 = vpack.c.b16 %v3223, %v3219
  %v3796 = vpack.c.b16 %v3224, %v3220
  %v3797 = vpack.c.b16 %v3225, %v3221
  %v3798 = vpack.c.b16 %v3230, %v3226
  %v3799 = vpack.c.b16 %v3231, %v3227
  %v3800 = vpack.c.b16 %v3232, %v3228
  %v3801 = vpack.c.b16 %v3233, %v3229
  %v3802 = vpack.c.b16 %v3238, %v3234
  %v3803 = vpack.c.b16 %v3239, %v3235
  %v3804 = vpack.c.b16 %v3240, %v3236
  %v3805 = vpack.c.b16 %v3241, %v3237
  %v3806 = vpack.c.b16 %v3246, %v3242
  %v3807 = vpack.c.b16 %v3247, %v3243
  %v3808 = vpack.c.b16 %v3248, %v3244
  %v3809 = vpack.c.b16 %v3249, %v3245
  %v3810 = vpack.c.b16 %v3254, %v3250
  %v3811 = vpack.c.b16 %v3255, %v3251
  %v3812 = vpack.c.b16 %v3256, %v3252
  %v3813 = vpack.c.b16 %v3257, %v3253
  %v3814 = vpack.c.b16 %v3262, %v3258
  %v3815 = vpack.c.b16 %v3263, %v3259
  %v3816 = vpack.c.b16 %v3264, %v3260
  %v3817 = vpack.c.b16 %v3265, %v3261
  %v3818 = vpack.c.b16 %v3270, %v3266
  %v3819 = vpack.c.b16 %v3271, %v3267
  %v3820 = vpack.c.b16 %v3272, %v3268
  %v3821 = vpack.c.b16 %v3273, %v3269
  %v3822 = vpack.c.b16 %v3278, %v3274
  %v3823 = vpack.c.b16 %v3279, %v3275
  %v3824 = vpack.c.b16 %v3280, %v3276
  %v3825 = vpack.c.b16 %v3281, %v3277
  %v3826 = vpack.c.b16 %v3286, %v3282
  %v3827 = vpack.c.b16 %v3287, %v3283
  %v3828 = vpack.c.b16 %v3288, %v3284
  %v3829 = vpack.c.b16 %v3289, %v3285
  %v3830 = vpack.c.b16 %v3294, %v3290
  %v3831 = vpack.c.b16 %v3295, %v3291
  %v3832 = vpack.c.b16 %v3296, %v3292
  %v3833 = vpack.c.b16 %v3297, %v3293
  %v3834 = vpack.c.b16 %v3302, %v3298
  %v3835 = vpack.c.b16 %v3303, %v3299
  %v3836 = vpack.c.b16 %v3304, %v3300
  %v3837 = vpack.c.b16 %v3305, %v3301
  %v3838 = vpack.c.b16 %v3310, %v3306
  %v3839 = vpack.c.b16 %v3311, %v3307
  %v3840 = vpack.c.b16 %v3312, %v3308
  %v3841 = vpack.c.b16 %v3313, %v3309
  %v3842 = vpack.c.b16 %v3318, %v3314
  %v3843 = vpack.c.b16 %v3319, %v3315
  %v3844 = vpack.c.b16 %v3320, %v3316
  %v3845 = vpack.c.b16 %v3321, %v3317
  %v3846 = vpack.c.b16 %v3326, %v3322
  %v3847 = vpack.c.b16 %v3327, %v3323
  %v3848 = vpack.c.b16 %v3328, %v3324
  %v3849 = vpack.c.b16 %v3329, %v3325
  %v3850 = vpack.c.b16 %v3334, %v3330
  %v3851 = vpack.c.b16 %v3335, %v3331
  %v3852 = vpack.c.b16 %v3336, %v3332
  %v3853 = vpack.c.b16 %v3337, %v3333
  %v3854 = vpack.c.b16 %v3342, %v3338
  %v3855 = vpack.c.b16 %v3343, %v3339
  %v3856 = vpack.c.b16 %v3344, %v3340
  %v3857 = vpack.c.b16 %v3345, %v3341
  %4370 = vmatpush.bf16.msra.mxu0 %v3374
  %4371 = vmatpush.bf16.msra.mxu0 %v3370
  %4372 = vmatpush.bf16.msra.mxu0 %v3366
  %4373 = vmatpush.bf16.msra.mxu0 %v3362
  %4374 = vmatpush.bf16.msra.mxu0 %v3358
  %4375 = vmatpush.bf16.msra.mxu0 %v3354
  %4376 = vmatpush.bf16.msra.mxu0 %v3350
  %4377 = vmatpush.bf16.msra.mxu0 %v3346
  %4378 = vmatmul.bf16.gmra.mxu0 %v1272
  %v4379 = vpop.f32.mrf.mxu0
  %v4380 = vadd.f32 %v1802, %v4379
  %v4381 = vpop.f32.mrf.mxu0
  %v4382 = vadd.f32 %v1802, %v4381
  %4383 = vdwg.mxu0
  %4384 = vmatpush.bf16.msra.mxu0 %v3406
  %4385 = vmatpush.bf16.msra.mxu0 %v3402
  %4386 = vmatpush.bf16.msra.mxu0 %v3398
  %4387 = vmatpush.bf16.msra.mxu0 %v3394
  %4388 = vmatpush.bf16.msra.mxu0 %v3390
  %4389 = vmatpush.bf16.msra.mxu0 %v3386
  %4390 = vmatpush.bf16.msra.mxu0 %v3382
  %4391 = vmatpush.bf16.msra.mxu0 %v3378
  %4392 = vmatmul.bf16.gmra.mxu0 %v1273
  %v4393 = vpop.f32.mrf.mxu0
  %v4394 = vadd.f32 %v4380, %v4393
  %v4395 = vpop.f32.mrf.mxu0
  %v4396 = vadd.f32 %v4382, %v4395
  %4397 = vdwg.mxu0
  %4398 = vmatpush.bf16.msra.mxu0 %v3438
  %4399 = vmatpush.bf16.msra.mxu0 %v3434
  %4400 = vmatpush.bf16.msra.mxu0 %v3430
  %4401 = vmatpush.bf16.msra.mxu0 %v3426
  %4402 = vmatpush.bf16.msra.mxu0 %v3422
  %4403 = vmatpush.bf16.msra.mxu0 %v3418
  %4404 = vmatpush.bf16.msra.mxu0 %v3414
  %4405 = vmatpush.bf16.msra.mxu0 %v3410
  %4406 = vmatmul.bf16.gmra.mxu0 %v1274
  %v4407 = vpop.f32.mrf.mxu0
  %v4408 = vadd.f32 %v4394, %v4407
  %v4409 = vpop.f32.mrf.mxu0
  %v4410 = vadd.f32 %v4396, %v4409
  %4411 = vdwg.mxu0
  %4412 = vmatpush.bf16.msra.mxu0 %v3470
  %4413 = vmatpush.bf16.msra.mxu0 %v3466
  %4414 = vmatpush.bf16.msra.mxu0 %v3462
  %4415 = vmatpush.bf16.msra.mxu0 %v3458
  %4416 = vmatpush.bf16.msra.mxu0 %v3454
  %4417 = vmatpush.bf16.msra.mxu0 %v3450
  %4418 = vmatpush.bf16.msra.mxu0 %v3446
  %4419 = vmatpush.bf16.msra.mxu0 %v3442
  %4420 = vmatmul.bf16.gmra.mxu0 %v1275
  %v4421 = vpop.f32.mrf.mxu0
  %v4422 = vadd.f32 %v4408, %v4421
  %v4423 = vpop.f32.mrf.mxu0
  %v4424 = vadd.f32 %v4410, %v4423
  %4425 = vdwg.mxu0
  %4426 = vmatpush.bf16.msra.mxu0 %v3502
  %4427 = vmatpush.bf16.msra.mxu0 %v3498
  %4428 = vmatpush.bf16.msra.mxu0 %v3494
  %4429 = vmatpush.bf16.msra.mxu0 %v3490
  %4430 = vmatpush.bf16.msra.mxu0 %v3486
  %4431 = vmatpush.bf16.msra.mxu0 %v3482
  %4432 = vmatpush.bf16.msra.mxu0 %v3478
  %4433 = vmatpush.bf16.msra.mxu0 %v3474
  %4434 = vmatmul.bf16.gmra.mxu0 %v1276
  %v4435 = vpop.f32.mrf.mxu0
  %v4436 = vadd.f32 %v4422, %v4435
  %v4437 = vpop.f32.mrf.mxu0
  %v4438 = vadd.f32 %v4424, %v4437
  %4439 = vdwg.mxu0
  %4440 = vmatpush.bf16.msra.mxu0 %v3534
  %4441 = vmatpush.bf16.msra.mxu0 %v3530
  %4442 = vmatpush.bf16.msra.mxu0 %v3526
  %4443 = vmatpush.bf16.msra.mxu0 %v3522
  %4444 = vmatpush.bf16.msra.mxu0 %v3518
  %4445 = vmatpush.bf16.msra.mxu0 %v3514
  %4446 = vmatpush.bf16.msra.mxu0 %v3510
  %4447 = vmatpush.bf16.msra.mxu0 %v3506
  %4448 = vmatmul.bf16.gmra.mxu0 %v1277
  %v4449 = vpop.f32.mrf.mxu0
  %v4450 = vadd.f32 %v4436, %v4449
  %v4451 = vpop.f32.mrf.mxu0
  %v4452 = vadd.f32 %v4438, %v4451
  %4453 = vdwg.mxu0
  %4454 = vmatpush.bf16.msra.mxu0 %v3566
  %4455 = vmatpush.bf16.msra.mxu0 %v3562
  %4456 = vmatpush.bf16.msra.mxu0 %v3558
  %4457 = vmatpush.bf16.msra.mxu0 %v3554
  %4458 = vmatpush.bf16.msra.mxu0 %v3550
  %4459 = vmatpush.bf16.msra.mxu0 %v3546
  %4460 = vmatpush.bf16.msra.mxu0 %v3542
  %4461 = vmatpush.bf16.msra.mxu0 %v3538
  %4462 = vmatmul.bf16.gmra.mxu0 %v1278
  %v4463 = vpop.f32.mrf.mxu0
  %v4464 = vadd.f32 %v4450, %v4463
  %v4465 = vpop.f32.mrf.mxu0
  %v4466 = vadd.f32 %v4452, %v4465
  %4467 = vdwg.mxu0
  %4468 = vmatpush.bf16.msra.mxu0 %v3598
  %4469 = vmatpush.bf16.msra.mxu0 %v3594
  %4470 = vmatpush.bf16.msra.mxu0 %v3590
  %4471 = vmatpush.bf16.msra.mxu0 %v3586
  %4472 = vmatpush.bf16.msra.mxu0 %v3582
  %4473 = vmatpush.bf16.msra.mxu0 %v3578
  %4474 = vmatpush.bf16.msra.mxu0 %v3574
  %4475 = vmatpush.bf16.msra.mxu0 %v3570
  %4476 = vmatmul.bf16.gmra.mxu0 %v1279
  %v4477 = vpop.f32.mrf.mxu0
  %v4478 = vadd.f32 %v4464, %v4477
  %v4479 = vpop.f32.mrf.mxu0
  %v4480 = vadd.f32 %v4466, %v4479
  %4481 = vdwg.mxu0
  %4482 = vmatpush.bf16.msra.mxu0 %v3630
  %4483 = vmatpush.bf16.msra.mxu0 %v3626
  %4484 = vmatpush.bf16.msra.mxu0 %v3622
  %4485 = vmatpush.bf16.msra.mxu0 %v3618
  %4486 = vmatpush.bf16.msra.mxu0 %v3614
  %4487 = vmatpush.bf16.msra.mxu0 %v3610
  %4488 = vmatpush.bf16.msra.mxu0 %v3606
  %4489 = vmatpush.bf16.msra.mxu0 %v3602
  %4490 = vmatmul.bf16.gmra.mxu0 %v1280
  %v4491 = vpop.f32.mrf.mxu0
  %v4492 = vadd.f32 %v4478, %v4491
  %v4493 = vpop.f32.mrf.mxu0
  %v4494 = vadd.f32 %v4480, %v4493
  %4495 = vdwg.mxu0
  %4496 = vmatpush.bf16.msra.mxu0 %v3662
  %4497 = vmatpush.bf16.msra.mxu0 %v3658
  %4498 = vmatpush.bf16.msra.mxu0 %v3654
  %4499 = vmatpush.bf16.msra.mxu0 %v3650
  %4500 = vmatpush.bf16.msra.mxu0 %v3646
  %4501 = vmatpush.bf16.msra.mxu0 %v3642
  %4502 = vmatpush.bf16.msra.mxu0 %v3638
  %4503 = vmatpush.bf16.msra.mxu0 %v3634
  %4504 = vmatmul.bf16.gmra.mxu0 %v1281
  %v4505 = vpop.f32.mrf.mxu0
  %v4506 = vadd.f32 %v4492, %v4505
  %v4507 = vpop.f32.mrf.mxu0
  %v4508 = vadd.f32 %v4494, %v4507
  %4509 = vdwg.mxu0
  %4510 = vmatpush.bf16.msra.mxu0 %v3694
  %4511 = vmatpush.bf16.msra.mxu0 %v3690
  %4512 = vmatpush.bf16.msra.mxu0 %v3686
  %4513 = vmatpush.bf16.msra.mxu0 %v3682
  %4514 = vmatpush.bf16.msra.mxu0 %v3678
  %4515 = vmatpush.bf16.msra.mxu0 %v3674
  %4516 = vmatpush.bf16.msra.mxu0 %v3670
  %4517 = vmatpush.bf16.msra.mxu0 %v3666
  %4518 = vmatmul.bf16.gmra.mxu0 %v1282
  %v4519 = vpop.f32.mrf.mxu0
  %v4520 = vadd.f32 %v4506, %v4519
  %v4521 = vpop.f32.mrf.mxu0
  %v4522 = vadd.f32 %v4508, %v4521
  %4523 = vdwg.mxu0
  %4524 = vmatpush.bf16.msra.mxu0 %v3726
  %4525 = vmatpush.bf16.msra.mxu0 %v3722
  %4526 = vmatpush.bf16.msra.mxu0 %v3718
  %4527 = vmatpush.bf16.msra.mxu0 %v3714
  %4528 = vmatpush.bf16.msra.mxu0 %v3710
  %4529 = vmatpush.bf16.msra.mxu0 %v3706
  %4530 = vmatpush.bf16.msra.mxu0 %v3702
  %4531 = vmatpush.bf16.msra.mxu0 %v3698
  %4532 = vmatmul.bf16.gmra.mxu0 %v1283
  %v4533 = vpop.f32.mrf.mxu0
  %v4534 = vadd.f32 %v4520, %v4533
  %v4535 = vpop.f32.mrf.mxu0
  %v4536 = vadd.f32 %v4522, %v4535
  %4537 = vdwg.mxu0
  %4538 = vmatpush.bf16.msra.mxu0 %v3758
  %4539 = vmatpush.bf16.msra.mxu0 %v3754
  %4540 = vmatpush.bf16.msra.mxu0 %v3750
  %4541 = vmatpush.bf16.msra.mxu0 %v3746
  %4542 = vmatpush.bf16.msra.mxu0 %v3742
  %4543 = vmatpush.bf16.msra.mxu0 %v3738
  %4544 = vmatpush.bf16.msra.mxu0 %v3734
  %4545 = vmatpush.bf16.msra.mxu0 %v3730
  %4546 = vmatmul.bf16.gmra.mxu0 %v1284
  %v4547 = vpop.f32.mrf.mxu0
  %v4548 = vadd.f32 %v4534, %v4547
  %v4549 = vpop.f32.mrf.mxu0
  %v4550 = vadd.f32 %v4536, %v4549
  %4551 = vdwg.mxu0
  %4552 = vmatpush.bf16.msra.mxu0 %v3790
  %4553 = vmatpush.bf16.msra.mxu0 %v3786
  %4554 = vmatpush.bf16.msra.mxu0 %v3782
  %4555 = vmatpush.bf16.msra.mxu0 %v3778
  %4556 = vmatpush.bf16.msra.mxu0 %v3774
  %4557 = vmatpush.bf16.msra.mxu0 %v3770
  %4558 = vmatpush.bf16.msra.mxu0 %v3766
  %4559 = vmatpush.bf16.msra.mxu0 %v3762
  %4560 = vmatmul.bf16.gmra.mxu0 %v1285
  %v4561 = vpop.f32.mrf.mxu0
  %v4562 = vadd.f32 %v4548, %v4561
  %v4563 = vpop.f32.mrf.mxu0
  %v4564 = vadd.f32 %v4550, %v4563
  %4565 = vdwg.mxu0
  %4566 = vmatpush.bf16.msra.mxu0 %v3822
  %4567 = vmatpush.bf16.msra.mxu0 %v3818
  %4568 = vmatpush.bf16.msra.mxu0 %v3814
  %4569 = vmatpush.bf16.msra.mxu0 %v3810
  %4570 = vmatpush.bf16.msra.mxu0 %v3806
  %4571 = vmatpush.bf16.msra.mxu0 %v3802
  %4572 = vmatpush.bf16.msra.mxu0 %v3798
  %4573 = vmatpush.bf16.msra.mxu0 %v3794
  %4574 = vmatmul.bf16.gmra.mxu0 %v1286
  %v4575 = vpop.f32.mrf.mxu0
  %v4576 = vadd.f32 %v4562, %v4575
  %v4577 = vpop.f32.mrf.mxu0
  %v4578 = vadd.f32 %v4564, %v4577
  %4579 = vdwg.mxu0
  %4580 = vmatpush.bf16.msra.mxu0 %v3854
  %4581 = vmatpush.bf16.msra.mxu0 %v3850
  %4582 = vmatpush.bf16.msra.mxu0 %v3846
  %4583 = vmatpush.bf16.msra.mxu0 %v3842
  %4584 = vmatpush.bf16.msra.mxu0 %v3838
  %4585 = vmatpush.bf16.msra.mxu0 %v3834
  %4586 = vmatpush.bf16.msra.mxu0 %v3830
  %4587 = vmatpush.bf16.msra.mxu0 %v3826
  %4588 = vmatmul.bf16.gmra.mxu0 %v1287
  %v4589 = vpop.f32.mrf.mxu0
  %v4590 = vadd.f32 %v4576, %v4589
  %v4591 = vpop.f32.mrf.mxu0
  %v4592 = vadd.f32 %v4578, %v4591
  %4593 = vdwg.mxu0
  %4594 = vmatpush.bf16.msra.mxu0 %v3375
  %4595 = vmatpush.bf16.msra.mxu0 %v3371
  %4596 = vmatpush.bf16.msra.mxu0 %v3367
  %4597 = vmatpush.bf16.msra.mxu0 %v3363
  %4598 = vmatpush.bf16.msra.mxu0 %v3359
  %4599 = vmatpush.bf16.msra.mxu0 %v3355
  %4600 = vmatpush.bf16.msra.mxu0 %v3351
  %4601 = vmatpush.bf16.msra.mxu0 %v3347
  %4602 = vmatmul.bf16.gmra.mxu0 %v1272
  %v4603 = vpop.f32.mrf.mxu0
  %v4604 = vadd.f32 %v1803, %v4603
  %v4605 = vpop.f32.mrf.mxu0
  %v4606 = vadd.f32 %v1803, %v4605
  %4607 = vdwg.mxu0
  %4608 = vmatpush.bf16.msra.mxu0 %v3407
  %4609 = vmatpush.bf16.msra.mxu0 %v3403
  %4610 = vmatpush.bf16.msra.mxu0 %v3399
  %4611 = vmatpush.bf16.msra.mxu0 %v3395
  %4612 = vmatpush.bf16.msra.mxu0 %v3391
  %4613 = vmatpush.bf16.msra.mxu0 %v3387
  %4614 = vmatpush.bf16.msra.mxu0 %v3383
  %4615 = vmatpush.bf16.msra.mxu0 %v3379
  %4616 = vmatmul.bf16.gmra.mxu0 %v1273
  %v4617 = vpop.f32.mrf.mxu0
  %v4618 = vadd.f32 %v4604, %v4617
  %v4619 = vpop.f32.mrf.mxu0
  %v4620 = vadd.f32 %v4606, %v4619
  %4621 = vdwg.mxu0
  %4622 = vmatpush.bf16.msra.mxu0 %v3439
  %4623 = vmatpush.bf16.msra.mxu0 %v3435
  %4624 = vmatpush.bf16.msra.mxu0 %v3431
  %4625 = vmatpush.bf16.msra.mxu0 %v3427
  %4626 = vmatpush.bf16.msra.mxu0 %v3423
  %4627 = vmatpush.bf16.msra.mxu0 %v3419
  %4628 = vmatpush.bf16.msra.mxu0 %v3415
  %4629 = vmatpush.bf16.msra.mxu0 %v3411
  %4630 = vmatmul.bf16.gmra.mxu0 %v1274
  %v4631 = vpop.f32.mrf.mxu0
  %v4632 = vadd.f32 %v4618, %v4631
  %v4633 = vpop.f32.mrf.mxu0
  %v4634 = vadd.f32 %v4620, %v4633
  %4635 = vdwg.mxu0
  %4636 = vmatpush.bf16.msra.mxu0 %v3471
  %4637 = vmatpush.bf16.msra.mxu0 %v3467
  %4638 = vmatpush.bf16.msra.mxu0 %v3463
  %4639 = vmatpush.bf16.msra.mxu0 %v3459
  %4640 = vmatpush.bf16.msra.mxu0 %v3455
  %4641 = vmatpush.bf16.msra.mxu0 %v3451
  %4642 = vmatpush.bf16.msra.mxu0 %v3447
  %4643 = vmatpush.bf16.msra.mxu0 %v3443
  %4644 = vmatmul.bf16.gmra.mxu0 %v1275
  %v4645 = vpop.f32.mrf.mxu0
  %v4646 = vadd.f32 %v4632, %v4645
  %v4647 = vpop.f32.mrf.mxu0
  %v4648 = vadd.f32 %v4634, %v4647
  %4649 = vdwg.mxu0
  %4650 = vmatpush.bf16.msra.mxu0 %v3503
  %4651 = vmatpush.bf16.msra.mxu0 %v3499
  %4652 = vmatpush.bf16.msra.mxu0 %v3495
  %4653 = vmatpush.bf16.msra.mxu0 %v3491
  %4654 = vmatpush.bf16.msra.mxu0 %v3487
  %4655 = vmatpush.bf16.msra.mxu0 %v3483
  %4656 = vmatpush.bf16.msra.mxu0 %v3479
  %4657 = vmatpush.bf16.msra.mxu0 %v3475
  %4658 = vmatmul.bf16.gmra.mxu0 %v1276
  %v4659 = vpop.f32.mrf.mxu0
  %v4660 = vadd.f32 %v4646, %v4659
  %v4661 = vpop.f32.mrf.mxu0
  %v4662 = vadd.f32 %v4648, %v4661
  %4663 = vdwg.mxu0
  %4664 = vmatpush.bf16.msra.mxu0 %v3535
  %4665 = vmatpush.bf16.msra.mxu0 %v3531
  %4666 = vmatpush.bf16.msra.mxu0 %v3527
  %4667 = vmatpush.bf16.msra.mxu0 %v3523
  %4668 = vmatpush.bf16.msra.mxu0 %v3519
  %4669 = vmatpush.bf16.msra.mxu0 %v3515
  %4670 = vmatpush.bf16.msra.mxu0 %v3511
  %4671 = vmatpush.bf16.msra.mxu0 %v3507
  %4672 = vmatmul.bf16.gmra.mxu0 %v1277
  %v4673 = vpop.f32.mrf.mxu0
  %v4674 = vadd.f32 %v4660, %v4673
  %v4675 = vpop.f32.mrf.mxu0
  %v4676 = vadd.f32 %v4662, %v4675
  %4677 = vdwg.mxu0
  %4678 = vmatpush.bf16.msra.mxu0 %v3567
  %4679 = vmatpush.bf16.msra.mxu0 %v3563
  %4680 = vmatpush.bf16.msra.mxu0 %v3559
  %4681 = vmatpush.bf16.msra.mxu0 %v3555
  %4682 = vmatpush.bf16.msra.mxu0 %v3551
  %4683 = vmatpush.bf16.msra.mxu0 %v3547
  %4684 = vmatpush.bf16.msra.mxu0 %v3543
  %4685 = vmatpush.bf16.msra.mxu0 %v3539
  %4686 = vmatmul.bf16.gmra.mxu0 %v1278
  %v4687 = vpop.f32.mrf.mxu0
  %v4688 = vadd.f32 %v4674, %v4687
  %v4689 = vpop.f32.mrf.mxu0
  %v4690 = vadd.f32 %v4676, %v4689
  %4691 = vdwg.mxu0
  %4692 = vmatpush.bf16.msra.mxu0 %v3599
  %4693 = vmatpush.bf16.msra.mxu0 %v3595
  %4694 = vmatpush.bf16.msra.mxu0 %v3591
  %4695 = vmatpush.bf16.msra.mxu0 %v3587
  %4696 = vmatpush.bf16.msra.mxu0 %v3583
  %4697 = vmatpush.bf16.msra.mxu0 %v3579
  %4698 = vmatpush.bf16.msra.mxu0 %v3575
  %4699 = vmatpush.bf16.msra.mxu0 %v3571
  %4700 = vmatmul.bf16.gmra.mxu0 %v1279
  %v4701 = vpop.f32.mrf.mxu0
  %v4702 = vadd.f32 %v4688, %v4701
  %v4703 = vpop.f32.mrf.mxu0
  %v4704 = vadd.f32 %v4690, %v4703
  %4705 = vdwg.mxu0
  %4706 = vmatpush.bf16.msra.mxu0 %v3631
  %4707 = vmatpush.bf16.msra.mxu0 %v3627
  %4708 = vmatpush.bf16.msra.mxu0 %v3623
  %4709 = vmatpush.bf16.msra.mxu0 %v3619
  %4710 = vmatpush.bf16.msra.mxu0 %v3615
  %4711 = vmatpush.bf16.msra.mxu0 %v3611
  %4712 = vmatpush.bf16.msra.mxu0 %v3607
  %4713 = vmatpush.bf16.msra.mxu0 %v3603
  %4714 = vmatmul.bf16.gmra.mxu0 %v1280
  %v4715 = vpop.f32.mrf.mxu0
  %v4716 = vadd.f32 %v4702, %v4715
  %v4717 = vpop.f32.mrf.mxu0
  %v4718 = vadd.f32 %v4704, %v4717
  %4719 = vdwg.mxu0
  %4720 = vmatpush.bf16.msra.mxu0 %v3663
  %4721 = vmatpush.bf16.msra.mxu0 %v3659
  %4722 = vmatpush.bf16.msra.mxu0 %v3655
  %4723 = vmatpush.bf16.msra.mxu0 %v3651
  %4724 = vmatpush.bf16.msra.mxu0 %v3647
  %4725 = vmatpush.bf16.msra.mxu0 %v3643
  %4726 = vmatpush.bf16.msra.mxu0 %v3639
  %4727 = vmatpush.bf16.msra.mxu0 %v3635
  %4728 = vmatmul.bf16.gmra.mxu0 %v1281
  %v4729 = vpop.f32.mrf.mxu0
  %v4730 = vadd.f32 %v4716, %v4729
  %v4731 = vpop.f32.mrf.mxu0
  %v4732 = vadd.f32 %v4718, %v4731
  %4733 = vdwg.mxu0
  %4734 = vmatpush.bf16.msra.mxu0 %v3695
  %4735 = vmatpush.bf16.msra.mxu0 %v3691
  %4736 = vmatpush.bf16.msra.mxu0 %v3687
  %4737 = vmatpush.bf16.msra.mxu0 %v3683
  %4738 = vmatpush.bf16.msra.mxu0 %v3679
  %4739 = vmatpush.bf16.msra.mxu0 %v3675
  %4740 = vmatpush.bf16.msra.mxu0 %v3671
  %4741 = vmatpush.bf16.msra.mxu0 %v3667
  %4742 = vmatmul.bf16.gmra.mxu0 %v1282
  %v4743 = vpop.f32.mrf.mxu0
  %v4744 = vadd.f32 %v4730, %v4743
  %v4745 = vpop.f32.mrf.mxu0
  %v4746 = vadd.f32 %v4732, %v4745
  %4747 = vdwg.mxu0
  %4748 = vmatpush.bf16.msra.mxu0 %v3727
  %4749 = vmatpush.bf16.msra.mxu0 %v3723
  %4750 = vmatpush.bf16.msra.mxu0 %v3719
  %4751 = vmatpush.bf16.msra.mxu0 %v3715
  %4752 = vmatpush.bf16.msra.mxu0 %v3711
  %4753 = vmatpush.bf16.msra.mxu0 %v3707
  %4754 = vmatpush.bf16.msra.mxu0 %v3703
  %4755 = vmatpush.bf16.msra.mxu0 %v3699
  %4756 = vmatmul.bf16.gmra.mxu0 %v1283
  %v4757 = vpop.f32.mrf.mxu0
  %v4758 = vadd.f32 %v4744, %v4757
  %v4759 = vpop.f32.mrf.mxu0
  %v4760 = vadd.f32 %v4746, %v4759
  %4761 = vdwg.mxu0
  %4762 = vmatpush.bf16.msra.mxu0 %v3759
  %4763 = vmatpush.bf16.msra.mxu0 %v3755
  %4764 = vmatpush.bf16.msra.mxu0 %v3751
  %4765 = vmatpush.bf16.msra.mxu0 %v3747
  %4766 = vmatpush.bf16.msra.mxu0 %v3743
  %4767 = vmatpush.bf16.msra.mxu0 %v3739
  %4768 = vmatpush.bf16.msra.mxu0 %v3735
  %4769 = vmatpush.bf16.msra.mxu0 %v3731
  %4770 = vmatmul.bf16.gmra.mxu0 %v1284
  %v4771 = vpop.f32.mrf.mxu0
  %v4772 = vadd.f32 %v4758, %v4771
  %v4773 = vpop.f32.mrf.mxu0
  %v4774 = vadd.f32 %v4760, %v4773
  %4775 = vdwg.mxu0
  %4776 = vmatpush.bf16.msra.mxu0 %v3791
  %4777 = vmatpush.bf16.msra.mxu0 %v3787
  %4778 = vmatpush.bf16.msra.mxu0 %v3783
  %4779 = vmatpush.bf16.msra.mxu0 %v3779
  %4780 = vmatpush.bf16.msra.mxu0 %v3775
  %4781 = vmatpush.bf16.msra.mxu0 %v3771
  %4782 = vmatpush.bf16.msra.mxu0 %v3767
  %4783 = vmatpush.bf16.msra.mxu0 %v3763
  %4784 = vmatmul.bf16.gmra.mxu0 %v1285
  %v4785 = vpop.f32.mrf.mxu0
  %v4786 = vadd.f32 %v4772, %v4785
  %v4787 = vpop.f32.mrf.mxu0
  %v4788 = vadd.f32 %v4774, %v4787
  %4789 = vdwg.mxu0
  %4790 = vmatpush.bf16.msra.mxu0 %v3823
  %4791 = vmatpush.bf16.msra.mxu0 %v3819
  %4792 = vmatpush.bf16.msra.mxu0 %v3815
  %4793 = vmatpush.bf16.msra.mxu0 %v3811
  %4794 = vmatpush.bf16.msra.mxu0 %v3807
  %4795 = vmatpush.bf16.msra.mxu0 %v3803
  %4796 = vmatpush.bf16.msra.mxu0 %v3799
  %4797 = vmatpush.bf16.msra.mxu0 %v3795
  %4798 = vmatmul.bf16.gmra.mxu0 %v1286
  %v4799 = vpop.f32.mrf.mxu0
  %v4800 = vadd.f32 %v4786, %v4799
  %v4801 = vpop.f32.mrf.mxu0
  %v4802 = vadd.f32 %v4788, %v4801
  %4803 = vdwg.mxu0
  %4804 = vmatpush.bf16.msra.mxu0 %v3855
  %4805 = vmatpush.bf16.msra.mxu0 %v3851
  %4806 = vmatpush.bf16.msra.mxu0 %v3847
  %4807 = vmatpush.bf16.msra.mxu0 %v3843
  %4808 = vmatpush.bf16.msra.mxu0 %v3839
  %4809 = vmatpush.bf16.msra.mxu0 %v3835
  %4810 = vmatpush.bf16.msra.mxu0 %v3831
  %4811 = vmatpush.bf16.msra.mxu0 %v3827
  %4812 = vmatmul.bf16.gmra.mxu0 %v1287
  %v4813 = vpop.f32.mrf.mxu0
  %v4814 = vadd.f32 %v4800, %v4813
  %v4815 = vpop.f32.mrf.mxu0
  %v4816 = vadd.f32 %v4802, %v4815
  %4817 = vdwg.mxu0
  %4818 = vmatpush.bf16.msra.mxu0 %v3376
  %4819 = vmatpush.bf16.msra.mxu0 %v3372
  %4820 = vmatpush.bf16.msra.mxu0 %v3368
  %4821 = vmatpush.bf16.msra.mxu0 %v3364
  %4822 = vmatpush.bf16.msra.mxu0 %v3360
  %4823 = vmatpush.bf16.msra.mxu0 %v3356
  %4824 = vmatpush.bf16.msra.mxu0 %v3352
  %4825 = vmatpush.bf16.msra.mxu0 %v3348
  %4826 = vmatmul.bf16.gmra.mxu0 %v1272
  %v4827 = vpop.f32.mrf.mxu0
  %v4828 = vadd.f32 %v1804, %v4827
  %v4829 = vpop.f32.mrf.mxu0
  %v4830 = vadd.f32 %v1804, %v4829
  %4831 = vdwg.mxu0
  %4832 = vmatpush.bf16.msra.mxu0 %v3408
  %4833 = vmatpush.bf16.msra.mxu0 %v3404
  %4834 = vmatpush.bf16.msra.mxu0 %v3400
  %4835 = vmatpush.bf16.msra.mxu0 %v3396
  %4836 = vmatpush.bf16.msra.mxu0 %v3392
  %4837 = vmatpush.bf16.msra.mxu0 %v3388
  %4838 = vmatpush.bf16.msra.mxu0 %v3384
  %4839 = vmatpush.bf16.msra.mxu0 %v3380
  %4840 = vmatmul.bf16.gmra.mxu0 %v1273
  %v4841 = vpop.f32.mrf.mxu0
  %v4842 = vadd.f32 %v4828, %v4841
  %v4843 = vpop.f32.mrf.mxu0
  %v4844 = vadd.f32 %v4830, %v4843
  %4845 = vdwg.mxu0
  %4846 = vmatpush.bf16.msra.mxu0 %v3440
  %4847 = vmatpush.bf16.msra.mxu0 %v3436
  %4848 = vmatpush.bf16.msra.mxu0 %v3432
  %4849 = vmatpush.bf16.msra.mxu0 %v3428
  %4850 = vmatpush.bf16.msra.mxu0 %v3424
  %4851 = vmatpush.bf16.msra.mxu0 %v3420
  %4852 = vmatpush.bf16.msra.mxu0 %v3416
  %4853 = vmatpush.bf16.msra.mxu0 %v3412
  %4854 = vmatmul.bf16.gmra.mxu0 %v1274
  %v4855 = vpop.f32.mrf.mxu0
  %v4856 = vadd.f32 %v4842, %v4855
  %v4857 = vpop.f32.mrf.mxu0
  %v4858 = vadd.f32 %v4844, %v4857
  %4859 = vdwg.mxu0
  %4860 = vmatpush.bf16.msra.mxu0 %v3472
  %4861 = vmatpush.bf16.msra.mxu0 %v3468
  %4862 = vmatpush.bf16.msra.mxu0 %v3464
  %4863 = vmatpush.bf16.msra.mxu0 %v3460
  %4864 = vmatpush.bf16.msra.mxu0 %v3456
  %4865 = vmatpush.bf16.msra.mxu0 %v3452
  %4866 = vmatpush.bf16.msra.mxu0 %v3448
  %4867 = vmatpush.bf16.msra.mxu0 %v3444
  %4868 = vmatmul.bf16.gmra.mxu0 %v1275
  %v4869 = vpop.f32.mrf.mxu0
  %v4870 = vadd.f32 %v4856, %v4869
  %v4871 = vpop.f32.mrf.mxu0
  %v4872 = vadd.f32 %v4858, %v4871
  %4873 = vdwg.mxu0
  %4874 = vmatpush.bf16.msra.mxu0 %v3504
  %4875 = vmatpush.bf16.msra.mxu0 %v3500
  %4876 = vmatpush.bf16.msra.mxu0 %v3496
  %4877 = vmatpush.bf16.msra.mxu0 %v3492
  %4878 = vmatpush.bf16.msra.mxu0 %v3488
  %4879 = vmatpush.bf16.msra.mxu0 %v3484
  %4880 = vmatpush.bf16.msra.mxu0 %v3480
  %4881 = vmatpush.bf16.msra.mxu0 %v3476
  %4882 = vmatmul.bf16.gmra.mxu0 %v1276
  %v4883 = vpop.f32.mrf.mxu0
  %v4884 = vadd.f32 %v4870, %v4883
  %v4885 = vpop.f32.mrf.mxu0
  %v4886 = vadd.f32 %v4872, %v4885
  %4887 = vdwg.mxu0
  %4888 = vmatpush.bf16.msra.mxu0 %v3536
  %4889 = vmatpush.bf16.msra.mxu0 %v3532
  %4890 = vmatpush.bf16.msra.mxu0 %v3528
  %4891 = vmatpush.bf16.msra.mxu0 %v3524
  %4892 = vmatpush.bf16.msra.mxu0 %v3520
  %4893 = vmatpush.bf16.msra.mxu0 %v3516
  %4894 = vmatpush.bf16.msra.mxu0 %v3512
  %4895 = vmatpush.bf16.msra.mxu0 %v3508
  %4896 = vmatmul.bf16.gmra.mxu0 %v1277
  %v4897 = vpop.f32.mrf.mxu0
  %v4898 = vadd.f32 %v4884, %v4897
  %v4899 = vpop.f32.mrf.mxu0
  %v4900 = vadd.f32 %v4886, %v4899
  %4901 = vdwg.mxu0
  %4902 = vmatpush.bf16.msra.mxu0 %v3568
  %4903 = vmatpush.bf16.msra.mxu0 %v3564
  %4904 = vmatpush.bf16.msra.mxu0 %v3560
  %4905 = vmatpush.bf16.msra.mxu0 %v3556
  %4906 = vmatpush.bf16.msra.mxu0 %v3552
  %4907 = vmatpush.bf16.msra.mxu0 %v3548
  %4908 = vmatpush.bf16.msra.mxu0 %v3544
  %4909 = vmatpush.bf16.msra.mxu0 %v3540
  %4910 = vmatmul.bf16.gmra.mxu0 %v1278
  %v4911 = vpop.f32.mrf.mxu0
  %v4912 = vadd.f32 %v4898, %v4911
  %v4913 = vpop.f32.mrf.mxu0
  %v4914 = vadd.f32 %v4900, %v4913
  %4915 = vdwg.mxu0
  %4916 = vmatpush.bf16.msra.mxu0 %v3600
  %4917 = vmatpush.bf16.msra.mxu0 %v3596
  %4918 = vmatpush.bf16.msra.mxu0 %v3592
  %4919 = vmatpush.bf16.msra.mxu0 %v3588
  %4920 = vmatpush.bf16.msra.mxu0 %v3584
  %4921 = vmatpush.bf16.msra.mxu0 %v3580
  %4922 = vmatpush.bf16.msra.mxu0 %v3576
  %4923 = vmatpush.bf16.msra.mxu0 %v3572
  %4924 = vmatmul.bf16.gmra.mxu0 %v1279
  %v4925 = vpop.f32.mrf.mxu0
  %v4926 = vadd.f32 %v4912, %v4925
  %v4927 = vpop.f32.mrf.mxu0
  %v4928 = vadd.f32 %v4914, %v4927
  %4929 = vdwg.mxu0
  %4930 = vmatpush.bf16.msra.mxu0 %v3632
  %4931 = vmatpush.bf16.msra.mxu0 %v3628
  %4932 = vmatpush.bf16.msra.mxu0 %v3624
  %4933 = vmatpush.bf16.msra.mxu0 %v3620
  %4934 = vmatpush.bf16.msra.mxu0 %v3616
  %4935 = vmatpush.bf16.msra.mxu0 %v3612
  %4936 = vmatpush.bf16.msra.mxu0 %v3608
  %4937 = vmatpush.bf16.msra.mxu0 %v3604
  %4938 = vmatmul.bf16.gmra.mxu0 %v1280
  %v4939 = vpop.f32.mrf.mxu0
  %v4940 = vadd.f32 %v4926, %v4939
  %v4941 = vpop.f32.mrf.mxu0
  %v4942 = vadd.f32 %v4928, %v4941
  %4943 = vdwg.mxu0
  %4944 = vmatpush.bf16.msra.mxu0 %v3664
  %4945 = vmatpush.bf16.msra.mxu0 %v3660
  %4946 = vmatpush.bf16.msra.mxu0 %v3656
  %4947 = vmatpush.bf16.msra.mxu0 %v3652
  %4948 = vmatpush.bf16.msra.mxu0 %v3648
  %4949 = vmatpush.bf16.msra.mxu0 %v3644
  %4950 = vmatpush.bf16.msra.mxu0 %v3640
  %4951 = vmatpush.bf16.msra.mxu0 %v3636
  %4952 = vmatmul.bf16.gmra.mxu0 %v1281
  %v4953 = vpop.f32.mrf.mxu0
  %v4954 = vadd.f32 %v4940, %v4953
  %v4955 = vpop.f32.mrf.mxu0
  %v4956 = vadd.f32 %v4942, %v4955
  %4957 = vdwg.mxu0
  %4958 = vmatpush.bf16.msra.mxu0 %v3696
  %4959 = vmatpush.bf16.msra.mxu0 %v3692
  %4960 = vmatpush.bf16.msra.mxu0 %v3688
  %4961 = vmatpush.bf16.msra.mxu0 %v3684
  %4962 = vmatpush.bf16.msra.mxu0 %v3680
  %4963 = vmatpush.bf16.msra.mxu0 %v3676
  %4964 = vmatpush.bf16.msra.mxu0 %v3672
  %4965 = vmatpush.bf16.msra.mxu0 %v3668
  %4966 = vmatmul.bf16.gmra.mxu0 %v1282
  %v4967 = vpop.f32.mrf.mxu0
  %v4968 = vadd.f32 %v4954, %v4967
  %v4969 = vpop.f32.mrf.mxu0
  %v4970 = vadd.f32 %v4956, %v4969
  %4971 = vdwg.mxu0
  %4972 = vmatpush.bf16.msra.mxu0 %v3728
  %4973 = vmatpush.bf16.msra.mxu0 %v3724
  %4974 = vmatpush.bf16.msra.mxu0 %v3720
  %4975 = vmatpush.bf16.msra.mxu0 %v3716
  %4976 = vmatpush.bf16.msra.mxu0 %v3712
  %4977 = vmatpush.bf16.msra.mxu0 %v3708
  %4978 = vmatpush.bf16.msra.mxu0 %v3704
  %4979 = vmatpush.bf16.msra.mxu0 %v3700
  %4980 = vmatmul.bf16.gmra.mxu0 %v1283
  %v4981 = vpop.f32.mrf.mxu0
  %v4982 = vadd.f32 %v4968, %v4981
  %v4983 = vpop.f32.mrf.mxu0
  %v4984 = vadd.f32 %v4970, %v4983
  %4985 = vdwg.mxu0
  %4986 = vmatpush.bf16.msra.mxu0 %v3760
  %4987 = vmatpush.bf16.msra.mxu0 %v3756
  %4988 = vmatpush.bf16.msra.mxu0 %v3752
  %4989 = vmatpush.bf16.msra.mxu0 %v3748
  %4990 = vmatpush.bf16.msra.mxu0 %v3744
  %4991 = vmatpush.bf16.msra.mxu0 %v3740
  %4992 = vmatpush.bf16.msra.mxu0 %v3736
  %4993 = vmatpush.bf16.msra.mxu0 %v3732
  %4994 = vmatmul.bf16.gmra.mxu0 %v1284
  %v4995 = vpop.f32.mrf.mxu0
  %v4996 = vadd.f32 %v4982, %v4995
  %v4997 = vpop.f32.mrf.mxu0
  %v4998 = vadd.f32 %v4984, %v4997
  %4999 = vdwg.mxu0
  %5000 = vmatpush.bf16.msra.mxu0 %v3792
  %5001 = vmatpush.bf16.msra.mxu0 %v3788
  %5002 = vmatpush.bf16.msra.mxu0 %v3784
  %5003 = vmatpush.bf16.msra.mxu0 %v3780
  %5004 = vmatpush.bf16.msra.mxu0 %v3776
  %5005 = vmatpush.bf16.msra.mxu0 %v3772
  %5006 = vmatpush.bf16.msra.mxu0 %v3768
  %5007 = vmatpush.bf16.msra.mxu0 %v3764
  %5008 = vmatmul.bf16.gmra.mxu0 %v1285
  %v5009 = vpop.f32.mrf.mxu0
  %v5010 = vadd.f32 %v4996, %v5009
  %v5011 = vpop.f32.mrf.mxu0
  %v5012 = vadd.f32 %v4998, %v5011
  %5013 = vdwg.mxu0
  %5014 = vmatpush.bf16.msra.mxu0 %v3824
  %5015 = vmatpush.bf16.msra.mxu0 %v3820
  %5016 = vmatpush.bf16.msra.mxu0 %v3816
  %5017 = vmatpush.bf16.msra.mxu0 %v3812
  %5018 = vmatpush.bf16.msra.mxu0 %v3808
  %5019 = vmatpush.bf16.msra.mxu0 %v3804
  %5020 = vmatpush.bf16.msra.mxu0 %v3800
  %5021 = vmatpush.bf16.msra.mxu0 %v3796
  %5022 = vmatmul.bf16.gmra.mxu0 %v1286
  %v5023 = vpop.f32.mrf.mxu0
  %v5024 = vadd.f32 %v5010, %v5023
  %v5025 = vpop.f32.mrf.mxu0
  %v5026 = vadd.f32 %v5012, %v5025
  %5027 = vdwg.mxu0
  %5028 = vmatpush.bf16.msra.mxu0 %v3856
  %5029 = vmatpush.bf16.msra.mxu0 %v3852
  %5030 = vmatpush.bf16.msra.mxu0 %v3848
  %5031 = vmatpush.bf16.msra.mxu0 %v3844
  %5032 = vmatpush.bf16.msra.mxu0 %v3840
  %5033 = vmatpush.bf16.msra.mxu0 %v3836
  %5034 = vmatpush.bf16.msra.mxu0 %v3832
  %5035 = vmatpush.bf16.msra.mxu0 %v3828
  %5036 = vmatmul.bf16.gmra.mxu0 %v1287
  %v5037 = vpop.f32.mrf.mxu0
  %v5038 = vadd.f32 %v5024, %v5037
  %v5039 = vpop.f32.mrf.mxu0
  %v5040 = vadd.f32 %v5026, %v5039
  %5041 = vdwg.mxu0
  %5042 = vmatpush.bf16.msra.mxu0 %v3377
  %5043 = vmatpush.bf16.msra.mxu0 %v3373
  %5044 = vmatpush.bf16.msra.mxu0 %v3369
  %5045 = vmatpush.bf16.msra.mxu0 %v3365
  %5046 = vmatpush.bf16.msra.mxu0 %v3361
  %5047 = vmatpush.bf16.msra.mxu0 %v3357
  %5048 = vmatpush.bf16.msra.mxu0 %v3353
  %5049 = vmatpush.bf16.msra.mxu0 %v3349
  %5050 = vmatmul.bf16.gmra.mxu0 %v1272
  %v5051 = vpop.f32.mrf.mxu0
  %v5052 = vadd.f32 %v1805, %v5051
  %v5053 = vpop.f32.mrf.mxu0
  %v5054 = vadd.f32 %v1805, %v5053
  %5055 = vdwg.mxu0
  %5056 = vmatpush.bf16.msra.mxu0 %v3409
  %5057 = vmatpush.bf16.msra.mxu0 %v3405
  %5058 = vmatpush.bf16.msra.mxu0 %v3401
  %5059 = vmatpush.bf16.msra.mxu0 %v3397
  %5060 = vmatpush.bf16.msra.mxu0 %v3393
  %5061 = vmatpush.bf16.msra.mxu0 %v3389
  %5062 = vmatpush.bf16.msra.mxu0 %v3385
  %5063 = vmatpush.bf16.msra.mxu0 %v3381
  %5064 = vmatmul.bf16.gmra.mxu0 %v1273
  %v5065 = vpop.f32.mrf.mxu0
  %v5066 = vadd.f32 %v5052, %v5065
  %v5067 = vpop.f32.mrf.mxu0
  %v5068 = vadd.f32 %v5054, %v5067
  %5069 = vdwg.mxu0
  %5070 = vmatpush.bf16.msra.mxu0 %v3441
  %5071 = vmatpush.bf16.msra.mxu0 %v3437
  %5072 = vmatpush.bf16.msra.mxu0 %v3433
  %5073 = vmatpush.bf16.msra.mxu0 %v3429
  %5074 = vmatpush.bf16.msra.mxu0 %v3425
  %5075 = vmatpush.bf16.msra.mxu0 %v3421
  %5076 = vmatpush.bf16.msra.mxu0 %v3417
  %5077 = vmatpush.bf16.msra.mxu0 %v3413
  %5078 = vmatmul.bf16.gmra.mxu0 %v1274
  %v5079 = vpop.f32.mrf.mxu0
  %v5080 = vadd.f32 %v5066, %v5079
  %v5081 = vpop.f32.mrf.mxu0
  %v5082 = vadd.f32 %v5068, %v5081
  %5083 = vdwg.mxu0
  %5084 = vmatpush.bf16.msra.mxu0 %v3473
  %5085 = vmatpush.bf16.msra.mxu0 %v3469
  %5086 = vmatpush.bf16.msra.mxu0 %v3465
  %5087 = vmatpush.bf16.msra.mxu0 %v3461
  %5088 = vmatpush.bf16.msra.mxu0 %v3457
  %5089 = vmatpush.bf16.msra.mxu0 %v3453
  %5090 = vmatpush.bf16.msra.mxu0 %v3449
  %5091 = vmatpush.bf16.msra.mxu0 %v3445
  %5092 = vmatmul.bf16.gmra.mxu0 %v1275
  %v5093 = vpop.f32.mrf.mxu0
  %v5094 = vadd.f32 %v5080, %v5093
  %v5095 = vpop.f32.mrf.mxu0
  %v5096 = vadd.f32 %v5082, %v5095
  %5097 = vdwg.mxu0
  %5098 = vmatpush.bf16.msra.mxu0 %v3505
  %5099 = vmatpush.bf16.msra.mxu0 %v3501
  %5100 = vmatpush.bf16.msra.mxu0 %v3497
  %5101 = vmatpush.bf16.msra.mxu0 %v3493
  %5102 = vmatpush.bf16.msra.mxu0 %v3489
  %5103 = vmatpush.bf16.msra.mxu0 %v3485
  %5104 = vmatpush.bf16.msra.mxu0 %v3481
  %5105 = vmatpush.bf16.msra.mxu0 %v3477
  %5106 = vmatmul.bf16.gmra.mxu0 %v1276
  %v5107 = vpop.f32.mrf.mxu0
  %v5108 = vadd.f32 %v5094, %v5107
  %v5109 = vpop.f32.mrf.mxu0
  %v5110 = vadd.f32 %v5096, %v5109
  %5111 = vdwg.mxu0
  %5112 = vmatpush.bf16.msra.mxu0 %v3537
  %5113 = vmatpush.bf16.msra.mxu0 %v3533
  %5114 = vmatpush.bf16.msra.mxu0 %v3529
  %5115 = vmatpush.bf16.msra.mxu0 %v3525
  %5116 = vmatpush.bf16.msra.mxu0 %v3521
  %5117 = vmatpush.bf16.msra.mxu0 %v3517
  %5118 = vmatpush.bf16.msra.mxu0 %v3513
  %5119 = vmatpush.bf16.msra.mxu0 %v3509
  %5120 = vmatmul.bf16.gmra.mxu0 %v1277
  %v5121 = vpop.f32.mrf.mxu0
  %v5122 = vadd.f32 %v5108, %v5121
  %v5123 = vpop.f32.mrf.mxu0
  %v5124 = vadd.f32 %v5110, %v5123
  %5125 = vdwg.mxu0
  %5126 = vmatpush.bf16.msra.mxu0 %v3569
  %5127 = vmatpush.bf16.msra.mxu0 %v3565
  %5128 = vmatpush.bf16.msra.mxu0 %v3561
  %5129 = vmatpush.bf16.msra.mxu0 %v3557
  %5130 = vmatpush.bf16.msra.mxu0 %v3553
  %5131 = vmatpush.bf16.msra.mxu0 %v3549
  %5132 = vmatpush.bf16.msra.mxu0 %v3545
  %5133 = vmatpush.bf16.msra.mxu0 %v3541
  %5134 = vmatmul.bf16.gmra.mxu0 %v1278
  %v5135 = vpop.f32.mrf.mxu0
  %v5136 = vadd.f32 %v5122, %v5135
  %v5137 = vpop.f32.mrf.mxu0
  %v5138 = vadd.f32 %v5124, %v5137
  %5139 = vdwg.mxu0
  %5140 = vmatpush.bf16.msra.mxu0 %v3601
  %5141 = vmatpush.bf16.msra.mxu0 %v3597
  %5142 = vmatpush.bf16.msra.mxu0 %v3593
  %5143 = vmatpush.bf16.msra.mxu0 %v3589
  %5144 = vmatpush.bf16.msra.mxu0 %v3585
  %5145 = vmatpush.bf16.msra.mxu0 %v3581
  %5146 = vmatpush.bf16.msra.mxu0 %v3577
  %5147 = vmatpush.bf16.msra.mxu0 %v3573
  %5148 = vmatmul.bf16.gmra.mxu0 %v1279
  %v5149 = vpop.f32.mrf.mxu0
  %v5150 = vadd.f32 %v5136, %v5149
  %v5151 = vpop.f32.mrf.mxu0
  %v5152 = vadd.f32 %v5138, %v5151
  %5153 = vdwg.mxu0
  %5154 = vmatpush.bf16.msra.mxu0 %v3633
  %5155 = vmatpush.bf16.msra.mxu0 %v3629
  %5156 = vmatpush.bf16.msra.mxu0 %v3625
  %5157 = vmatpush.bf16.msra.mxu0 %v3621
  %5158 = vmatpush.bf16.msra.mxu0 %v3617
  %5159 = vmatpush.bf16.msra.mxu0 %v3613
  %5160 = vmatpush.bf16.msra.mxu0 %v3609
  %5161 = vmatpush.bf16.msra.mxu0 %v3605
  %5162 = vmatmul.bf16.gmra.mxu0 %v1280
  %v5163 = vpop.f32.mrf.mxu0
  %v5164 = vadd.f32 %v5150, %v5163
  %v5165 = vpop.f32.mrf.mxu0
  %v5166 = vadd.f32 %v5152, %v5165
  %5167 = vdwg.mxu0
  %5168 = vmatpush.bf16.msra.mxu0 %v3665
  %5169 = vmatpush.bf16.msra.mxu0 %v3661
  %5170 = vmatpush.bf16.msra.mxu0 %v3657
  %5171 = vmatpush.bf16.msra.mxu0 %v3653
  %5172 = vmatpush.bf16.msra.mxu0 %v3649
  %5173 = vmatpush.bf16.msra.mxu0 %v3645
  %5174 = vmatpush.bf16.msra.mxu0 %v3641
  %5175 = vmatpush.bf16.msra.mxu0 %v3637
  %5176 = vmatmul.bf16.gmra.mxu0 %v1281
  %v5177 = vpop.f32.mrf.mxu0
  %v5178 = vadd.f32 %v5164, %v5177
  %v5179 = vpop.f32.mrf.mxu0
  %v5180 = vadd.f32 %v5166, %v5179
  %5181 = vdwg.mxu0
  %5182 = vmatpush.bf16.msra.mxu0 %v3697
  %5183 = vmatpush.bf16.msra.mxu0 %v3693
  %5184 = vmatpush.bf16.msra.mxu0 %v3689
  %5185 = vmatpush.bf16.msra.mxu0 %v3685
  %5186 = vmatpush.bf16.msra.mxu0 %v3681
  %5187 = vmatpush.bf16.msra.mxu0 %v3677
  %5188 = vmatpush.bf16.msra.mxu0 %v3673
  %5189 = vmatpush.bf16.msra.mxu0 %v3669
  %5190 = vmatmul.bf16.gmra.mxu0 %v1282
  %v5191 = vpop.f32.mrf.mxu0
  %v5192 = vadd.f32 %v5178, %v5191
  %v5193 = vpop.f32.mrf.mxu0
  %v5194 = vadd.f32 %v5180, %v5193
  %5195 = vdwg.mxu0
  %5196 = vmatpush.bf16.msra.mxu0 %v3729
  %5197 = vmatpush.bf16.msra.mxu0 %v3725
  %5198 = vmatpush.bf16.msra.mxu0 %v3721
  %5199 = vmatpush.bf16.msra.mxu0 %v3717
  %5200 = vmatpush.bf16.msra.mxu0 %v3713
  %5201 = vmatpush.bf16.msra.mxu0 %v3709
  %5202 = vmatpush.bf16.msra.mxu0 %v3705
  %5203 = vmatpush.bf16.msra.mxu0 %v3701
  %5204 = vmatmul.bf16.gmra.mxu0 %v1283
  %v5205 = vpop.f32.mrf.mxu0
  %v5206 = vadd.f32 %v5192, %v5205
  %v5207 = vpop.f32.mrf.mxu0
  %v5208 = vadd.f32 %v5194, %v5207
  %5209 = vdwg.mxu0
  %5210 = vmatpush.bf16.msra.mxu0 %v3761
  %5211 = vmatpush.bf16.msra.mxu0 %v3757
  %5212 = vmatpush.bf16.msra.mxu0 %v3753
  %5213 = vmatpush.bf16.msra.mxu0 %v3749
  %5214 = vmatpush.bf16.msra.mxu0 %v3745
  %5215 = vmatpush.bf16.msra.mxu0 %v3741
  %5216 = vmatpush.bf16.msra.mxu0 %v3737
  %5217 = vmatpush.bf16.msra.mxu0 %v3733
  %5218 = vmatmul.bf16.gmra.mxu0 %v1284
  %v5219 = vpop.f32.mrf.mxu0
  %v5220 = vadd.f32 %v5206, %v5219
  %v5221 = vpop.f32.mrf.mxu0
  %v5222 = vadd.f32 %v5208, %v5221
  %5223 = vdwg.mxu0
  %5224 = vmatpush.bf16.msra.mxu0 %v3793
  %5225 = vmatpush.bf16.msra.mxu0 %v3789
  %5226 = vmatpush.bf16.msra.mxu0 %v3785
  %5227 = vmatpush.bf16.msra.mxu0 %v3781
  %5228 = vmatpush.bf16.msra.mxu0 %v3777
  %5229 = vmatpush.bf16.msra.mxu0 %v3773
  %5230 = vmatpush.bf16.msra.mxu0 %v3769
  %5231 = vmatpush.bf16.msra.mxu0 %v3765
  %5232 = vmatmul.bf16.gmra.mxu0 %v1285
  %v5233 = vpop.f32.mrf.mxu0
  %v5234 = vadd.f32 %v5220, %v5233
  %v5235 = vpop.f32.mrf.mxu0
  %v5236 = vadd.f32 %v5222, %v5235
  %5237 = vdwg.mxu0
  %5238 = vmatpush.bf16.msra.mxu0 %v3825
  %5239 = vmatpush.bf16.msra.mxu0 %v3821
  %5240 = vmatpush.bf16.msra.mxu0 %v3817
  %5241 = vmatpush.bf16.msra.mxu0 %v3813
  %5242 = vmatpush.bf16.msra.mxu0 %v3809
  %5243 = vmatpush.bf16.msra.mxu0 %v3805
  %5244 = vmatpush.bf16.msra.mxu0 %v3801
  %5245 = vmatpush.bf16.msra.mxu0 %v3797
  %5246 = vmatmul.bf16.gmra.mxu0 %v1286
  %v5247 = vpop.f32.mrf.mxu0
  %v5248 = vadd.f32 %v5234, %v5247
  %v5249 = vpop.f32.mrf.mxu0
  %v5250 = vadd.f32 %v5236, %v5249
  %5251 = vdwg.mxu0
  %5252 = vmatpush.bf16.msra.mxu0 %v3857
  %5253 = vmatpush.bf16.msra.mxu0 %v3853
  %5254 = vmatpush.bf16.msra.mxu0 %v3849
  %5255 = vmatpush.bf16.msra.mxu0 %v3845
  %5256 = vmatpush.bf16.msra.mxu0 %v3841
  %5257 = vmatpush.bf16.msra.mxu0 %v3837
  %5258 = vmatpush.bf16.msra.mxu0 %v3833
  %5259 = vmatpush.bf16.msra.mxu0 %v3829
  %5260 = vmatmul.bf16.gmra.mxu0 %v1287
  %v5261 = vpop.f32.mrf.mxu0
  %v5262 = vadd.f32 %v5248, %v5261
  %v5263 = vpop.f32.mrf.mxu0
  %v5264 = vadd.f32 %v5250, %v5263
  %5265 = vdwg.mxu0
  %5266 = vst [vmem:[%s4] sm:$0xff] %v4590
  %5267 = vst [vmem:[%s4 + $0x8] sm:$0xff] %v4814
  %5268 = vst [vmem:[%s4 + $0x10] sm:$0xff] %v5038
  %vm5269 = vcmask 785408
  %5270 = vst.msk [vmem:[%s4 + $0x18] sm:$0xff] %vm5269, %v5262
  %5271 = vst [vmem:[%s4 + $0x20] sm:$0xff] %v4592
  %5272 = vst [vmem:[%s4 + $0x28] sm:$0xff] %v4816
  %5273 = vst [vmem:[%s4 + $0x30] sm:$0xff] %v5040
  %5274 = vst.msk [vmem:[%s4 + $0x38] sm:$0xff] %vm5269, %v5264
  // Predicated region
  $region18: #{trainable_decoder_forward.1} parent=0 // pred_check
    _
  $region19: #{trainable_decoder_forward.1} parent=0 // pred_check_branch
    %5276 = sbr.rel (0) target = $region21
  $region20: #{trainable_decoder_forward.1} parent=0 // pred_region
    _
  $region21: #{trainable_decoder_forward.1} parent=0 // pred_fallthru
    _
  // Predicated region
  $region22: #{trainable_decoder_forward.1} parent=0 // pred_check
    _
  $region23: #{trainable_decoder_forward.1} parent=0 // pred_check_branch
    %5278 = sbr.rel (0) target = $region25
  $region24: #{trainable_decoder_forward.1} parent=0 // pred_region
    _
  $region25: #{trainable_decoder_forward.1} parent=0 // pred_fallthru
    _

</llo_original>
